<compile_context>
chip_gen: v7x
topology: tpu7x:2x2x1
jax: 0.10.0
libtpu: 0.0.40
codegen_flags: <defaults>
</compile_context>

<pallas_src>
import functools

import numpy as np

import jax
import jax.numpy as jnp
from jax.experimental import pallas as pl
from jax.experimental.pallas import tpu as pltpu


def _round_up(n, m):
    return ((n + m - 1) // m) * m


# ---------------------------------------------------------------------------
# Encoder kernel: q_graph + reparameterization + first p layer.
# Grid: (nk,) reduction over padded-item tiles of size tk ("arbitrary").
# ---------------------------------------------------------------------------
def _encoder_kernel(seed_ref,                                    # scalar prefetch (SMEM)
                    x_ref, wq0_ref, bq0_ref, wq1_ref, bq1_ref,   # inputs
                    eps_ref, wp0_ref, bp0_ref,
                    hdec_ref, kl_ref,                            # outputs
                    acc_ref, sq_ref,                             # VMEM scratch
                    *, latent, keep_prob, apply_dropout, training, tk, n_pad):
    k = pl.program_id(0)
    nk = pl.num_programs(0)

    @pl.when(k == 0)
    def _init():
        acc_ref[...] = jnp.zeros_like(acc_ref)
        sq_ref[...] = jnp.zeros_like(sq_ref)

    xf = x_ref[...]                                   # [B, tk] f32 raw input tile
    # Per-row sum of squares of the raw input (F.normalize(p=2, dim=1)), in f32.
    sq_ref[...] += jnp.sum(xf * xf, axis=1, keepdims=True)

    xb = xf.astype(jnp.bfloat16)
    if apply_dropout:
        # Stateless hash-based Bernoulli(keep_prob) mask.  Pure jnp integer ops
        # (works on TPU and in interpret mode).  The 1/keep_prob rescale and
        # the 1/||x|| normalization are per-row scalars that commute with the
        # matmul, so both are applied once at finalize time.
        col = jax.lax.broadcasted_iota(jnp.int32, xb.shape, 1).astype(jnp.uint32)
        row = jax.lax.broadcasted_iota(jnp.int32, xb.shape, 0).astype(jnp.uint32)
        idx = row * jnp.uint32(n_pad) + col + (k * tk).astype(jnp.uint32)
        h = (idx + seed_ref[0].astype(jnp.uint32)) * jnp.uint32(0x9E3779B1)
        h = h ^ (h >> 15)
        h = h * jnp.uint32(0x85EBCA6B)
        h = h ^ (h >> 13)
        r = (h >> 1).astype(jnp.int32)                # 31 uniform bits, non-negative
        thresh = jnp.int32(min(int(round(keep_prob * 2.0 ** 31)), 2 ** 31 - 1))
        xb = jnp.where(r < thresh, xb, jnp.zeros_like(xb))

    # MXU: bf16 x bf16 -> f32 accumulation across item tiles.
    acc_ref[...] += jnp.dot(xb, wq0_ref[...], preferred_element_type=jnp.float32)

    @pl.when(k == nk - 1)
    def _finalize():
        batch = acc_ref.shape[0]
        norm = jnp.maximum(jnp.sqrt(sq_ref[...]), 1e-12)          # [B, 1]
        if apply_dropout:
            norm = norm * jnp.float32(keep_prob)                  # folded 1/keep_prob rescale
        # q layer 0 (+ deferred normalize) + tanh
        hidden = jnp.tanh(acc_ref[...] / norm + bq0_ref[...])     # [B, H]
        # q layer 1 -> [B, 2*latent]
        hq = jnp.dot(hidden, wq1_ref[...], preferred_element_type=jnp.float32) + bq1_ref[...]
        mu_q = hq[:, :latent]
        logvar_q = hq[:, latent:]
        # kl_dist = mean_b( sum_l( 0.5*(-logvar + e^logvar + mu^2 - 1) ) )
        kl_terms = 0.5 * (-logvar_q + jnp.exp(logvar_q) + mu_q * mu_q - 1.0)
        kl_ref[...] = jnp.sum(kl_terms, axis=(0, 1), keepdims=True) / jnp.float32(batch)
        # reparameterization: z = mu + float(training) * eps * std
        if training:
            z = mu_q + eps_ref[...] * jnp.exp(0.5 * logvar_q)
        else:
            z = mu_q
        # first p layer + tanh; emitted in bf16 for the decoder matmul
        hp = jnp.tanh(jnp.dot(z, wp0_ref[...], preferred_element_type=jnp.float32)
                      + bp0_ref[...])
        hdec_ref[...] = hp.astype(hdec_ref.dtype)


# ---------------------------------------------------------------------------
# Decoder kernel: last p layer, tiled over the (padded) item output dimension.
# ---------------------------------------------------------------------------
def _decoder_kernel(hdec_ref, wp1_ref, bp1_ref, out_ref):
    out_ref[...] = (
        jnp.dot(hdec_ref[...], wp1_ref[...], preferred_element_type=jnp.float32)
        + bp1_ref[...]
    ).astype(out_ref.dtype)
    # TODO(synk): optionally fuse the multinomial log-softmax loss here to avoid
    # writing the full [B, n_items] logits back to HBM during training.


# ---------------------------------------------------------------------------
# Tile / VMEM budgeting
# ---------------------------------------------------------------------------
def choose_item_tile(n_items, batch_hint, hidden, target=2048,
                     streamed_budget=20 * (1 << 20)):
    """Pick an item-dimension tile (multiple of 128) that fits the VMEM budget."""
    tile = min(target, _round_up(n_items, 128))
    while tile > 128 and 2 * (batch_hint * tile * 4 + tile * hidden * 2) > streamed_budget:
        tile = max(128, ((tile // 2) // 128) * 128)
    return tile


def _enc_vmem_bytes(B, tk, H, two_latent, latent):
    streamed = 2 * (B * tk * 4 + tk * H * 2)              # x (f32) + wq0 (bf16), double-buffered
    resident = 2 * (8 * H * 4 + H * two_latent * 4 + 8 * two_latent * 4
                    + B * latent * 4 + latent * H * 4 + 8 * H * 4)
    outputs = 2 * (B * H * 2 + 8 * 128 * 4)
    scratch = B * H * 4 + B * 128 * 4
    return streamed + resident + outputs + scratch


def _dec_vmem_bytes(B, tn, H):
    return 2 * (B * H * 2 + H * tn * 2 + 8 * tn * 4 + B * tn * 4)


def _vmem_limit_bytes(est):
    mib = 1 << 20
    return int(min(max(2 * est, 32 * mib), 48 * mib))     # cap well below v7x's 64 MiB


# ---------------------------------------------------------------------------
# One-time parameter preparation (cast + pad OUTSIDE the jitted step).
# ---------------------------------------------------------------------------
def prepare_params(params, *, tile=None, batch_hint=256):
    """Cast the two item-dimension weights to bf16 and zero-pad the item dim
    to a tile multiple, once, so no per-call HBM cast/pad pass is needed."""
    (wq0, bq0), (wq1, bq1), (wp0, bp0), (wp1, bp1) = params
    n_items, H = wq0.shape
    if tile is None:
        tile = choose_item_tile(n_items, batch_hint, H)
    n_pad = _round_up(n_items, tile)
    pad = n_pad - n_items
    f32, bf16 = jnp.float32, jnp.bfloat16
    prep = {
        "wq0": jnp.pad(wq0, ((0, pad), (0, 0))).astype(bf16),   # [n_pad, H]
        "bq0": bq0.astype(f32),
        "wq1": wq1.astype(f32),
        "bq1": bq1.astype(f32),
        "wp0": wp0.astype(f32),
        "bp0": bp0.astype(f32),
        "wp1": jnp.pad(wp1, ((0, 0), (0, pad))).astype(bf16),   # [H, n_pad]
        "bp1": jnp.pad(bp1, ((0, 0), (0, pad))).astype(f32),    # [1, n_pad]
    }
    return prep, tile


# ---------------------------------------------------------------------------
# Forward
# ---------------------------------------------------------------------------
def multvae_forward(x, eps, dropout_seed, prep, *, n_items, tile,
                    keep_prob=1.0, training=False):
    """MultVAE forward: returns (logits [B, n_items] f32, kl_dist scalar f32)."""
    B = x.shape[0]
    wq0, bq0 = prep["wq0"], prep["bq0"]
    wq1, bq1 = prep["wq1"], prep["bq1"]
    wp0, bp0 = prep["wp0"], prep["bp0"]
    wp1, bp1 = prep["wp1"], prep["bp1"]
    n_pad, H = wq0.shape
    two_latent = wq1.shape[1]
    latent = two_latent // 2
    assert eps.shape == (B, latent)
    assert n_pad % tile == 0
    nk = n_pad // tile
    nn_tiles = n_pad // tile

    # Stream raw f32 x (norm is exact f32; bf16 cast happens inside the kernel).
    xf = x.astype(jnp.float32)
    if x.shape[1] != n_pad:
        xf = jnp.pad(xf, ((0, 0), (0, n_pad - x.shape[1])))
    eps_f = eps.astype(jnp.float32)
    seed = jnp.asarray(dropout_seed, jnp.int32).reshape((1,))
    apply_dropout = bool(training) and float(keep_prob) < 1.0

    enc_cost = pl.CostEstimate(
        flops=int(2 * B * n_pad * H + 2 * B * H * two_latent + 2 * B * latent * H),
        transcendentals=int(2 * B * H + B * two_latent),
        bytes_accessed=int(B * n_pad * 4 + n_pad * H * 2 + H * two_latent * 4
                           + latent * H * 4 + B * latent * 4 + B * H * 2),
    )
    dec_cost = pl.CostEstimate(
        flops=int(2 * B * H * n_pad),
        transcendentals=0,
        bytes_accessed=int(B * H * 2 + H * n_pad * 2 + n_pad * 4 + B * n_pad * 4),
    )

    # ---------------- encoder: q_graph + reparam + first p layer ----------
    enc_grid_spec = pltpu.PrefetchScalarGridSpec(
        num_scalar_prefetch=1,                                    # dropout seed -> SMEM
        grid=(nk,),
        in_specs=[
            pl.BlockSpec((B, tile), lambda k, s: (0, k)),         # x tile (f32, streamed)
            pl.BlockSpec((tile, H), lambda k, s: (k, 0)),         # wq0 tile (bf16, streamed)
            pl.BlockSpec((1, H), lambda k, s: (0, 0)),            # bq0 (resident)
            pl.BlockSpec((H, two_latent), lambda k, s: (0, 0)),   # wq1 (resident)
            pl.BlockSpec((1, two_latent), lambda k, s: (0, 0)),   # bq1 (resident)
            pl.BlockSpec((B, latent), lambda k, s: (0, 0)),       # eps (resident)
            pl.BlockSpec((latent, H), lambda k, s: (0, 0)),       # wp0 (resident)
            pl.BlockSpec((1, H), lambda k, s: (0, 0)),            # bp0 (resident)
        ],
        out_specs=(
            pl.BlockSpec((B, H), lambda k, s: (0, 0)),            # tanh(z @ wp0 + bp0)
            pl.BlockSpec((1, 1), lambda k, s: (0, 0)),            # kl (written once)
        ),
        scratch_shapes=[
            pltpu.VMEM((B, H), jnp.float32),                      # x @ wq0 accumulator
            pltpu.VMEM((B, 1), jnp.float32),                      # per-row sum(x^2)
        ],
    )
    h_dec, kl = pl.pallas_call(
        functools.partial(_encoder_kernel, latent=latent, keep_prob=float(keep_prob),
                          apply_dropout=apply_dropout, training=bool(training),
                          tk=tile, n_pad=n_pad),
        out_shape=(
            jax.ShapeDtypeStruct((B, H), jnp.bfloat16),
            jax.ShapeDtypeStruct((1, 1), jnp.float32),
        ),
        grid_spec=enc_grid_spec,
        compiler_params=pltpu.CompilerParams(
            dimension_semantics=("arbitrary",),                   # K reduction axis
            vmem_limit_bytes=_vmem_limit_bytes(
                _enc_vmem_bytes(B, tile, H, two_latent, latent)),
        ),
        cost_estimate=enc_cost,
    )(seed, xf, wq0, bq0, wq1, bq1, eps_f, wp0, bp0)

    # ---------------- decoder: last p layer over item output tiles --------
    logits_pad = pl.pallas_call(
        _decoder_kernel,
        out_shape=jax.ShapeDtypeStruct((B, n_pad), jnp.float32),
        grid=(nn_tiles,),
        in_specs=[
            pl.BlockSpec((B, H), lambda j: (0, 0)),               # h_dec (resident, bf16)
            pl.BlockSpec((H, tile), lambda j: (0, j)),            # wp1 tile (bf16)
            pl.BlockSpec((1, tile), lambda j: (0, j)),            # bp1 tile
        ],
        out_specs=pl.BlockSpec((B, tile), lambda j: (0, j)),      # lane-dense logits tile
        compiler_params=pltpu.CompilerParams(
            dimension_semantics=("parallel",),                    # megacore on v7x
            vmem_limit_bytes=_vmem_limit_bytes(_dec_vmem_bytes(B, tile, H)),
        ),
        cost_estimate=dec_cost,
    )(h_dec, wp1, bp1)

    logits = logits_pad if n_pad == n_items else logits_pad[:, :n_items]
    return logits, kl[0, 0]


# ---------------------------------------------------------------------------
# Params + pure-JAX reference (mirrors the kernel's bf16 placement)
# ---------------------------------------------------------------------------
def init_params(key, q_dims, p_dims, std=0.01):
    """Normal init; weights [d_in, d_out] (transposed vs torch), biases [1, d_out]."""
    params = []
    q_pairs = list(zip(q_dims[:-1], q_dims[1:]))
    for i, (d_in, d_out) in enumerate(q_pairs):
        if i == len(q_pairs) - 1:
            d_out *= 2
        key, kw, kb = jax.random.split(key, 3)
        params.append((std * jax.random.normal(kw, (d_in, d_out), jnp.float32),
                       std * jax.random.normal(kb, (1, d_out), jnp.float32)))
    for d_in, d_out in zip(p_dims[:-1], p_dims[1:]):
        key, kw, kb = jax.random.split(key, 3)
        params.append((std * jax.random.normal(kw, (d_in, d_out), jnp.float32),
                       std * jax.random.normal(kb, (1, d_out), jnp.float32)))
    return params


def _multvae_reference(x, eps, params, *, training):
    """Pure-JAX reference (eval-mode dropout) mirroring the kernel's dtypes.

    (x/||x||) @ W == (x @ W) / ||x|| since ||x|| is a per-row scalar, so this
    matches the PyTorch module's normalize-then-linear order.
    """
    (wq0, bq0), (wq1, bq1), (wp0, bp0), (wp1, bp1) = params
    xf = x.astype(jnp.float32)
    norm = jnp.maximum(jnp.sqrt(jnp.sum(xf * xf, axis=1, keepdims=True)), 1e-12)
    acc = jnp.dot(xf.astype(jnp.bfloat16), wq0.astype(jnp.bfloat16),
                  preferred_element_type=jnp.float32)
    h = jnp.tanh(acc / norm + bq0)
    hq = jnp.dot(h, wq1, preferred_element_type=jnp.float32) + bq1
    latent = hq.shape[1] // 2
    mu_q, logvar_q = hq[:, :latent], hq[:, latent:]
    std_q = jnp.exp(0.5 * logvar_q)
    kl = jnp.mean(jnp.sum(0.5 * (-logvar_q + jnp.exp(logvar_q) + mu_q * mu_q - 1.0), axis=1))
    z = mu_q + (float(training) * eps) * std_q
    hp = jnp.tanh(jnp.dot(z, wp0, preferred_element_type=jnp.float32) + bp0)
    logits = jnp.dot(hp.astype(jnp.bfloat16), wp1.astype(jnp.bfloat16),
                     preferred_element_type=jnp.float32) + bp1
    return logits, kl


if __name__ == "__main__":
    def run_case(n_items, hidden, latent, batch, tile, keep_prob, key):
        q_dims = [n_items, hidden, latent]
        p_dims = [latent, hidden, n_items]
        k_x, k_eps, k_params = jax.random.split(key, 3)
        x = jax.random.uniform(k_x, (batch, n_items), jnp.float32)
        eps = jax.random.normal(k_eps, (batch, latent), jnp.float32)
        params = init_params(k_params, q_dims, p_dims)
        prep, tile = prepare_params(params, tile=tile, batch_hint=batch)
        seed = jnp.array([1234], dtype=jnp.int32)

        # --- eval mode: compare against the pure-JAX reference (dropout off) ---
        fwd_eval = jax.jit(functools.partial(multvae_forward, n_items=n_items, tile=tile,
                                             keep_prob=keep_prob, training=False))
        logits_e, kl_e = fwd_eval(x, eps, seed, prep)
        ref_logits, ref_kl = _multvae_reference(x, eps, params, training=False)
        np.testing.assert_allclose(np.asarray(logits_e), np.asarray(ref_logits),
                                   rtol=2e-2, atol=2e-3)
        np.testing.assert_allclose(float(kl_e), float(ref_kl), rtol=2e-2, atol=2e-3)

        # --- training mode: in-kernel hash dropout + reparameterization --------
        fwd_train = jax.jit(functools.partial(multvae_forward, n_items=n_items, tile=tile,
                                              keep_prob=keep_prob, training=True))
        logits_t, kl_t = fwd_train(x, eps, seed, prep)
        jax.block_until_ready((logits_t, kl_t))
        assert logits_t.shape == (batch, n_items) and kl_t.shape == ()
        assert bool(jnp.isfinite(logits_t).all()) and bool(jnp.isfinite(kl_t))

    key = jax.random.PRNGKey(0)
    k1, k2 = jax.random.split(key)
    # Aligned case: multi-tile K reduction + multi-tile "parallel" decoder grid.
    run_case(n_items=1024, hidden=256, latent=128, batch=128,
             tile=256, keep_prob=0.8, key=k1)
    # Padded case: n_items not a multiple of 128 (exercises the padding path
    # that real MultVAE item counts like 20108 require).
    run_case(n_items=1000, hidden=256, latent=128, batch=32,
             tile=512, keep_prob=0.8, key=k2)
    print("KERNEL_OK")
</pallas_src>

<mosaic_0001>
module attributes {stable_mosaic.version = 11 : i64} {
  func.func @_decoder_kernel(%arg0: i32, %arg1: memref<128x256xbf16, #tpu.memory_space<vmem>>, %arg2: memref<256x256xbf16, #tpu.memory_space<vmem>>, %arg3: memref<1x256xf32, #tpu.memory_space<vmem>>, %arg4: memref<128x256xf32, #tpu.memory_space<vmem>>) attributes {dimension_semantics = [#tpu.dimension_semantics<parallel>], iteration_bounds = array<i64: 4>, scalar_prefetch = 0 : i64, scratch_operands = 0 : i64, tpu.core_type = #tpu.core_type<tc>, window_params = [{pipeline_mode = #tpu.pipeline_mode<synchronous>, transform_indices = @transform_0, window_bounds = array<i64: 128, 256>}, {transform_indices = @transform_1, window_bounds = array<i64: 256, 256>}, {transform_indices = @transform_2, window_bounds = array<i64: 1, 256>}, {transform_indices = @transform_3, window_bounds = array<i64: 128, 256>}]} {
    %c0 = arith.constant 0 : index
    %c0_0 = arith.constant 0 : index
    %0 = vector.load %arg1[%c0, %c0_0] : memref<128x256xbf16, #tpu.memory_space<vmem>>, vector<128x256xbf16>
    %c0_1 = arith.constant 0 : index
    %c0_2 = arith.constant 0 : index
    %1 = vector.load %arg2[%c0_1, %c0_2] : memref<256x256xbf16, #tpu.memory_space<vmem>>, vector<256x256xbf16>
    %cst = arith.constant dense<0.000000e+00> : vector<128x256xf32>
    %2 = tpu.matmul %0, %1, %cst {dimension_numbers = #tpu.dot_dimension_numbers<[1], [0], [0], [1], [0, 0, 1, 1], [], []>} : vector<128x256xbf16>, vector<256x256xbf16>, vector<128x256xf32> -> vector<128x256xf32>
    %c0_3 = arith.constant 0 : index
    %c0_4 = arith.constant 0 : index
    %3 = vector.load %arg3[%c0_3, %c0_4] : memref<1x256xf32, #tpu.memory_space<vmem>>, vector<1x256xf32>
    %4 = vector.broadcast %3 : vector<1x256xf32> to vector<128x256xf32>
    %5 = arith.addf %2, %4 : vector<128x256xf32>
    %c0_5 = arith.constant 0 : index
    %c0_6 = arith.constant 0 : index
    %6 = vector.load %arg4[%c0_5, %c0_6] : memref<128x256xf32, #tpu.memory_space<vmem>>, vector<128x256xf32>
    tpu.vector_store %arg4[%c0_5, %c0_6], %5 {strides = array<i32>} : memref<128x256xf32, #tpu.memory_space<vmem>>, vector<128x256xf32>,
    return
  }
  func.func @transform_0(%arg0: i32) -> (i32, i32) {
    %c0_i32 = arith.constant 0 : i32
    %c0_i32_0 = arith.constant 0 : i32
    %c0_i32_1 = arith.constant 0 : i32
    return %c0_i32, %c0_i32_0 : i32, i32
  }
  func.func @transform_1(%arg0: i32) -> (i32, i32) {
    %c0_i32 = arith.constant 0 : i32
    %c0_i32_0 = arith.constant 0 : i32
    return %c0_i32, %arg0 : i32, i32
  }
  func.func @transform_2(%arg0: i32) -> (i32, i32) {
    %c0_i32 = arith.constant 0 : i32
    %c0_i32_0 = arith.constant 0 : i32
    return %c0_i32, %arg0 : i32, i32
  }
  func.func @transform_3(%arg0: i32) -> (i32, i32) {
    %c0_i32 = arith.constant 0 : i32
    %c0_i32_0 = arith.constant 0 : i32
    return %c0_i32, %arg0 : i32, i32
  }
}

module attributes {stable_mosaic.version = 11 : i64} {
  func.func @_encoder_kernel(%arg0: i32, %arg1: memref<1xi32, #tpu.memory_space<smem>>, %arg2: memref<128x256xf32, #tpu.memory_space<vmem>>, %arg3: memref<256x256xbf16, #tpu.memory_space<vmem>>, %arg4: memref<1x256xf32, #tpu.memory_space<vmem>>, %arg5: memref<256x256xf32, #tpu.memory_space<vmem>>, %arg6: memref<1x256xf32, #tpu.memory_space<vmem>>, %arg7: memref<128x128xf32, #tpu.memory_space<vmem>>, %arg8: memref<128x256xf32, #tpu.memory_space<vmem>>, %arg9: memref<1x256xf32, #tpu.memory_space<vmem>>, %arg10: memref<128x256xbf16, #tpu.memory_space<vmem>>, %arg11: memref<1x1xf32, #tpu.memory_space<vmem>>, %arg12: memref<128x256xf32, #tpu.memory_space<vmem>>, %arg13: memref<128x1xf32, #tpu.memory_space<vmem>>) attributes {dimension_semantics = [#tpu.dimension_semantics<arbitrary>], iteration_bounds = array<i64: 4>, scalar_prefetch = 1 : i64, scratch_operands = 2 : i64, tpu.core_type = #tpu.core_type<tc>, window_params = [{transform_indices = @transform_0, window_bounds = array<i64: 128, 256>}, {transform_indices = @transform_1, window_bounds = array<i64: 256, 256>}, {pipeline_mode = #tpu.pipeline_mode<synchronous>, transform_indices = @transform_2, window_bounds = array<i64: 1, 256>}, {pipeline_mode = #tpu.pipeline_mode<synchronous>, transform_indices = @transform_3, window_bounds = array<i64: 256, 256>}, {pipeline_mode = #tpu.pipeline_mode<synchronous>, transform_indices = @transform_4, window_bounds = array<i64: 1, 256>}, {pipeline_mode = #tpu.pipeline_mode<synchronous>, transform_indices = @transform_5, window_bounds = array<i64: 128, 128>}, {pipeline_mode = #tpu.pipeline_mode<synchronous>, transform_indices = @transform_6, window_bounds = array<i64: 128, 256>}, {pipeline_mode = #tpu.pipeline_mode<synchronous>, transform_indices = @transform_7, window_bounds = array<i64: 1, 256>}, {pipeline_mode = #tpu.pipeline_mode<synchronous>, transform_indices = @transform_8, window_bounds = array<i64: 128, 256>}, {pipeline_mode = #tpu.pipeline_mode<synchronous>, transform_indices = @transform_9, window_bounds = array<i64: 1, 1>}]} {
    %c0_i32 = arith.constant 0 : i32
    %0 = arith.cmpi eq, %arg0, %c0_i32 : i32
    %1 = arith.extui %0 : i1 to i32
    %c0_i32_0 = arith.constant 0 : i32
    %2 = arith.cmpi ne, %1, %c0_i32_0 : i32
    scf.if %2 {
      %cst_14 = arith.constant 0.000000e+00 : f32
      %19 = vector.broadcast %cst_14 : f32 to vector<128x256xf32>
      %c0_15 = arith.constant 0 : index
      %c0_16 = arith.constant 0 : index
      %20 = vector.load %arg12[%c0_15, %c0_16] : memref<128x256xf32, #tpu.memory_space<vmem>>, vector<128x256xf32>
      tpu.vector_store %arg12[%c0_15, %c0_16], %19 {strides = array<i32>} : memref<128x256xf32, #tpu.memory_space<vmem>>, vector<128x256xf32>,
      %cst_17 = arith.constant 0.000000e+00 : f32
      %21 = vector.broadcast %cst_17 : f32 to vector<128x1xf32>
      %c0_18 = arith.constant 0 : index
      %c0_19 = arith.constant 0 : index
      %22 = vector.load %arg13[%c0_18, %c0_19] : memref<128x1xf32, #tpu.memory_space<vmem>>, vector<128x1xf32>
      tpu.vector_store %arg13[%c0_18, %c0_19], %21 {strides = array<i32>} : memref<128x1xf32, #tpu.memory_space<vmem>>, vector<128x1xf32>,
    } else {
    }
    %c0 = arith.constant 0 : index
    %c0_1 = arith.constant 0 : index
    %3 = vector.load %arg2[%c0, %c0_1] : memref<128x256xf32, #tpu.memory_space<vmem>>, vector<128x256xf32>
    %c0_2 = arith.constant 0 : index
    %c0_3 = arith.constant 0 : index
    %4 = vector.load %arg13[%c0_2, %c0_3] : memref<128x1xf32, #tpu.memory_space<vmem>>, vector<128x1xf32>
    %5 = arith.mulf %3, %3 : vector<128x256xf32>
    %cst = arith.constant dense<0.000000e+00> : vector<128xf32>
    %6 = vector.multi_reduction <add>, %5, %cst [1] : vector<128x256xf32> to vector<128xf32>
    %7 = vector.shape_cast %6 : vector<128xf32> to vector<128x1xf32>
    %8 = arith.addf %4, %7 : vector<128x1xf32>
    %c0_4 = arith.constant 0 : index
    %c0_5 = arith.constant 0 : index
    %9 = vector.load %arg13[%c0_4, %c0_5] : memref<128x1xf32, #tpu.memory_space<vmem>>, vector<128x1xf32>
    tpu.vector_store %arg13[%c0_4, %c0_5], %8 {strides = array<i32>} : memref<128x1xf32, #tpu.memory_space<vmem>>, vector<128x1xf32>,
    %10 = arith.truncf %3 : vector<128x256xf32> to vector<128x256xbf16>
    %c0_6 = arith.constant 0 : index
    %c0_7 = arith.constant 0 : index
    %11 = vector.load %arg12[%c0_6, %c0_7] : memref<128x256xf32, #tpu.memory_space<vmem>>, vector<128x256xf32>
    %c0_8 = arith.constant 0 : index
    %c0_9 = arith.constant 0 : index
    %12 = vector.load %arg3[%c0_8, %c0_9] : memref<256x256xbf16, #tpu.memory_space<vmem>>, vector<256x256xbf16>
    %cst_10 = arith.constant dense<0.000000e+00> : vector<128x256xf32>
    %13 = tpu.matmul %10, %12, %cst_10 {dimension_numbers = #tpu.dot_dimension_numbers<[1], [0], [0], [1], [0, 0, 1, 1], [], []>} : vector<128x256xbf16>, vector<256x256xbf16>, vector<128x256xf32> -> vector<128x256xf32>
    %14 = arith.addf %11, %13 : vector<128x256xf32>
    %c0_11 = arith.constant 0 : index
    %c0_12 = arith.constant 0 : index
    %15 = vector.load %arg12[%c0_11, %c0_12] : memref<128x256xf32, #tpu.memory_space<vmem>>, vector<128x256xf32>
    tpu.vector_store %arg12[%c0_11, %c0_12], %14 {strides = array<i32>} : memref<128x256xf32, #tpu.memory_space<vmem>>, vector<128x256xf32>,
    %c3_i32 = arith.constant 3 : i32
    %16 = arith.cmpi eq, %arg0, %c3_i32 : i32
    %17 = arith.extui %16 : i1 to i32
    %c0_i32_13 = arith.constant 0 : i32
    %18 = arith.cmpi ne, %17, %c0_i32_13 : i32
    scf.if %18 {
      %c0_14 = arith.constant 0 : index
      %c0_15 = arith.constant 0 : index
      %19 = vector.load %arg13[%c0_14, %c0_15] : memref<128x1xf32, #tpu.memory_space<vmem>>, vector<128x1xf32>
      %20 = math.sqrt %19 : vector<128x1xf32>
      %cst_16 = arith.constant 9.99999996E-13 : f32
      %21 = vector.broadcast %cst_16 : f32 to vector<128x1xf32>
      %22 = arith.maximumf %20, %21 : vector<128x1xf32>
      %c0_17 = arith.constant 0 : index
      %c0_18 = arith.constant 0 : index
      %23 = vector.load %arg12[%c0_17, %c0_18] : memref<128x256xf32, #tpu.memory_space<vmem>>, vector<128x256xf32>
      %24 = vector.broadcast %22 : vector<128x1xf32> to vector<128x256xf32>
      %25 = arith.divf %23, %24 : vector<128x256xf32>
      %c0_19 = arith.constant 0 : index
      %c0_20 = arith.constant 0 : index
      %26 = vector.load %arg4[%c0_19, %c0_20] : memref<1x256xf32, #tpu.memory_space<vmem>>, vector<1x256xf32>
      %27 = vector.broadcast %26 : vector<1x256xf32> to vector<128x256xf32>
      %28 = arith.addf %25, %27 : vector<128x256xf32>
      %29 = math.tanh %28 : vector<128x256xf32>
      %c0_21 = arith.constant 0 : index
      %c0_22 = arith.constant 0 : index
      %30 = vector.load %arg5[%c0_21, %c0_22] : memref<256x256xf32, #tpu.memory_space<vmem>>, vector<256x256xf32>
      %cst_23 = arith.constant dense<0.000000e+00> : vector<128x256xf32>
      %31 = tpu.matmul %29, %30, %cst_23 {dimension_numbers = #tpu.dot_dimension_numbers<[1], [0], [0], [1], [0, 0, 1, 1], [], []>} : vector<128x256xf32>, vector<256x256xf32>, vector<128x256xf32> -> vector<128x256xf32>
      %c0_24 = arith.constant 0 : index
      %c0_25 = arith.constant 0 : index
      %32 = vector.load %arg6[%c0_24, %c0_25] : memref<1x256xf32, #tpu.memory_space<vmem>>, vector<1x256xf32>
      %33 = vector.broadcast %32 : vector<1x256xf32> to vector<128x256xf32>
      %34 = arith.addf %31, %33 : vector<128x256xf32>
      %35 = vector.extract_strided_slice %34 {offsets = [0, 0], sizes = [128, 128], strides = [1, 1]} : vector<128x256xf32> to vector<128x128xf32>
      %36 = vector.extract_strided_slice %34 {offsets = [0, 128], sizes = [128, 128], strides = [1, 1]} : vector<128x256xf32> to vector<128x128xf32>
      %cst_26 = arith.constant 0.000000e+00 : f32
      %37 = vector.broadcast %cst_26 : f32 to vector<128x128xf32>
      %38 = arith.subf %37, %36 : vector<128x128xf32>
      %39 = math.exp %36 : vector<128x128xf32>
      %40 = arith.addf %38, %39 : vector<128x128xf32>
      %41 = arith.mulf %35, %35 : vector<128x128xf32>
      %42 = arith.addf %40, %41 : vector<128x128xf32>
      %cst_27 = arith.constant 1.000000e+00 : f32
      %43 = vector.broadcast %cst_27 : f32 to vector<128x128xf32>
      %44 = arith.subf %42, %43 : vector<128x128xf32>
      %cst_28 = arith.constant 5.000000e-01 : f32
      %45 = vector.broadcast %cst_28 : f32 to vector<128x128xf32>
      %46 = arith.mulf %45, %44 : vector<128x128xf32>
      %47 = vector.shape_cast %46 : vector<128x128xf32> to vector<1x128x128xf32>
      %cst_29 = arith.constant dense<0.000000e+00> : vector<1xf32>
      %48 = vector.multi_reduction <add>, %47, %cst_29 [1, 2] : vector<1x128x128xf32> to vector<1xf32>
      %49 = vector.shape_cast %48 : vector<1xf32> to vector<1x1x1xf32>
      %50 = vector.extract %49[0, 0, 0] : f32 from vector<1x1x1xf32>
      %51 = vector.broadcast %50 : f32 to vector<1x1xf32>
      %cst_30 = arith.constant 1.280000e+02 : f32
      %52 = vector.broadcast %cst_30 : f32 to vector<1x1xf32>
      %53 = arith.divf %51, %52 : vector<1x1xf32>
      %c0_31 = arith.constant 0 : index
      %c0_32 = arith.constant 0 : index
      %54 = vector.load %arg11[%c0_31, %c0_32] : memref<1x1xf32, #tpu.memory_space<vmem>>, vector<1x1xf32>
      tpu.vector_store %arg11[%c0_31, %c0_32], %53 {strides = array<i32>} : memref<1x1xf32, #tpu.memory_space<vmem>>, vector<1x1xf32>,
      %c0_33 = arith.constant 0 : index
      %c0_34 = arith.constant 0 : index
      %55 = vector.load %arg8[%c0_33, %c0_34] : memref<128x256xf32, #tpu.memory_space<vmem>>, vector<128x256xf32>
      %cst_35 = arith.constant dense<0.000000e+00> : vector<128x256xf32>
      %56 = tpu.matmul %35, %55, %cst_35 {dimension_numbers = #tpu.dot_dimension_numbers<[1], [0], [0], [1], [0, 0, 1, 1], [], []>} : vector<128x128xf32>, vector<128x256xf32>, vector<128x256xf32> -> vector<128x256xf32>
      %c0_36 = arith.constant 0 : index
      %c0_37 = arith.constant 0 : index
      %57 = vector.load %arg9[%c0_36, %c0_37] : memref<1x256xf32, #tpu.memory_space<vmem>>, vector<1x256xf32>
      %58 = vector.broadcast %57 : vector<1x256xf32> to vector<128x256xf32>
      %59 = arith.addf %56, %58 : vector<128x256xf32>
      %60 = math.tanh %59 : vector<128x256xf32>
      %61 = arith.truncf %60 : vector<128x256xf32> to vector<128x256xbf16>
      %c0_38 = arith.constant 0 : index
      %c0_39 = arith.constant 0 : index
      %62 = vector.load %arg10[%c0_38, %c0_39] : memref<128x256xbf16, #tpu.memory_space<vmem>>, vector<128x256xbf16>
      tpu.vector_store %arg10[%c0_38, %c0_39], %61 {strides = array<i32>} : memref<128x256xbf16, #tpu.memory_space<vmem>>, vector<128x256xbf16>,
    } else {
    }
    return
  }
  func.func @transform_0(%arg0: i32, %arg1: memref<1xi32, #tpu.memory_space<smem>>) -> (i32, i32) {
    %c0_i32 = arith.constant 0 : i32
    %c0_i32_0 = arith.constant 0 : i32
    return %c0_i32, %arg0 : i32, i32
  }
  func.func @transform_1(%arg0: i32, %arg1: memref<1xi32, #tpu.memory_space<smem>>) -> (i32, i32) {
    %c0_i32 = arith.constant 0 : i32
    %c0_i32_0 = arith.constant 0 : i32
    return %arg0, %c0_i32 : i32, i32
  }
  func.func @transform_2(%arg0: i32, %arg1: memref<1xi32, #tpu.memory_space<smem>>) -> (i32, i32) {
    %c0_i32 = arith.constant 0 : i32
    %c0_i32_0 = arith.constant 0 : i32
    %c0_i32_1 = arith.constant 0 : i32
    return %c0_i32, %c0_i32_0 : i32, i32
  }
  func.func @transform_3(%arg0: i32, %arg1: memref<1xi32, #tpu.memory_space<smem>>) -> (i32, i32) {
    %c0_i32 = arith.constant 0 : i32
    %c0_i32_0 = arith.constant 0 : i32
    %c0_i32_1 = arith.constant 0 : i32
    return %c0_i32, %c0_i32_0 : i32, i32
  }
  func.func @transform_4(%arg0: i32, %arg1: memref<1xi32, #tpu.memory_space<smem>>) -> (i32, i32) {
    %c0_i32 = arith.constant 0 : i32
    %c0_i32_0 = arith.constant 0 : i32
    %c0_i32_1 = arith.constant 0 : i32
    return %c0_i32, %c0_i32_0 : i32, i32
  }
  func.func @transform_5(%arg0: i32, %arg1: memref<1xi32, #tpu.memory_space<smem>>) -> (i32, i32) {
    %c0_i32 = arith.constant 0 : i32
    %c0_i32_0 = arith.constant 0 : i32
    %c0_i32_1 = arith.constant 0 : i32
    return %c0_i32, %c0_i32_0 : i32, i32
  }
  func.func @transform_6(%arg0: i32, %arg1: memref<1xi32, #tpu.memory_space<smem>>) -> (i32, i32) {
    %c0_i32 = arith.constant 0 : i32
    %c0_i32_0 = arith.constant 0 : i32
    %c0_i32_1 = arith.constant 0 : i32
    return %c0_i32, %c0_i32_0 : i32, i32
  }
  func.func @transform_7(%arg0: i32, %arg1: memref<1xi32, #tpu.memory_space<smem>>) -> (i32, i32) {
    %c0_i32 = arith.constant 0 : i32
    %c0_i32_0 = arith.constant 0 : i32
    %c0_i32_1 = arith.constant 0 : i32
    return %c0_i32, %c0_i32_0 : i32, i32
  }
  func.func @transform_8(%arg0: i32, %arg1: memref<1xi32, #tpu.memory_space<smem>>) -> (i32, i32) {
    %c0_i32 = arith.constant 0 : i32
    %c0_i32_0 = arith.constant 0 : i32
    %c0_i32_1 = arith.constant 0 : i32
    return %c0_i32, %c0_i32_0 : i32, i32
  }
  func.func @transform_9(%arg0: i32, %arg1: memref<1xi32, #tpu.memory_space<smem>>) -> (i32, i32) {
    %c0_i32 = arith.constant 0 : i32
    %c0_i32_0 = arith.constant 0 : i32
    %c0_i32_1 = arith.constant 0 : i32
    return %c0_i32, %c0_i32_0 : i32, i32
  }
}

</mosaic_0001>

<llo_original>
// kernel: multvae_forward.3
$region0: #{multvae_forward.3}
  #allocation0 [shape = 'u32[]', space=smem, size = 0x4, offset = 0x4, fixed_abs, tag = 'smem constant byte address 0x4 - core index']
  #allocation1 [shape = 'u32[144,128]{1,0:T(1,128)}', space=vmem, size = 0x12000, scoped, tag = 'internal scratch']
  %s0 = inlined_call_operand.vmem [shape: bf16[128,256], index: 0, kind: input, shape index: {}]
  %s1 = inlined_call_operand.vmem [shape: bf16[256,1024], index: 1, kind: input, shape index: {}]
  %s2 = inlined_call_operand.vmem [shape: f32[1,1024], index: 2, kind: input, shape index: {}]
  %s3 = inlined_call_operand.hbm [shape: f32[128,1024], index: 3, kind: output, shape index: {}]
  %s4 = sld [smem:[#allocation0]]
  $region83: #{multvae_forward.3} parent=0
    _
  %s6 = ssub.s32 1, %s4
  %s7 = scalar_select 0, %s6, %s4
  $region1: #{multvae_forward.3} parent=0
    #allocation2 [shape = 'u8[262144]{0}', space=vmem, size = 0x40000, scoped, tag = 'input window, operand 1']
    #allocation3 [shape = 'u8[262144]{0}', space=vmem, size = 0x40000, scoped, tag = 'output window, operand 0']
    #allocation4 [shape = 's32[2]{0}', space=sflag, size = 0x8, scoped, tag = 'scoped memory for multvae_forward.3']
    %8 = vsyncpa [#allocation4], 0
    %s9 = scalar_lea.sflag [#allocation4], 1
    %10 = vsyncpa %s9, 0
    loop: start=0, step=1, limit=6
    $region2: #{multvae_forward.3} parent=1 // loop_pre_header
      _
    $region3: #{multvae_forward.3} parent=1 // loop_header
      %s12 = sphi 0, %s16
      %p13 = scmp.ge.s32.totalorder %s12, 6
      %s20 = sphi 0, %s20
      %s22 = sphi 0, %s20
      %s23 = sphi 0, %s22
      %s37 = sphi 0, %s23
      %s43 = sphi 0, %s45
      %s46 = sphi 0, %s43
      %s47 = sphi 0, %s46
      %s63 = sphi 0, %s47
      %s69 = sphi 0, %s71
      %s72 = sphi 0, %s69
      %s73 = sphi 0, %s72
      %s89 = sphi 0, %s73
      %s95 = sphi 0, %s97
      %s98 = sphi 0, %s95
      %s99 = sphi 0, %s98
      %s115 = sphi 0, %s99
    $region4: #{multvae_forward.3} parent=1 // loop_header_branch
      %15 = sbr.rel (%p13) target = $region8
    $region5: #{multvae_forward.3} parent=1 // loop_body
      %s17 = ssub.s32 %s12, 1
      %s18 = ssub.s32 %s12, 2
      %s19 = sadd.s32 %s12, 1
      %s21 = sadd.s32 %s20, 1
      %p24 = scmp.eq.s32.totalorder %s12, 3
      %p25 = scmp.ne.s32.totalorder %s20, %s22
      %p26 = scmp.eq.s32.totalorder %s12, 0
      %p27 = por %p25, %p26
      %p28 = scmp.ne.s32.totalorder %s20, %s22
      %p29 = scmp.eq.s32.totalorder %s17, 3
      %p30 = por %p28, %p29
      %p31 = scmp.ne.s32.totalorder %s22, %s23
      %p32 = scmp.eq.s32.totalorder %s17, 0
      %p33 = por %p31, %p32
      %p34 = scmp.ne.s32.totalorder %s22, %s23
      %p35 = scmp.eq.s32.totalorder %s18, 3
      %p36 = por %p34, %p35
      %p38 = scmp.ne.s32.totalorder %s23, %s37
      %p39 = scmp.eq.s32.totalorder %s18, 0
      %p40 = por %p38, %p39
      %s41 = ssub.s32 %s12, %s19
      %p42 = scmp.eq.s32.totalorder %s41, 0
      %s44 = sadd.s32 %s43, 1
      %s45 = scalar_select %p42, %s43, %s44
      %p48 = pneg %p42
      %p49 = scmp.eq.s32.totalorder %s12, 3
      %p50 = por %p48, %p49
      %p51 = scmp.ne.s32.totalorder %s43, %s46
      %p52 = scmp.eq.s32.totalorder %s12, 0
      %p53 = por %p51, %p52
      %p54 = scmp.ne.s32.totalorder %s43, %s46
      %p55 = scmp.eq.s32.totalorder %s17, 3
      %p56 = por %p54, %p55
      %p57 = scmp.ne.s32.totalorder %s46, %s47
      %p58 = scmp.eq.s32.totalorder %s17, 0
      %p59 = por %p57, %p58
      %p60 = scmp.ne.s32.totalorder %s46, %s47
      %p61 = scmp.eq.s32.totalorder %s18, 3
      %p62 = por %p60, %p61
      %p64 = scmp.ne.s32.totalorder %s47, %s63
      %p65 = scmp.eq.s32.totalorder %s18, 0
      %p66 = por %p64, %p65
      %s67 = ssub.s32 %s12, %s19
      %p68 = scmp.eq.s32.totalorder %s67, 0
      %s70 = sadd.s32 %s69, 1
      %s71 = scalar_select %p68, %s69, %s70
      %p74 = pneg %p68
      %p75 = scmp.eq.s32.totalorder %s12, 3
      %p76 = por %p74, %p75
      %p77 = scmp.ne.s32.totalorder %s69, %s72
      %p78 = scmp.eq.s32.totalorder %s12, 0
      %p79 = por %p77, %p78
      %p80 = scmp.ne.s32.totalorder %s69, %s72
      %p81 = scmp.eq.s32.totalorder %s17, 3
      %p82 = por %p80, %p81
      %p83 = scmp.ne.s32.totalorder %s72, %s73
      %p84 = scmp.eq.s32.totalorder %s17, 0
      %p85 = por %p83, %p84
      %p86 = scmp.ne.s32.totalorder %s72, %s73
      %p87 = scmp.eq.s32.totalorder %s18, 3
      %p88 = por %p86, %p87
      %p90 = scmp.ne.s32.totalorder %s73, %s89
      %p91 = scmp.eq.s32.totalorder %s18, 0
      %p92 = por %p90, %p91
      %s93 = ssub.s32 %s12, %s19
      %p94 = scmp.eq.s32.totalorder %s93, 0
      %s96 = sadd.s32 %s95, 1
      %s97 = scalar_select %p94, %s95, %s96
      %p100 = pneg %p94
      %p101 = scmp.eq.s32.totalorder %s12, 3
      %p102 = por %p100, %p101
      %p103 = scmp.ne.s32.totalorder %s95, %s98
      %p104 = scmp.eq.s32.totalorder %s12, 0
      %p105 = por %p103, %p104
      %p106 = scmp.ne.s32.totalorder %s95, %s98
      %p107 = scmp.eq.s32.totalorder %s17, 3
      %p108 = por %p106, %p107
      %p109 = scmp.ne.s32.totalorder %s98, %s99
      %p110 = scmp.eq.s32.totalorder %s17, 0
      %p111 = por %p109, %p110
      %p112 = scmp.ne.s32.totalorder %s98, %s99
      %p113 = scmp.eq.s32.totalorder %s18, 3
      %p114 = por %p112, %p113
      %p116 = scmp.ne.s32.totalorder %s99, %s115
      %p117 = scmp.eq.s32.totalorder %s18, 0
      %p118 = por %p116, %p117
      %p119 = scmp.le.s32.totalorder 1, %s12
      %p120 = scmp.lt.s32.totalorder %s12, 5
      %p121 = pnand %p119, %p120
      %p122 = pneg %p121
      // Predicated region
      $region9: #{multvae_forward.3} parent=5 // pred_check
        _
      $region10: #{multvae_forward.3} parent=5 // pred_check_branch
        %124 = sbr.rel (%p121) target = $region12
      $region11: #{multvae_forward.3} parent=5 // pred_region
        %s125 = ssub.s32 %s12, 1
        // Predicated region
        $region13: #{multvae_forward.3} parent=11 // pred_check
          %p126 = pneg %p33
        $region14: #{multvae_forward.3} parent=11 // pred_check_branch
          %128 = sbr.rel (%p126) target = $region16
        $region15: #{multvae_forward.3} parent=11 // pred_region
          _
        $region16: #{multvae_forward.3} parent=11 // pred_fallthru
          _
      $region12: #{multvae_forward.3} parent=5 // pred_fallthru
        _
      %p129 = scmp.lt.s32.totalorder %s12, 4
      // Predicated region
      $region17: #{multvae_forward.3} parent=5 // pred_check
        %p130 = pneg %p129
      $region18: #{multvae_forward.3} parent=5 // pred_check_branch
        %132 = sbr.rel (%p130) target = $region20
      $region19: #{multvae_forward.3} parent=5 // pred_region
        // Predicated region
        $region21: #{multvae_forward.3} parent=19 // pred_check
          %p133 = pneg %p53
        $region22: #{multvae_forward.3} parent=19 // pred_check_branch
          %135 = sbr.rel (%p133) target = $region24
        $region23: #{multvae_forward.3} parent=19 // pred_region
          %s136 = sand.u32 %s43, 1
          %s137 = sand.u32 %s43, 1
          %s138 = smul.addr %s137, 256
          %s139 = scalar_lea.vmem [#allocation2], %s138
          %s140 = smul.u32 2, %s12
          %s141 = smul.addr %s140, 4
          %s142 = scalar_lea.vmem %s1, %s141
          // Predicated region
          $region25: #{multvae_forward.3} parent=23 // pred_check
            _
          $region26: #{multvae_forward.3} parent=23 // pred_check_branch
            %144 = sbr.rel (0) target = $region28
          $region27: #{multvae_forward.3} parent=23 // pred_region
            // Predicated region
            $region29: #{multvae_forward.3} parent=27 // pred_check
              _
            $region30: #{multvae_forward.3} parent=27 // pred_check_branch
              %146 = sbr.rel (0) target = $region32
            $region31: #{multvae_forward.3} parent=27 // pred_region
              // Predicated region
              $region44: #{multvae_forward.3} parent=31 // pred_check
                _
              $region45: #{multvae_forward.3} parent=31 // pred_check_branch
                %223 = sbr.rel (0) target = $region47
              $region46: #{multvae_forward.3} parent=31 // pred_region
                loop: start=0, step=1, limit=1
                $region48: #{multvae_forward.3} parent=46 // loop_pre_header
                  _
                $region49: #{multvae_forward.3} parent=46 // loop_header
                  %s225 = sphi 0, %s229
                  %p226 = scmp.ge.s32.totalorder %s225, 1
                  %s230 = sphi %s142, %s142
                  %s231 = sphi %s139, %s139
                $region50: #{multvae_forward.3} parent=46 // loop_header_branch
                  %228 = sbr.rel (%p226) target = $region54
                $region51: #{multvae_forward.3} parent=46 // loop_body
                  %v232 = vld [vmem:[%s230] sm:$0xff]
                  %233 = vst [vmem:[%s231] sm:$0xff] %v232
                  %v234 = vld [vmem:[%s230 + $0x20] sm:$0xff]
                  %235 = vst [vmem:[%s231 + $0x8] sm:$0xff] %v234
                  %v236 = vld [vmem:[%s230 + $0x40] sm:$0xff]
                  %237 = vst [vmem:[%s231 + $0x10] sm:$0xff] %v236
                  %v238 = vld [vmem:[%s230 + $0x60] sm:$0xff]
                  %239 = vst [vmem:[%s231 + $0x18] sm:$0xff] %v238
                  %v240 = vld [vmem:[%s230 + $0x80] sm:$0xff]
                  %241 = vst [vmem:[%s231 + $0x20] sm:$0xff] %v240
                  %v242 = vld [vmem:[%s230 + $0xa0] sm:$0xff]
                  %243 = vst [vmem:[%s231 + $0x28] sm:$0xff] %v242
                  %v244 = vld [vmem:[%s230 + $0xc0] sm:$0xff]
                  %245 = vst [vmem:[%s231 + $0x30] sm:$0xff] %v244
                  %v246 = vld [vmem:[%s230 + $0xe0] sm:$0xff]
                  %247 = vst [vmem:[%s231 + $0x38] sm:$0xff] %v246
                  %v248 = vld [vmem:[%s230 + $0x100] sm:$0xff]
                  %249 = vst [vmem:[%s231 + $0x40] sm:$0xff] %v248
                  %v250 = vld [vmem:[%s230 + $0x120] sm:$0xff]
                  %251 = vst [vmem:[%s231 + $0x48] sm:$0xff] %v250
                  %v252 = vld [vmem:[%s230 + $0x140] sm:$0xff]
                  %253 = vst [vmem:[%s231 + $0x50] sm:$0xff] %v252
                  %v254 = vld [vmem:[%s230 + $0x160] sm:$0xff]
                  %255 = vst [vmem:[%s231 + $0x58] sm:$0xff] %v254
                  %v256 = vld [vmem:[%s230 + $0x180] sm:$0xff]
                  %257 = vst [vmem:[%s231 + $0x60] sm:$0xff] %v256
                  %v258 = vld [vmem:[%s230 + $0x1a0] sm:$0xff]
                  %259 = vst [vmem:[%s231 + $0x68] sm:$0xff] %v258
                  %v260 = vld [vmem:[%s230 + $0x1c0] sm:$0xff]
                  %261 = vst [vmem:[%s231 + $0x70] sm:$0xff] %v260
                  %v262 = vld [vmem:[%s230 + $0x1e0] sm:$0xff]
                  %263 = vst [vmem:[%s231 + $0x78] sm:$0xff] %v262
                  %v264 = vld [vmem:[%s230 + $0x200] sm:$0xff]
                  %265 = vst [vmem:[%s231 + $0x80] sm:$0xff] %v264
                  %v266 = vld [vmem:[%s230 + $0x220] sm:$0xff]
                  %267 = vst [vmem:[%s231 + $0x88] sm:$0xff] %v266
                  %v268 = vld [vmem:[%s230 + $0x240] sm:$0xff]
                  %269 = vst [vmem:[%s231 + $0x90] sm:$0xff] %v268
                  %v270 = vld [vmem:[%s230 + $0x260] sm:$0xff]
                  %271 = vst [vmem:[%s231 + $0x98] sm:$0xff] %v270
                  %v272 = vld [vmem:[%s230 + $0x280] sm:$0xff]
                  %273 = vst [vmem:[%s231 + $0xa0] sm:$0xff] %v272
                  %v274 = vld [vmem:[%s230 + $0x2a0] sm:$0xff]
                  %275 = vst [vmem:[%s231 + $0xa8] sm:$0xff] %v274
                  %v276 = vld [vmem:[%s230 + $0x2c0] sm:$0xff]
                  %277 = vst [vmem:[%s231 + $0xb0] sm:$0xff] %v276
                  %v278 = vld [vmem:[%s230 + $0x2e0] sm:$0xff]
                  %279 = vst [vmem:[%s231 + $0xb8] sm:$0xff] %v278
                  %v280 = vld [vmem:[%s230 + $0x300] sm:$0xff]
                  %281 = vst [vmem:[%s231 + $0xc0] sm:$0xff] %v280
                  %v282 = vld [vmem:[%s230 + $0x320] sm:$0xff]
                  %283 = vst [vmem:[%s231 + $0xc8] sm:$0xff] %v282
                  %v284 = vld [vmem:[%s230 + $0x340] sm:$0xff]
                  %285 = vst [vmem:[%s231 + $0xd0] sm:$0xff] %v284
                  %v286 = vld [vmem:[%s230 + $0x360] sm:$0xff]
                  %287 = vst [vmem:[%s231 + $0xd8] sm:$0xff] %v286
                  %v288 = vld [vmem:[%s230 + $0x380] sm:$0xff]
                  %289 = vst [vmem:[%s231 + $0xe0] sm:$0xff] %v288
                  %v290 = vld [vmem:[%s230 + $0x3a0] sm:$0xff]
                  %291 = vst [vmem:[%s231 + $0xe8] sm:$0xff] %v290
                  %v292 = vld [vmem:[%s230 + $0x3c0] sm:$0xff]
                  %293 = vst [vmem:[%s231 + $0xf0] sm:$0xff] %v292
                  %v294 = vld [vmem:[%s230 + $0x3e0] sm:$0xff]
                  %295 = vst [vmem:[%s231 + $0xf8] sm:$0xff] %v294
                $region52: #{multvae_forward.3} parent=46 // loop_footer
                  %s229 = sadd.s32 1, %s225
                $region53: #{multvae_forward.3} parent=46 // loop_footer_branch
                  %224 = sbr.rel target = $region49
                $region54: #{multvae_forward.3} parent=46 // loop_exit
                  _
              $region47: #{multvae_forward.3} parent=31 // pred_fallthru
                _
              // Predicated region
              $region55: #{multvae_forward.3} parent=31 // pred_check
                _
              $region56: #{multvae_forward.3} parent=31 // pred_check_branch
                %297 = sbr.rel target = $region58
              $region57: #{multvae_forward.3} parent=31 // pred_region
                _
              $region58: #{multvae_forward.3} parent=31 // pred_fallthru
                _
            $region32: #{multvae_forward.3} parent=27 // pred_fallthru
              _
            // Predicated region
            $region33: #{multvae_forward.3} parent=27 // pred_check
              _
            $region34: #{multvae_forward.3} parent=27 // pred_check_branch
              %148 = sbr.rel target = $region36
            $region35: #{multvae_forward.3} parent=27 // pred_region
              loop: start=0, step=1, limit=1
              $region37: #{multvae_forward.3} parent=35 // loop_pre_header
                _
              $region38: #{multvae_forward.3} parent=35 // loop_header
                %s151 = sphi 0, %s155
                %p152 = scmp.ge.s32.totalorder %s151, 1
                %s156 = sphi %s142, %s142
                %s157 = sphi %s139, %s139
              $region39: #{multvae_forward.3} parent=35 // loop_header_branch
                %154 = sbr.rel (%p152) target = $region43
              $region40: #{multvae_forward.3} parent=35 // loop_body
                %v158 = vld [vmem:[%s156] sm:$0xff]
                %159 = vst [vmem:[%s157] sm:$0xff] %v158
                %v160 = vld [vmem:[%s156 + $0x20] sm:$0xff]
                %161 = vst [vmem:[%s157 + $0x8] sm:$0xff] %v160
                %v162 = vld [vmem:[%s156 + $0x40] sm:$0xff]
                %163 = vst [vmem:[%s157 + $0x10] sm:$0xff] %v162
                %v164 = vld [vmem:[%s156 + $0x60] sm:$0xff]
                %165 = vst [vmem:[%s157 + $0x18] sm:$0xff] %v164
                %v166 = vld [vmem:[%s156 + $0x80] sm:$0xff]
                %167 = vst [vmem:[%s157 + $0x20] sm:$0xff] %v166
                %v168 = vld [vmem:[%s156 + $0xa0] sm:$0xff]
                %169 = vst [vmem:[%s157 + $0x28] sm:$0xff] %v168
                %v170 = vld [vmem:[%s156 + $0xc0] sm:$0xff]
                %171 = vst [vmem:[%s157 + $0x30] sm:$0xff] %v170
                %v172 = vld [vmem:[%s156 + $0xe0] sm:$0xff]
                %173 = vst [vmem:[%s157 + $0x38] sm:$0xff] %v172
                %v174 = vld [vmem:[%s156 + $0x100] sm:$0xff]
                %175 = vst [vmem:[%s157 + $0x40] sm:$0xff] %v174
                %v176 = vld [vmem:[%s156 + $0x120] sm:$0xff]
                %177 = vst [vmem:[%s157 + $0x48] sm:$0xff] %v176
                %v178 = vld [vmem:[%s156 + $0x140] sm:$0xff]
                %179 = vst [vmem:[%s157 + $0x50] sm:$0xff] %v178
                %v180 = vld [vmem:[%s156 + $0x160] sm:$0xff]
                %181 = vst [vmem:[%s157 + $0x58] sm:$0xff] %v180
                %v182 = vld [vmem:[%s156 + $0x180] sm:$0xff]
                %183 = vst [vmem:[%s157 + $0x60] sm:$0xff] %v182
                %v184 = vld [vmem:[%s156 + $0x1a0] sm:$0xff]
                %185 = vst [vmem:[%s157 + $0x68] sm:$0xff] %v184
                %v186 = vld [vmem:[%s156 + $0x1c0] sm:$0xff]
                %187 = vst [vmem:[%s157 + $0x70] sm:$0xff] %v186
                %v188 = vld [vmem:[%s156 + $0x1e0] sm:$0xff]
                %189 = vst [vmem:[%s157 + $0x78] sm:$0xff] %v188
                %v190 = vld [vmem:[%s156 + $0x200] sm:$0xff]
                %191 = vst [vmem:[%s157 + $0x80] sm:$0xff] %v190
                %v192 = vld [vmem:[%s156 + $0x220] sm:$0xff]
                %193 = vst [vmem:[%s157 + $0x88] sm:$0xff] %v192
                %v194 = vld [vmem:[%s156 + $0x240] sm:$0xff]
                %195 = vst [vmem:[%s157 + $0x90] sm:$0xff] %v194
                %v196 = vld [vmem:[%s156 + $0x260] sm:$0xff]
                %197 = vst [vmem:[%s157 + $0x98] sm:$0xff] %v196
                %v198 = vld [vmem:[%s156 + $0x280] sm:$0xff]
                %199 = vst [vmem:[%s157 + $0xa0] sm:$0xff] %v198
                %v200 = vld [vmem:[%s156 + $0x2a0] sm:$0xff]
                %201 = vst [vmem:[%s157 + $0xa8] sm:$0xff] %v200
                %v202 = vld [vmem:[%s156 + $0x2c0] sm:$0xff]
                %203 = vst [vmem:[%s157 + $0xb0] sm:$0xff] %v202
                %v204 = vld [vmem:[%s156 + $0x2e0] sm:$0xff]
                %205 = vst [vmem:[%s157 + $0xb8] sm:$0xff] %v204
                %v206 = vld [vmem:[%s156 + $0x300] sm:$0xff]
                %207 = vst [vmem:[%s157 + $0xc0] sm:$0xff] %v206
                %v208 = vld [vmem:[%s156 + $0x320] sm:$0xff]
                %209 = vst [vmem:[%s157 + $0xc8] sm:$0xff] %v208
                %v210 = vld [vmem:[%s156 + $0x340] sm:$0xff]
                %211 = vst [vmem:[%s157 + $0xd0] sm:$0xff] %v210
                %v212 = vld [vmem:[%s156 + $0x360] sm:$0xff]
                %213 = vst [vmem:[%s157 + $0xd8] sm:$0xff] %v212
                %v214 = vld [vmem:[%s156 + $0x380] sm:$0xff]
                %215 = vst [vmem:[%s157 + $0xe0] sm:$0xff] %v214
                %v216 = vld [vmem:[%s156 + $0x3a0] sm:$0xff]
                %217 = vst [vmem:[%s157 + $0xe8] sm:$0xff] %v216
                %v218 = vld [vmem:[%s156 + $0x3c0] sm:$0xff]
                %219 = vst [vmem:[%s157 + $0xf0] sm:$0xff] %v218
                %v220 = vld [vmem:[%s156 + $0x3e0] sm:$0xff]
                %221 = vst [vmem:[%s157 + $0xf8] sm:$0xff] %v220
              $region41: #{multvae_forward.3} parent=35 // loop_footer
                %s155 = sadd.s32 1, %s151
              $region42: #{multvae_forward.3} parent=35 // loop_footer_branch
                %150 = sbr.rel target = $region38
              $region43: #{multvae_forward.3} parent=35 // loop_exit
                _
            $region36: #{multvae_forward.3} parent=27 // pred_fallthru
              _
          $region28: #{multvae_forward.3} parent=23 // pred_fallthru
            _
          %298 = vnop
        $region24: #{multvae_forward.3} parent=19 // pred_fallthru
          _
        // Predicated region
        $region59: #{multvae_forward.3} parent=19 // pred_check
          %p299 = pneg %p79
        $region60: #{multvae_forward.3} parent=19 // pred_check_branch
          %301 = sbr.rel (%p299) target = $region62
        $region61: #{multvae_forward.3} parent=19 // pred_region
          %s302 = smul.u32 2, %s12
          %p303 = scmp.lt.s32.totalorder %s302, 7
          %s304 = scalar_select %p303, %s302, 7
          %s305 = scalar_lea.vmem %s2, %s304
          %s306 = smul.u32 2, %s12
        $region62: #{multvae_forward.3} parent=19 // pred_fallthru
          _
      $region20: #{multvae_forward.3} parent=5 // pred_fallthru
        _
      %p307 = scmp.le.s32.totalorder 1, %s12
      %p308 = scmp.lt.s32.totalorder %s12, 5
      %p309 = pnand %p307, %p308
      %p310 = pneg %p309
      // Predicated region
      $region63: #{multvae_forward.3} parent=5 // pred_check
        _
      $region64: #{multvae_forward.3} parent=5 // pred_check_branch
        %312 = sbr.rel (%p309) target = $region66
      $region65: #{multvae_forward.3} parent=5 // pred_region
        %s313 = ssub.s32 %s12, 1
        %s314 = sand.u32 %s46, 1
        %s315 = sand.u32 %s46, 1
        %s316 = smul.addr %s315, 256
        %s317 = scalar_lea.vmem [#allocation2], %s316
        // Predicated region
        $region67: #{multvae_forward.3} parent=65 // pred_check
          %p318 = pneg %p59
        $region68: #{multvae_forward.3} parent=65 // pred_check_branch
          %320 = sbr.rel (%p318) target = $region70
        $region69: #{multvae_forward.3} parent=65 // pred_region
          _
        $region70: #{multvae_forward.3} parent=65 // pred_fallthru
          _
        %p321 = pneg %p33
        %p322 = pneg %p30
        %s323 = sand.u32 %s46, 1
        %s324 = sand.u32 %s46, 1
        %s325 = smul.addr %s324, 256
        %s326 = scalar_lea.vmem [#allocation2], %s325
        %p327 = pneg %p59
        %p328 = pneg %p56
        %s329 = smul.u32 2, %s17
        %p330 = scmp.lt.s32.totalorder %s329, 7
        %s331 = scalar_select %p330, %s329, 7
        %s332 = scalar_lea.vmem %s2, %s331
        %p333 = pneg %p85
        %p334 = pneg %p82
        %p335 = pneg %p111
        %p336 = pneg %p108
        %s337 = sand.u32 %s98, 1
        %s338 = scalar_lea.sflag [#allocation4], %s337
        %s339 = sand.u32 %s98, 1
        %s340 = smul.addr %s339, 256
        %s341 = scalar_lea.vmem [#allocation3], %s340
        %s342 = smul.u32 2, %s17
        %s343 = smul.u32 2, %s17
        %p344 = scmp.lt.s32.totalorder %s343, 7
        %s345 = scalar_select %p344, %s343, 7
        %s346 = scalar_lea.vmem %s2, %s345
        %s347 = smul.u32 2, %s17
        %s348 = smul.u32 2, %s17
        %v349 = vld [vmem:[%s0] sm:$0xff]
        %v350 = vld [vmem:[%s0 + $0x8] sm:$0xff]
        %v351 = vld [vmem:[%s0 + $0x10] sm:$0xff]
        %v352 = vld [vmem:[%s0 + $0x18] sm:$0xff]
        %v353 = vld [vmem:[%s0 + $0x20] sm:$0xff]
        %v354 = vld [vmem:[%s0 + $0x28] sm:$0xff]
        %v355 = vld [vmem:[%s0 + $0x30] sm:$0xff]
        %v356 = vld [vmem:[%s0 + $0x38] sm:$0xff]
        %v357 = vld [vmem:[%s0 + $0x40] sm:$0xff]
        %v358 = vld [vmem:[%s0 + $0x48] sm:$0xff]
        %v359 = vld [vmem:[%s0 + $0x50] sm:$0xff]
        %v360 = vld [vmem:[%s0 + $0x58] sm:$0xff]
        %v361 = vld [vmem:[%s0 + $0x60] sm:$0xff]
        %v362 = vld [vmem:[%s0 + $0x68] sm:$0xff]
        %v363 = vld [vmem:[%s0 + $0x70] sm:$0xff]
        %v364 = vld [vmem:[%s0 + $0x78] sm:$0xff]
        %v365 = vld [vmem:[%s317] sm:$0xff]
        %v366 = vld [vmem:[%s317 + $0x8] sm:$0xff]
        %v367 = vld [vmem:[%s317 + $0x10] sm:$0xff]
        %v368 = vld [vmem:[%s317 + $0x18] sm:$0xff]
        %v369 = vld [vmem:[%s317 + $0x20] sm:$0xff]
        %v370 = vld [vmem:[%s317 + $0x28] sm:$0xff]
        %v371 = vld [vmem:[%s317 + $0x30] sm:$0xff]
        %v372 = vld [vmem:[%s317 + $0x38] sm:$0xff]
        %v373 = vld [vmem:[%s317 + $0x40] sm:$0xff]
        %v374 = vld [vmem:[%s317 + $0x48] sm:$0xff]
        %v375 = vld [vmem:[%s317 + $0x50] sm:$0xff]
        %v376 = vld [vmem:[%s317 + $0x58] sm:$0xff]
        %v377 = vld [vmem:[%s317 + $0x60] sm:$0xff]
        %v378 = vld [vmem:[%s317 + $0x68] sm:$0xff]
        %v379 = vld [vmem:[%s317 + $0x70] sm:$0xff]
        %v380 = vld [vmem:[%s317 + $0x78] sm:$0xff]
        %v381 = vld [vmem:[%s317 + $0x80] sm:$0xff]
        %v382 = vld [vmem:[%s317 + $0x88] sm:$0xff]
        %v383 = vld [vmem:[%s317 + $0x90] sm:$0xff]
        %v384 = vld [vmem:[%s317 + $0x98] sm:$0xff]
        %v385 = vld [vmem:[%s317 + $0xa0] sm:$0xff]
        %v386 = vld [vmem:[%s317 + $0xa8] sm:$0xff]
        %v387 = vld [vmem:[%s317 + $0xb0] sm:$0xff]
        %v388 = vld [vmem:[%s317 + $0xb8] sm:$0xff]
        %v389 = vld [vmem:[%s317 + $0xc0] sm:$0xff]
        %v390 = vld [vmem:[%s317 + $0xc8] sm:$0xff]
        %v391 = vld [vmem:[%s317 + $0xd0] sm:$0xff]
        %v392 = vld [vmem:[%s317 + $0xd8] sm:$0xff]
        %v393 = vld [vmem:[%s317 + $0xe0] sm:$0xff]
        %v394 = vld [vmem:[%s317 + $0xe8] sm:$0xff]
        %v395 = vld [vmem:[%s317 + $0xf0] sm:$0xff]
        %v396 = vld [vmem:[%s317 + $0xf8] sm:$0xff]
        %v397 = vld [vmem:[%s346] sm:$0x3]
        %v399 = vlaneseq
        %v400 = vshrl.u32 %v399, 7
        %v401 = vsub.s32 0, %v400
        %v402 = vrot.slane %v397, %v401
        %v403 = vlaneseq
        %v404 = vshrl.u32 %v403, 7
        %v405 = vsub.s32 1, %v404
        %v406 = vrot.slane %v397, %v405
        %v425 = vunpack.c.l.b16 %v349
        %v426 = vunpack.c.h.b16 %v349
        %v427 = vunpack.c.l.b16 %v350
        %v428 = vunpack.c.h.b16 %v350
        %v429 = vunpack.c.l.b16 %v351
        %v430 = vunpack.c.h.b16 %v351
        %v431 = vunpack.c.l.b16 %v352
        %v432 = vunpack.c.h.b16 %v352
        %v433 = vunpack.c.l.b16 %v353
        %v434 = vunpack.c.h.b16 %v353
        %v435 = vunpack.c.l.b16 %v354
        %v436 = vunpack.c.h.b16 %v354
        %v437 = vunpack.c.l.b16 %v355
        %v438 = vunpack.c.h.b16 %v355
        %v439 = vunpack.c.l.b16 %v356
        %v440 = vunpack.c.h.b16 %v356
        %v441 = vunpack.c.l.b16 %v357
        %v442 = vunpack.c.h.b16 %v357
        %v443 = vunpack.c.l.b16 %v358
        %v444 = vunpack.c.h.b16 %v358
        %v445 = vunpack.c.l.b16 %v359
        %v446 = vunpack.c.h.b16 %v359
        %v447 = vunpack.c.l.b16 %v360
        %v448 = vunpack.c.h.b16 %v360
        %v449 = vunpack.c.l.b16 %v361
        %v450 = vunpack.c.h.b16 %v361
        %v451 = vunpack.c.l.b16 %v362
        %v452 = vunpack.c.h.b16 %v362
        %v453 = vunpack.c.l.b16 %v363
        %v454 = vunpack.c.h.b16 %v363
        %v455 = vunpack.c.l.b16 %v364
        %v456 = vunpack.c.h.b16 %v364
        %v457 = vpack.c.b16 %v427, %v425
        %v458 = vpack.c.b16 %v428, %v426
        %v459 = vpack.c.b16 %v431, %v429
        %v460 = vpack.c.b16 %v432, %v430
        %v461 = vpack.c.b16 %v435, %v433
        %v462 = vpack.c.b16 %v436, %v434
        %v463 = vpack.c.b16 %v439, %v437
        %v464 = vpack.c.b16 %v440, %v438
        %v465 = vpack.c.b16 %v443, %v441
        %v466 = vpack.c.b16 %v444, %v442
        %v467 = vpack.c.b16 %v447, %v445
        %v468 = vpack.c.b16 %v448, %v446
        %v469 = vpack.c.b16 %v451, %v449
        %v470 = vpack.c.b16 %v452, %v450
        %v471 = vpack.c.b16 %v455, %v453
        %v472 = vpack.c.b16 %v456, %v454
        %v521 = vunpack.c.l.b16 %v365
        %v522 = vunpack.c.h.b16 %v365
        %v523 = vunpack.c.l.b16 %v366
        %v524 = vunpack.c.h.b16 %v366
        %v525 = vunpack.c.l.b16 %v367
        %v526 = vunpack.c.h.b16 %v367
        %v527 = vunpack.c.l.b16 %v368
        %v528 = vunpack.c.h.b16 %v368
        %v529 = vunpack.c.l.b16 %v369
        %v530 = vunpack.c.h.b16 %v369
        %v531 = vunpack.c.l.b16 %v370
        %v532 = vunpack.c.h.b16 %v370
        %v533 = vunpack.c.l.b16 %v371
        %v534 = vunpack.c.h.b16 %v371
        %v535 = vunpack.c.l.b16 %v372
        %v536 = vunpack.c.h.b16 %v372
        %v537 = vunpack.c.l.b16 %v373
        %v538 = vunpack.c.h.b16 %v373
        %v539 = vunpack.c.l.b16 %v374
        %v540 = vunpack.c.h.b16 %v374
        %v541 = vunpack.c.l.b16 %v375
        %v542 = vunpack.c.h.b16 %v375
        %v543 = vunpack.c.l.b16 %v376
        %v544 = vunpack.c.h.b16 %v376
        %v545 = vunpack.c.l.b16 %v377
        %v546 = vunpack.c.h.b16 %v377
        %v547 = vunpack.c.l.b16 %v378
        %v548 = vunpack.c.h.b16 %v378
        %v549 = vunpack.c.l.b16 %v379
        %v550 = vunpack.c.h.b16 %v379
        %v551 = vunpack.c.l.b16 %v380
        %v552 = vunpack.c.h.b16 %v380
        %v553 = vunpack.c.l.b16 %v381
        %v554 = vunpack.c.h.b16 %v381
        %v555 = vunpack.c.l.b16 %v382
        %v556 = vunpack.c.h.b16 %v382
        %v557 = vunpack.c.l.b16 %v383
        %v558 = vunpack.c.h.b16 %v383
        %v559 = vunpack.c.l.b16 %v384
        %v560 = vunpack.c.h.b16 %v384
        %v561 = vunpack.c.l.b16 %v385
        %v562 = vunpack.c.h.b16 %v385
        %v563 = vunpack.c.l.b16 %v386
        %v564 = vunpack.c.h.b16 %v386
        %v565 = vunpack.c.l.b16 %v387
        %v566 = vunpack.c.h.b16 %v387
        %v567 = vunpack.c.l.b16 %v388
        %v568 = vunpack.c.h.b16 %v388
        %v569 = vunpack.c.l.b16 %v389
        %v570 = vunpack.c.h.b16 %v389
        %v571 = vunpack.c.l.b16 %v390
        %v572 = vunpack.c.h.b16 %v390
        %v573 = vunpack.c.l.b16 %v391
        %v574 = vunpack.c.h.b16 %v391
        %v575 = vunpack.c.l.b16 %v392
        %v576 = vunpack.c.h.b16 %v392
        %v577 = vunpack.c.l.b16 %v393
        %v578 = vunpack.c.h.b16 %v393
        %v579 = vunpack.c.l.b16 %v394
        %v580 = vunpack.c.h.b16 %v394
        %v581 = vunpack.c.l.b16 %v395
        %v582 = vunpack.c.h.b16 %v395
        %v583 = vunpack.c.l.b16 %v396
        %v584 = vunpack.c.h.b16 %v396
        %v585 = vpack.c.b16 %v523, %v521
        %v586 = vpack.c.b16 %v524, %v522
        %v587 = vpack.c.b16 %v527, %v525
        %v588 = vpack.c.b16 %v528, %v526
        %v589 = vpack.c.b16 %v531, %v529
        %v590 = vpack.c.b16 %v532, %v530
        %v591 = vpack.c.b16 %v535, %v533
        %v592 = vpack.c.b16 %v536, %v534
        %v593 = vpack.c.b16 %v539, %v537
        %v594 = vpack.c.b16 %v540, %v538
        %v595 = vpack.c.b16 %v543, %v541
        %v596 = vpack.c.b16 %v544, %v542
        %v597 = vpack.c.b16 %v547, %v545
        %v598 = vpack.c.b16 %v548, %v546
        %v599 = vpack.c.b16 %v551, %v549
        %v600 = vpack.c.b16 %v552, %v550
        %v601 = vpack.c.b16 %v555, %v553
        %v602 = vpack.c.b16 %v556, %v554
        %v603 = vpack.c.b16 %v559, %v557
        %v604 = vpack.c.b16 %v560, %v558
        %v605 = vpack.c.b16 %v563, %v561
        %v606 = vpack.c.b16 %v564, %v562
        %v607 = vpack.c.b16 %v567, %v565
        %v608 = vpack.c.b16 %v568, %v566
        %v609 = vpack.c.b16 %v571, %v569
        %v610 = vpack.c.b16 %v572, %v570
        %v611 = vpack.c.b16 %v575, %v573
        %v612 = vpack.c.b16 %v576, %v574
        %v613 = vpack.c.b16 %v579, %v577
        %v614 = vpack.c.b16 %v580, %v578
        %v615 = vpack.c.b16 %v583, %v581
        %v616 = vpack.c.b16 %v584, %v582
        %649 = vmatprep.subr.bf16.mxu0 %v586
        %650 = vmatpush1.bf16.msra.mxu0 %v585
        %651 = vmatprep.subr.bf16.mxu0 %v588
        %652 = vmatpush1.bf16.msra.mxu0 %v587
        %653 = vmatprep.subr.bf16.mxu0 %v590
        %654 = vmatpush1.bf16.msra.mxu0 %v589
        %655 = vmatprep.subr.bf16.mxu0 %v592
        %656 = vmatpush1.bf16.msra.mxu0 %v591
        %657 = vmatprep.subr.bf16.mxu0 %v594
        %658 = vmatpush1.bf16.msra.mxu0 %v593
        %659 = vmatprep.subr.bf16.mxu0 %v596
        %660 = vmatpush1.bf16.msra.mxu0 %v595
        %661 = vmatprep.subr.bf16.mxu0 %v598
        %662 = vmatpush1.bf16.msra.mxu0 %v597
        %663 = vmatprep.subr.bf16.mxu0 %v600
        %664 = vmatpush1.bf16.msra.mxu0 %v599
        %665 = vmatprep.subr.bf16.mxu0 %v602
        %666 = vmatpush1.bf16.msra.mxu0 %v601
        %667 = vmatprep.subr.bf16.mxu0 %v604
        %668 = vmatpush1.bf16.msra.mxu0 %v603
        %669 = vmatprep.subr.bf16.mxu0 %v606
        %670 = vmatpush1.bf16.msra.mxu0 %v605
        %671 = vmatprep.subr.bf16.mxu0 %v608
        %672 = vmatpush1.bf16.msra.mxu0 %v607
        %673 = vmatprep.subr.bf16.mxu0 %v610
        %674 = vmatpush1.bf16.msra.mxu0 %v609
        %675 = vmatprep.subr.bf16.mxu0 %v612
        %676 = vmatpush1.bf16.msra.mxu0 %v611
        %677 = vmatprep.subr.bf16.mxu0 %v614
        %678 = vmatpush1.bf16.msra.mxu0 %v613
        %679 = vmatprep.subr.bf16.mxu0 %v616
        %680 = vmatpush1.bf16.msra.mxu0 %v615
        %681 = vmatprep.mubr.bf16.mxu0 %v458
        %682 = vmatmul.mubr.bf16.gmra.mrb[0].mxu0 %v457
        %v683 = vpop.f32.mrb[0].mxu0
        %v684 = vadd.f32 %v402, %v683
        %v685 = vpop.f32.mrb[0].mxu0
        %v686 = vadd.f32 %v406, %v685
        %v687 = vpop.f32.mrb[0].mxu0
        %v688 = vadd.f32 %v402, %v687
        %v689 = vpop.f32.mrb[0].mxu0
        %v690 = vadd.f32 %v406, %v689
        %691 = vmatprep.mubr.bf16.mxu0 %v460
        %692 = vmatmul.mubr.bf16.gmra.mrb[0].mxu0 %v459
        %v693 = vpop.f32.mrb[0].mxu0
        %v694 = vadd.f32 %v402, %v693
        %v695 = vpop.f32.mrb[0].mxu0
        %v696 = vadd.f32 %v406, %v695
        %v697 = vpop.f32.mrb[0].mxu0
        %v698 = vadd.f32 %v402, %v697
        %v699 = vpop.f32.mrb[0].mxu0
        %v700 = vadd.f32 %v406, %v699
        %701 = vmatprep.mubr.bf16.mxu0 %v462
        %702 = vmatmul.mubr.bf16.gmra.mrb[0].mxu0 %v461
        %v703 = vpop.f32.mrb[0].mxu0
        %v704 = vadd.f32 %v402, %v703
        %v705 = vpop.f32.mrb[0].mxu0
        %v706 = vadd.f32 %v406, %v705
        %v707 = vpop.f32.mrb[0].mxu0
        %v708 = vadd.f32 %v402, %v707
        %v709 = vpop.f32.mrb[0].mxu0
        %v710 = vadd.f32 %v406, %v709
        %711 = vmatprep.mubr.bf16.mxu0 %v464
        %712 = vmatmul.mubr.bf16.gmra.mrb[0].mxu0 %v463
        %v713 = vpop.f32.mrb[0].mxu0
        %v714 = vadd.f32 %v402, %v713
        %v715 = vpop.f32.mrb[0].mxu0
        %v716 = vadd.f32 %v406, %v715
        %v717 = vpop.f32.mrb[0].mxu0
        %v718 = vadd.f32 %v402, %v717
        %v719 = vpop.f32.mrb[0].mxu0
        %v720 = vadd.f32 %v406, %v719
        %721 = vmatprep.mubr.bf16.mxu0 %v466
        %722 = vmatmul.mubr.bf16.gmra.mrb[0].mxu0 %v465
        %v723 = vpop.f32.mrb[0].mxu0
        %v724 = vadd.f32 %v402, %v723
        %v725 = vpop.f32.mrb[0].mxu0
        %v726 = vadd.f32 %v406, %v725
        %v727 = vpop.f32.mrb[0].mxu0
        %v728 = vadd.f32 %v402, %v727
        %v729 = vpop.f32.mrb[0].mxu0
        %v730 = vadd.f32 %v406, %v729
        %731 = vmatprep.mubr.bf16.mxu0 %v468
        %732 = vmatmul.mubr.bf16.gmra.mrb[0].mxu0 %v467
        %v733 = vpop.f32.mrb[0].mxu0
        %v734 = vadd.f32 %v402, %v733
        %v735 = vpop.f32.mrb[0].mxu0
        %v736 = vadd.f32 %v406, %v735
        %v737 = vpop.f32.mrb[0].mxu0
        %v738 = vadd.f32 %v402, %v737
        %v739 = vpop.f32.mrb[0].mxu0
        %v740 = vadd.f32 %v406, %v739
        %741 = vmatprep.mubr.bf16.mxu0 %v470
        %742 = vmatmul.mubr.bf16.gmra.mrb[0].mxu0 %v469
        %v743 = vpop.f32.mrb[0].mxu0
        %v744 = vadd.f32 %v402, %v743
        %v745 = vpop.f32.mrb[0].mxu0
        %v746 = vadd.f32 %v406, %v745
        %v747 = vpop.f32.mrb[0].mxu0
        %v748 = vadd.f32 %v402, %v747
        %v749 = vpop.f32.mrb[0].mxu0
        %v750 = vadd.f32 %v406, %v749
        %751 = vmatprep.mubr.bf16.mxu0 %v472
        %752 = vmatmul.mubr.bf16.gmra.mrb[0].mxu0 %v471
        %v753 = vpop.f32.mrb[0].mxu0
        %v754 = vadd.f32 %v402, %v753
        %v755 = vpop.f32.mrb[0].mxu0
        %v756 = vadd.f32 %v406, %v755
        %v757 = vpop.f32.mrb[0].mxu0
        %v758 = vadd.f32 %v402, %v757
        %v759 = vpop.f32.mrb[0].mxu0
        %v760 = vadd.f32 %v406, %v759
        %761 = vdwg.mxu0
        %762 = vst [vmem:[%s341] sm:$0xff] %v684
        %763 = vst [vmem:[%s341 + $0x8] sm:$0xff] %v686
        %764 = vst [vmem:[%s341 + $0x10] sm:$0xff] %v688
        %765 = vst [vmem:[%s341 + $0x18] sm:$0xff] %v690
        %766 = vst [vmem:[%s341 + $0x20] sm:$0xff] %v694
        %767 = vst [vmem:[%s341 + $0x28] sm:$0xff] %v696
        %768 = vst [vmem:[%s341 + $0x30] sm:$0xff] %v698
        %769 = vst [vmem:[%s341 + $0x38] sm:$0xff] %v700
        %770 = vst [vmem:[%s341 + $0x40] sm:$0xff] %v704
        %771 = vst [vmem:[%s341 + $0x48] sm:$0xff] %v706
        %772 = vst [vmem:[%s341 + $0x50] sm:$0xff] %v708
        %773 = vst [vmem:[%s341 + $0x58] sm:$0xff] %v710
        %774 = vst [vmem:[%s341 + $0x60] sm:$0xff] %v714
        %775 = vst [vmem:[%s341 + $0x68] sm:$0xff] %v716
        %776 = vst [vmem:[%s341 + $0x70] sm:$0xff] %v718
        %777 = vst [vmem:[%s341 + $0x78] sm:$0xff] %v720
        %778 = vst [vmem:[%s341 + $0x80] sm:$0xff] %v724
        %779 = vst [vmem:[%s341 + $0x88] sm:$0xff] %v726
        %780 = vst [vmem:[%s341 + $0x90] sm:$0xff] %v728
        %781 = vst [vmem:[%s341 + $0x98] sm:$0xff] %v730
        %782 = vst [vmem:[%s341 + $0xa0] sm:$0xff] %v734
        %783 = vst [vmem:[%s341 + $0xa8] sm:$0xff] %v736
        %784 = vst [vmem:[%s341 + $0xb0] sm:$0xff] %v738
        %785 = vst [vmem:[%s341 + $0xb8] sm:$0xff] %v740
        %786 = vst [vmem:[%s341 + $0xc0] sm:$0xff] %v744
        %787 = vst [vmem:[%s341 + $0xc8] sm:$0xff] %v746
        %788 = vst [vmem:[%s341 + $0xd0] sm:$0xff] %v748
        %789 = vst [vmem:[%s341 + $0xd8] sm:$0xff] %v750
        %790 = vst [vmem:[%s341 + $0xe0] sm:$0xff] %v754
        %791 = vst [vmem:[%s341 + $0xe8] sm:$0xff] %v756
        %792 = vst [vmem:[%s341 + $0xf0] sm:$0xff] %v758
        %793 = vst [vmem:[%s341 + $0xf8] sm:$0xff] %v760
        %s794 = sand.u32 %s98, 1
        %s795 = scalar_lea.sflag [#allocation4], %s794
        %s796 = sand.u32 %s98, 1
        %s797 = smul.addr %s796, 256
        %s798 = scalar_lea.vmem [#allocation3], %s797
        // Predicated region
        $region71: #{multvae_forward.3} parent=65 // pred_check
          %p799 = pneg %p108
        $region72: #{multvae_forward.3} parent=65 // pred_check_branch
          %801 = sbr.rel (%p799) target = $region74
        $region73: #{multvae_forward.3} parent=65 // pred_region
          %s802 = smul.u32 2, %s17
          %s804 = ssub.s32 4096, 4096
          %805 = vsyncadd %s795, %s804
          %s806 = smul.addr %s802, 128
          %s807 = scalar_lea.hbm %s3, %s806
          %s808 = sshll.u32 %s798, 4
          %s809 = int_to_ptr.vmem [resolvable:$true] %s808
          %814 = dma.vmem_to_hbm [thread:$0]  %s809, 4096, %s807, %s795, 256, 1024, 16
        $region74: #{multvae_forward.3} parent=65 // pred_fallthru
          _
      $region66: #{multvae_forward.3} parent=5 // pred_fallthru
        _
      %p815 = scmp.le.s32.totalorder 2, %s12
      // Predicated region
      $region75: #{multvae_forward.3} parent=5 // pred_check
        %p816 = pneg %p815
      $region76: #{multvae_forward.3} parent=5 // pred_check_branch
        %818 = sbr.rel (%p816) target = $region78
      $region77: #{multvae_forward.3} parent=5 // pred_region
        %s819 = ssub.s32 %s12, 2
        // Predicated region
        $region79: #{multvae_forward.3} parent=77 // pred_check
          %p820 = pneg %p114
        $region80: #{multvae_forward.3} parent=77 // pred_check_branch
          %822 = sbr.rel (%p820) target = $region82
        $region81: #{multvae_forward.3} parent=77 // pred_region
          %s823 = sand.u32 %s99, 1
          %s824 = scalar_lea.sflag [#allocation4], %s823
          %s825 = sand.u32 %s99, 1
          %s826 = smul.addr %s825, 256
          %s827 = scalar_lea.vmem [#allocation3], %s826
          %828 = dma.done %s824, 4096
        $region82: #{multvae_forward.3} parent=77 // pred_fallthru
          _
      $region78: #{multvae_forward.3} parent=5 // pred_fallthru
        _
    $region6: #{multvae_forward.3} parent=1 // loop_footer
      %s16 = sadd.s32 1, %s12
    $region7: #{multvae_forward.3} parent=1 // loop_footer_branch
      %11 = sbr.rel target = $region3
    $region8: #{multvae_forward.3} parent=1 // loop_exit
      _
    %829 = vsyncpa [#allocation4], 1
    %s830 = scalar_lea.sflag [#allocation4], 1
    %831 = vsyncpa %s830, 1

// kernel: multvae_forward.2
$region0: #{multvae_forward.2}
  #allocation0 [shape = 'u32[]', space=smem, size = 0x4, offset = 0x4, fixed_abs, tag = 'smem constant byte address 0x4 - core index']
  #allocation1 [shape = 'u32[144,128]{1,0:T(1,128)}', space=vmem, size = 0x12000, scoped, tag = 'internal scratch']
  #allocation2 [shape = 'f32[128,256]{1,0:T(8,128)}', space=vmem, size = 0x20000, scoped, tag = 'scratch operand']
  #allocation3 [shape = 'f32[128,1]{1,0:T(8,128)}', space=vmem, size = 0x10000, scoped, tag = 'scratch operand']
  #allocation4 [shape = 's32[1]{0}', space=sflag, size = 0x4, scoped, tag = 'scoped memory for multvae_forward.2']
  #allocation5 [shape = 's32[1]{0:T(128)S(6)}', space=smem, size = 0x200, scoped, tag = 'prefetched SMEM operand 0']
  %s0 = inlined_call_operand.<no memory space> [shape: s32[1], index: 0, kind: input, shape index: {}]
  %s1 = inlined_call_operand.hbm [shape: f32[128,1024], index: 1, kind: input, shape index: {}]
  %s2 = inlined_call_operand.hbm [shape: bf16[1024,256], index: 2, kind: input, shape index: {}]
  %s3 = inlined_call_operand.vmem [shape: f32[1,256], index: 3, kind: input, shape index: {}]
  %s4 = inlined_call_operand.hbm [shape: f32[256,256], index: 4, kind: input, shape index: {}]
  %s5 = inlined_call_operand.vmem [shape: f32[1,256], index: 5, kind: input, shape index: {}]
  %s6 = inlined_call_operand.hbm [shape: f32[128,128], index: 6, kind: input, shape index: {}]
  %s7 = inlined_call_operand.hbm [shape: f32[128,256], index: 7, kind: input, shape index: {}]
  %s8 = inlined_call_operand.vmem [shape: f32[1,256], index: 8, kind: input, shape index: {}]
  %s9 = inlined_call_operand.vmem [shape: bf16[128,256], index: 9, kind: output, shape index: {0}]
  %s10 = inlined_call_operand.hbm [shape: f32[1,1], index: 10, kind: output, shape index: {1}]
  %11 = xla_tuple %s9, %s10
  %s12 = sld [smem:[#allocation0]]
  $region101: #{multvae_forward.2} parent=0
    _
  %s14 = ssub.s32 1, %s12
  %s15 = scalar_select 0, %s14, %s12
  %16 = sst [smem:[#allocation5]] %s0
  $region1: #{multvae_forward.2} parent=0
    #allocation6 [shape = 'u8[262144]{0}', space=vmem, size = 0x40000, scoped, tag = 'input window, operand 1']
    #allocation7 [shape = 's32[2]{0}', space=sflag, size = 0x8, scoped, tag = 'scoped memory for multvae_forward.2']
    #allocation8 [shape = 's32[2]{0}', space=sflag, size = 0x8, scoped, tag = 'scoped memory for multvae_forward.2']
    #allocation9 [shape = 'u8[262144]{0}', space=vmem, size = 0x40000, scoped, tag = 'input window, operand 2']
    #allocation10 [shape = 's32[2]{0}', space=sflag, size = 0x8, scoped, tag = 'scoped memory for multvae_forward.2']
    #allocation11 [shape = 'u8[262144]{0}', space=vmem, size = 0x40000, scoped, tag = 'input window, operand 4, single buffered']
    #allocation12 [shape = 'u8[65536]{0}', space=vmem, size = 0x10000, scoped, tag = 'input window, operand 6, single buffered']
    #allocation13 [shape = 's32[1]{0}', space=sflag, size = 0x4, scoped, tag = 'scoped memory for multvae_forward.2']
    #allocation14 [shape = 'u8[131072]{0}', space=vmem, size = 0x20000, scoped, tag = 'input window, operand 7, single buffered']
    #allocation15 [shape = 'u8[512]{0}', space=vmem, size = 0x400, scoped, tag = 'output window, operand 1, single buffered']
    %17 = vsyncpa [#allocation7], 0
    %s18 = scalar_lea.sflag [#allocation7], 1
    %19 = vsyncpa %s18, 0
    %20 = vsyncpa [#allocation10], 0
    %s21 = scalar_lea.sflag [#allocation10], 1
    %22 = vsyncpa %s21, 0
    %23 = vsyncpa [#allocation13], 0
    %24 = vsyncpa [#allocation8], 0
    loop: start=0, step=1, limit=6
    $region2: #{multvae_forward.2} parent=1 // loop_pre_header
      _
    $region3: #{multvae_forward.2} parent=1 // loop_header
      %s26 = sphi 0, %s30
      %p27 = scmp.ge.s32.totalorder %s26, 6
      %s36 = sphi 0, %s38
      %s39 = sphi 0, %s36
      %s40 = sphi 0, %s39
      %s56 = sphi 0, %s40
      %s62 = sphi 0, %s64
      %s65 = sphi 0, %s62
      %s66 = sphi 0, %s65
      %s82 = sphi 0, %s66
      %s86 = sphi 0, %s86
      %s88 = sphi 0, %s86
      %s89 = sphi 0, %s88
      %s103 = sphi 0, %s89
      %s107 = sphi 0, %s107
      %s109 = sphi 0, %s107
      %s110 = sphi 0, %s109
      %s124 = sphi 0, %s110
      %s128 = sphi 0, %s128
      %s130 = sphi 0, %s128
      %s131 = sphi 0, %s130
      %s145 = sphi 0, %s131
      %s149 = sphi 0, %s149
      %s151 = sphi 0, %s149
      %s152 = sphi 0, %s151
      %s166 = sphi 0, %s152
      %s170 = sphi 0, %s170
      %s172 = sphi 0, %s170
      %s173 = sphi 0, %s172
      %s187 = sphi 0, %s173
      %s191 = sphi 0, %s191
      %s193 = sphi 0, %s191
      %s194 = sphi 0, %s193
      %s208 = sphi 0, %s194
      %s212 = sphi 0, %s212
      %s214 = sphi 0, %s212
      %s215 = sphi 0, %s214
      %s229 = sphi 0, %s215
      %s233 = sphi 0, %s233
      %s235 = sphi 0, %s233
      %s236 = sphi 0, %s235
      %s250 = sphi 0, %s236
    $region4: #{multvae_forward.2} parent=1 // loop_header_branch
      %29 = sbr.rel (%p27) target = $region8
    $region5: #{multvae_forward.2} parent=1 // loop_body
      %s31 = ssub.s32 %s26, 1
      %s32 = ssub.s32 %s26, 2
      %s33 = sadd.s32 %s26, 1
      %s34 = ssub.s32 %s26, %s33
      %p35 = scmp.eq.s32.totalorder %s34, 0
      %s37 = sadd.s32 %s36, 1
      %s38 = scalar_select %p35, %s36, %s37
      %p41 = pneg %p35
      %p42 = scmp.eq.s32.totalorder %s26, 3
      %p43 = por %p41, %p42
      %p44 = scmp.ne.s32.totalorder %s36, %s39
      %p45 = scmp.eq.s32.totalorder %s26, 0
      %p46 = por %p44, %p45
      %p47 = scmp.ne.s32.totalorder %s36, %s39
      %p48 = scmp.eq.s32.totalorder %s31, 3
      %p49 = por %p47, %p48
      %p50 = scmp.ne.s32.totalorder %s39, %s40
      %p51 = scmp.eq.s32.totalorder %s31, 0
      %p52 = por %p50, %p51
      %p53 = scmp.ne.s32.totalorder %s39, %s40
      %p54 = scmp.eq.s32.totalorder %s32, 3
      %p55 = por %p53, %p54
      %p57 = scmp.ne.s32.totalorder %s40, %s56
      %p58 = scmp.eq.s32.totalorder %s32, 0
      %p59 = por %p57, %p58
      %s60 = ssub.s32 %s26, %s33
      %p61 = scmp.eq.s32.totalorder %s60, 0
      %s63 = sadd.s32 %s62, 1
      %s64 = scalar_select %p61, %s62, %s63
      %p67 = pneg %p61
      %p68 = scmp.eq.s32.totalorder %s26, 3
      %p69 = por %p67, %p68
      %p70 = scmp.ne.s32.totalorder %s62, %s65
      %p71 = scmp.eq.s32.totalorder %s26, 0
      %p72 = por %p70, %p71
      %p73 = scmp.ne.s32.totalorder %s62, %s65
      %p74 = scmp.eq.s32.totalorder %s31, 3
      %p75 = por %p73, %p74
      %p76 = scmp.ne.s32.totalorder %s65, %s66
      %p77 = scmp.eq.s32.totalorder %s31, 0
      %p78 = por %p76, %p77
      %p79 = scmp.ne.s32.totalorder %s65, %s66
      %p80 = scmp.eq.s32.totalorder %s32, 3
      %p81 = por %p79, %p80
      %p83 = scmp.ne.s32.totalorder %s66, %s82
      %p84 = scmp.eq.s32.totalorder %s32, 0
      %p85 = por %p83, %p84
      %s87 = sadd.s32 %s86, 1
      %p90 = scmp.eq.s32.totalorder %s26, 3
      %p91 = scmp.ne.s32.totalorder %s86, %s88
      %p92 = scmp.eq.s32.totalorder %s26, 0
      %p93 = por %p91, %p92
      %p94 = scmp.ne.s32.totalorder %s86, %s88
      %p95 = scmp.eq.s32.totalorder %s31, 3
      %p96 = por %p94, %p95
      %p97 = scmp.ne.s32.totalorder %s88, %s89
      %p98 = scmp.eq.s32.totalorder %s31, 0
      %p99 = por %p97, %p98
      %p100 = scmp.ne.s32.totalorder %s88, %s89
      %p101 = scmp.eq.s32.totalorder %s32, 3
      %p102 = por %p100, %p101
      %p104 = scmp.ne.s32.totalorder %s89, %s103
      %p105 = scmp.eq.s32.totalorder %s32, 0
      %p106 = por %p104, %p105
      %s108 = sadd.s32 %s107, 1
      %p111 = scmp.eq.s32.totalorder %s26, 3
      %p112 = scmp.ne.s32.totalorder %s107, %s109
      %p113 = scmp.eq.s32.totalorder %s26, 0
      %p114 = por %p112, %p113
      %p115 = scmp.ne.s32.totalorder %s107, %s109
      %p116 = scmp.eq.s32.totalorder %s31, 3
      %p117 = por %p115, %p116
      %p118 = scmp.ne.s32.totalorder %s109, %s110
      %p119 = scmp.eq.s32.totalorder %s31, 0
      %p120 = por %p118, %p119
      %p121 = scmp.ne.s32.totalorder %s109, %s110
      %p122 = scmp.eq.s32.totalorder %s32, 3
      %p123 = por %p121, %p122
      %p125 = scmp.ne.s32.totalorder %s110, %s124
      %p126 = scmp.eq.s32.totalorder %s32, 0
      %p127 = por %p125, %p126
      %s129 = sadd.s32 %s128, 1
      %p132 = scmp.eq.s32.totalorder %s26, 3
      %p133 = scmp.ne.s32.totalorder %s128, %s130
      %p134 = scmp.eq.s32.totalorder %s26, 0
      %p135 = por %p133, %p134
      %p136 = scmp.ne.s32.totalorder %s128, %s130
      %p137 = scmp.eq.s32.totalorder %s31, 3
      %p138 = por %p136, %p137
      %p139 = scmp.ne.s32.totalorder %s130, %s131
      %p140 = scmp.eq.s32.totalorder %s31, 0
      %p141 = por %p139, %p140
      %p142 = scmp.ne.s32.totalorder %s130, %s131
      %p143 = scmp.eq.s32.totalorder %s32, 3
      %p144 = por %p142, %p143
      %p146 = scmp.ne.s32.totalorder %s131, %s145
      %p147 = scmp.eq.s32.totalorder %s32, 0
      %p148 = por %p146, %p147
      %s150 = sadd.s32 %s149, 1
      %p153 = scmp.eq.s32.totalorder %s26, 3
      %p154 = scmp.ne.s32.totalorder %s149, %s151
      %p155 = scmp.eq.s32.totalorder %s26, 0
      %p156 = por %p154, %p155
      %p157 = scmp.ne.s32.totalorder %s149, %s151
      %p158 = scmp.eq.s32.totalorder %s31, 3
      %p159 = por %p157, %p158
      %p160 = scmp.ne.s32.totalorder %s151, %s152
      %p161 = scmp.eq.s32.totalorder %s31, 0
      %p162 = por %p160, %p161
      %p163 = scmp.ne.s32.totalorder %s151, %s152
      %p164 = scmp.eq.s32.totalorder %s32, 3
      %p165 = por %p163, %p164
      %p167 = scmp.ne.s32.totalorder %s152, %s166
      %p168 = scmp.eq.s32.totalorder %s32, 0
      %p169 = por %p167, %p168
      %s171 = sadd.s32 %s170, 1
      %p174 = scmp.eq.s32.totalorder %s26, 3
      %p175 = scmp.ne.s32.totalorder %s170, %s172
      %p176 = scmp.eq.s32.totalorder %s26, 0
      %p177 = por %p175, %p176
      %p178 = scmp.ne.s32.totalorder %s170, %s172
      %p179 = scmp.eq.s32.totalorder %s31, 3
      %p180 = por %p178, %p179
      %p181 = scmp.ne.s32.totalorder %s172, %s173
      %p182 = scmp.eq.s32.totalorder %s31, 0
      %p183 = por %p181, %p182
      %p184 = scmp.ne.s32.totalorder %s172, %s173
      %p185 = scmp.eq.s32.totalorder %s32, 3
      %p186 = por %p184, %p185
      %p188 = scmp.ne.s32.totalorder %s173, %s187
      %p189 = scmp.eq.s32.totalorder %s32, 0
      %p190 = por %p188, %p189
      %s192 = sadd.s32 %s191, 1
      %p195 = scmp.eq.s32.totalorder %s26, 3
      %p196 = scmp.ne.s32.totalorder %s191, %s193
      %p197 = scmp.eq.s32.totalorder %s26, 0
      %p198 = por %p196, %p197
      %p199 = scmp.ne.s32.totalorder %s191, %s193
      %p200 = scmp.eq.s32.totalorder %s31, 3
      %p201 = por %p199, %p200
      %p202 = scmp.ne.s32.totalorder %s193, %s194
      %p203 = scmp.eq.s32.totalorder %s31, 0
      %p204 = por %p202, %p203
      %p205 = scmp.ne.s32.totalorder %s193, %s194
      %p206 = scmp.eq.s32.totalorder %s32, 3
      %p207 = por %p205, %p206
      %p209 = scmp.ne.s32.totalorder %s194, %s208
      %p210 = scmp.eq.s32.totalorder %s32, 0
      %p211 = por %p209, %p210
      %s213 = sadd.s32 %s212, 1
      %p216 = scmp.eq.s32.totalorder %s26, 3
      %p217 = scmp.ne.s32.totalorder %s212, %s214
      %p218 = scmp.eq.s32.totalorder %s26, 0
      %p219 = por %p217, %p218
      %p220 = scmp.ne.s32.totalorder %s212, %s214
      %p221 = scmp.eq.s32.totalorder %s31, 3
      %p222 = por %p220, %p221
      %p223 = scmp.ne.s32.totalorder %s214, %s215
      %p224 = scmp.eq.s32.totalorder %s31, 0
      %p225 = por %p223, %p224
      %p226 = scmp.ne.s32.totalorder %s214, %s215
      %p227 = scmp.eq.s32.totalorder %s32, 3
      %p228 = por %p226, %p227
      %p230 = scmp.ne.s32.totalorder %s215, %s229
      %p231 = scmp.eq.s32.totalorder %s32, 0
      %p232 = por %p230, %p231
      %s234 = sadd.s32 %s233, 1
      %p237 = scmp.eq.s32.totalorder %s26, 3
      %p238 = scmp.ne.s32.totalorder %s233, %s235
      %p239 = scmp.eq.s32.totalorder %s26, 0
      %p240 = por %p238, %p239
      %p241 = scmp.ne.s32.totalorder %s233, %s235
      %p242 = scmp.eq.s32.totalorder %s31, 3
      %p243 = por %p241, %p242
      %p244 = scmp.ne.s32.totalorder %s235, %s236
      %p245 = scmp.eq.s32.totalorder %s31, 0
      %p246 = por %p244, %p245
      %p247 = scmp.ne.s32.totalorder %s235, %s236
      %p248 = scmp.eq.s32.totalorder %s32, 3
      %p249 = por %p247, %p248
      %p251 = scmp.ne.s32.totalorder %s236, %s250
      %p252 = scmp.eq.s32.totalorder %s32, 0
      %p253 = por %p251, %p252
      %p254 = scmp.le.s32.totalorder 1, %s26
      %p255 = scmp.lt.s32.totalorder %s26, 5
      %p256 = pnand %p254, %p255
      %p257 = pneg %p256
      // Predicated region
      $region9: #{multvae_forward.2} parent=5 // pred_check
        _
      $region10: #{multvae_forward.2} parent=5 // pred_check_branch
        %259 = sbr.rel (%p256) target = $region12
      $region11: #{multvae_forward.2} parent=5 // pred_region
        %s260 = ssub.s32 %s26, 1
        // Predicated region
        $region13: #{multvae_forward.2} parent=11 // pred_check
          %p261 = pneg %p99
        $region14: #{multvae_forward.2} parent=11 // pred_check_branch
          %263 = sbr.rel (%p261) target = $region16
        $region15: #{multvae_forward.2} parent=11 // pred_region
          _
        $region16: #{multvae_forward.2} parent=11 // pred_fallthru
          _
        // Predicated region
        $region17: #{multvae_forward.2} parent=11 // pred_check
          %p264 = pneg %p120
        $region18: #{multvae_forward.2} parent=11 // pred_check_branch
          %266 = sbr.rel (%p264) target = $region20
        $region19: #{multvae_forward.2} parent=11 // pred_region
          %s268 = ssub.s32 8192, 8192
          %269 = vsyncadd [#allocation10], %s268
          %s270 = sshll.u32 [#allocation11], 4
          %s271 = int_to_ptr.vmem [resolvable:$true] %s270
          %276 = dma.hbm_to_vmem [thread:$0]  %s4, 8192, %s271, [#allocation10], 256, 256, 16
        $region20: #{multvae_forward.2} parent=11 // pred_fallthru
          _
        // Predicated region
        $region21: #{multvae_forward.2} parent=11 // pred_check
          %p277 = pneg %p141
        $region22: #{multvae_forward.2} parent=11 // pred_check_branch
          %279 = sbr.rel (%p277) target = $region24
        $region23: #{multvae_forward.2} parent=11 // pred_region
          _
        $region24: #{multvae_forward.2} parent=11 // pred_fallthru
          _
        // Predicated region
        $region25: #{multvae_forward.2} parent=11 // pred_check
          %p280 = pneg %p162
        $region26: #{multvae_forward.2} parent=11 // pred_check_branch
          %282 = sbr.rel (%p280) target = $region28
        $region27: #{multvae_forward.2} parent=11 // pred_region
          %s284 = ssub.s32 2048, 2048
          %285 = vsyncadd [#allocation13], %s284
          %s286 = sshll.u32 [#allocation12], 4
          %s287 = int_to_ptr.vmem [resolvable:$true] %s286
          %292 = dma.hbm_to_vmem [thread:$0]  %s6, 2048, %s287, [#allocation13], 128, 128, 8
        $region28: #{multvae_forward.2} parent=11 // pred_fallthru
          _
        // Predicated region
        $region29: #{multvae_forward.2} parent=11 // pred_check
          %p293 = pneg %p183
        $region30: #{multvae_forward.2} parent=11 // pred_check_branch
          %295 = sbr.rel (%p293) target = $region32
        $region31: #{multvae_forward.2} parent=11 // pred_region
          %s297 = ssub.s32 4096, 4096
          %298 = vsyncadd [#allocation13], %s297
          %s299 = sshll.u32 [#allocation14], 4
          %s300 = int_to_ptr.vmem [resolvable:$true] %s299
          %305 = dma.hbm_to_vmem [thread:$0]  %s7, 4096, %s300, [#allocation13], 256, 256, 16
        $region32: #{multvae_forward.2} parent=11 // pred_fallthru
          _
        // Predicated region
        $region33: #{multvae_forward.2} parent=11 // pred_check
          %p306 = pneg %p204
        $region34: #{multvae_forward.2} parent=11 // pred_check_branch
          %308 = sbr.rel (%p306) target = $region36
        $region35: #{multvae_forward.2} parent=11 // pred_region
          _
        $region36: #{multvae_forward.2} parent=11 // pred_fallthru
          _
      $region12: #{multvae_forward.2} parent=5 // pred_fallthru
        _
      %p309 = scmp.lt.s32.totalorder %s26, 4
      // Predicated region
      $region37: #{multvae_forward.2} parent=5 // pred_check
        %p310 = pneg %p309
      $region38: #{multvae_forward.2} parent=5 // pred_check_branch
        %312 = sbr.rel (%p310) target = $region40
      $region39: #{multvae_forward.2} parent=5 // pred_region
        // Predicated region
        $region41: #{multvae_forward.2} parent=39 // pred_check
          %p313 = pneg %p46
        $region42: #{multvae_forward.2} parent=39 // pred_check_branch
          %315 = sbr.rel (%p313) target = $region44
        $region43: #{multvae_forward.2} parent=39 // pred_region
          %s316 = sand.u32 %s36, 1
          %s317 = scalar_lea.sflag [#allocation7], %s316
          %s318 = sand.u32 %s36, 1
          %s319 = smul.addr %s318, 256
          %s320 = scalar_lea.vmem [#allocation6], %s319
          %s321 = smul.u32 2, %s26
          %s323 = ssub.s32 4096, 4096
          %324 = vsyncadd %s317, %s323
          %s325 = smul.addr %s321, 128
          %s326 = scalar_lea.hbm %s1, %s325
          %s327 = sshll.u32 %s320, 4
          %s328 = int_to_ptr.vmem [resolvable:$true] %s327
          %333 = dma.hbm_to_vmem [thread:$0]  %s326, 4096, %s328, %s317, 1024, 256, 16
        $region44: #{multvae_forward.2} parent=39 // pred_fallthru
          _
        // Predicated region
        $region45: #{multvae_forward.2} parent=39 // pred_check
          %p334 = pneg %p72
        $region46: #{multvae_forward.2} parent=39 // pred_check_branch
          %336 = sbr.rel (%p334) target = $region48
        $region47: #{multvae_forward.2} parent=39 // pred_region
          %s337 = sand.u32 %s26, 1
          %s338 = scalar_lea.sflag [#allocation10], %s337
          %s339 = sand.u32 %s62, 1
          %s340 = smul.addr %s339, 256
          %s341 = scalar_lea.vmem [#allocation9], %s340
          %s342 = smul.u32 32, %s26
          %s344 = ssub.s32 4096, 4096
          %345 = vsyncadd %s338, %s344
          %s346 = smul.addr %s342, 2
          %s347 = smul.addr %s346, 64
          %s348 = scalar_lea.hbm %s2, %s347
          %s349 = sshll.u32 %s341, 4
          %s350 = int_to_ptr.vmem [resolvable:$true] %s349
          %355 = dma.hbm_to_vmem [thread:$0]  %s348, 4096, %s350, %s338, 128, 128, 8
        $region48: #{multvae_forward.2} parent=39 // pred_fallthru
          _
      $region40: #{multvae_forward.2} parent=5 // pred_fallthru
        _
      %p356 = scmp.le.s32.totalorder 1, %s26
      %p357 = scmp.lt.s32.totalorder %s26, 5
      %p358 = pnand %p356, %p357
      %p359 = pneg %p358
      // Predicated region
      $region49: #{multvae_forward.2} parent=5 // pred_check
        _
      $region50: #{multvae_forward.2} parent=5 // pred_check_branch
        %361 = sbr.rel (%p358) target = $region52
      $region51: #{multvae_forward.2} parent=5 // pred_region
        %s362 = ssub.s32 %s26, 1
        %s363 = sand.u32 %s39, 1
        %s364 = scalar_lea.sflag [#allocation7], %s363
        %s365 = sand.u32 %s39, 1
        %s366 = smul.addr %s365, 256
        %s367 = scalar_lea.vmem [#allocation6], %s366
        // Predicated region
        $region53: #{multvae_forward.2} parent=51 // pred_check
          %p368 = pneg %p52
        $region54: #{multvae_forward.2} parent=51 // pred_check_branch
          %370 = sbr.rel (%p368) target = $region56
        $region55: #{multvae_forward.2} parent=51 // pred_region
          %371 = dma.done %s364, 4096
        $region56: #{multvae_forward.2} parent=51 // pred_fallthru
          _
        %s372 = sand.u32 %s31, 1
        %s373 = scalar_lea.sflag [#allocation10], %s372
        %s374 = sand.u32 %s65, 1
        %s375 = smul.addr %s374, 256
        %s376 = scalar_lea.vmem [#allocation9], %s375
        // Predicated region
        $region57: #{multvae_forward.2} parent=51 // pred_check
          %p377 = pneg %p78
        $region58: #{multvae_forward.2} parent=51 // pred_check_branch
          %379 = sbr.rel (%p377) target = $region60
        $region59: #{multvae_forward.2} parent=51 // pred_region
          %380 = dma.done %s373, 4096
        $region60: #{multvae_forward.2} parent=51 // pred_fallthru
          _
        // Predicated region
        $region61: #{multvae_forward.2} parent=51 // pred_check
          %p381 = pneg %p120
        $region62: #{multvae_forward.2} parent=51 // pred_check_branch
          %383 = sbr.rel (%p381) target = $region64
        $region63: #{multvae_forward.2} parent=51 // pred_region
          %384 = dma.done [#allocation10], 8192
        $region64: #{multvae_forward.2} parent=51 // pred_fallthru
          _
        // Predicated region
        $region65: #{multvae_forward.2} parent=51 // pred_check
          %p385 = pneg %p162
        $region66: #{multvae_forward.2} parent=51 // pred_check_branch
          %387 = sbr.rel (%p385) target = $region68
        $region67: #{multvae_forward.2} parent=51 // pred_region
          %388 = dma.done [#allocation13], 2048
        $region68: #{multvae_forward.2} parent=51 // pred_fallthru
          _
        // Predicated region
        $region69: #{multvae_forward.2} parent=51 // pred_check
          %p389 = pneg %p183
        $region70: #{multvae_forward.2} parent=51 // pred_check_branch
          %391 = sbr.rel (%p389) target = $region72
        $region71: #{multvae_forward.2} parent=51 // pred_region
          %392 = dma.done [#allocation13], 4096
        $region72: #{multvae_forward.2} parent=51 // pred_fallthru
          _
        %s393 = sand.u32 %s39, 1
        %s394 = scalar_lea.sflag [#allocation7], %s393
        %s395 = sand.u32 %s39, 1
        %s396 = smul.addr %s395, 256
        %s397 = scalar_lea.vmem [#allocation6], %s396
        %p398 = pneg %p52
        %p399 = pneg %p49
        %s400 = sand.u32 %s31, 1
        %s401 = scalar_lea.sflag [#allocation10], %s400
        %s402 = sand.u32 %s65, 1
        %s403 = smul.addr %s402, 256
        %s404 = scalar_lea.vmem [#allocation9], %s403
        %p405 = pneg %p78
        %p406 = pneg %p75
        %p407 = pneg %p99
        %p408 = pneg %p96
        %p409 = pneg %p120
        %p410 = pneg %p117
        %p411 = pneg %p141
        %p412 = pneg %p138
        %p413 = pneg %p162
        %p414 = pneg %p159
        %p415 = pneg %p183
        %p416 = pneg %p180
        %p417 = pneg %p204
        %p418 = pneg %p201
        %p419 = pneg %p225
        %p420 = pneg %p222
        %p421 = pneg %p246
        %p422 = pneg %p243
        %s423 = smul.u32 2, %s31
        %s424 = smul.u32 32, %s31
        %p425 = scmp.eq.s32.totalorder %s31, 0
        // Predicated region
        $region73: #{multvae_forward.2} parent=51 // pred_check
          %p426 = pneg %p425
        $region74: #{multvae_forward.2} parent=51 // pred_check_branch
          %428 = sbr.rel (%p426) target = $region76
        $region75: #{multvae_forward.2} parent=51 // pred_region
          %429 = vst [vmem:[#allocation2] sm:$0xff] 0.0
          %430 = vst [vmem:[#allocation2 + $0x8] sm:$0xff] 0.0
          %431 = vst [vmem:[#allocation2 + $0x10] sm:$0xff] 0.0
          %432 = vst [vmem:[#allocation2 + $0x18] sm:$0xff] 0.0
          %433 = vst [vmem:[#allocation2 + $0x20] sm:$0xff] 0.0
          %434 = vst [vmem:[#allocation2 + $0x28] sm:$0xff] 0.0
          %435 = vst [vmem:[#allocation2 + $0x30] sm:$0xff] 0.0
          %436 = vst [vmem:[#allocation2 + $0x38] sm:$0xff] 0.0
          %437 = vst [vmem:[#allocation2 + $0x40] sm:$0xff] 0.0
          %438 = vst [vmem:[#allocation2 + $0x48] sm:$0xff] 0.0
          %439 = vst [vmem:[#allocation2 + $0x50] sm:$0xff] 0.0
          %440 = vst [vmem:[#allocation2 + $0x58] sm:$0xff] 0.0
          %441 = vst [vmem:[#allocation2 + $0x60] sm:$0xff] 0.0
          %442 = vst [vmem:[#allocation2 + $0x68] sm:$0xff] 0.0
          %443 = vst [vmem:[#allocation2 + $0x70] sm:$0xff] 0.0
          %444 = vst [vmem:[#allocation2 + $0x78] sm:$0xff] 0.0
          %445 = vst [vmem:[#allocation2 + $0x80] sm:$0xff] 0.0
          %446 = vst [vmem:[#allocation2 + $0x88] sm:$0xff] 0.0
          %447 = vst [vmem:[#allocation2 + $0x90] sm:$0xff] 0.0
          %448 = vst [vmem:[#allocation2 + $0x98] sm:$0xff] 0.0
          %449 = vst [vmem:[#allocation2 + $0xa0] sm:$0xff] 0.0
          %450 = vst [vmem:[#allocation2 + $0xa8] sm:$0xff] 0.0
          %451 = vst [vmem:[#allocation2 + $0xb0] sm:$0xff] 0.0
          %452 = vst [vmem:[#allocation2 + $0xb8] sm:$0xff] 0.0
          %453 = vst [vmem:[#allocation2 + $0xc0] sm:$0xff] 0.0
          %454 = vst [vmem:[#allocation2 + $0xc8] sm:$0xff] 0.0
          %455 = vst [vmem:[#allocation2 + $0xd0] sm:$0xff] 0.0
          %456 = vst [vmem:[#allocation2 + $0xd8] sm:$0xff] 0.0
          %457 = vst [vmem:[#allocation2 + $0xe0] sm:$0xff] 0.0
          %458 = vst [vmem:[#allocation2 + $0xe8] sm:$0xff] 0.0
          %459 = vst [vmem:[#allocation2 + $0xf0] sm:$0xff] 0.0
          %460 = vst [vmem:[#allocation2 + $0xf8] sm:$0xff] 0.0
          %vm461 = vcmask 7168
          %462 = vst.msk [vmem:[#allocation3] sm:$0xff] %vm461, 0.0
          %463 = vst.msk [vmem:[#allocation3 + $0x8] sm:$0xff] %vm461, 0.0
          %464 = vst.msk [vmem:[#allocation3 + $0x10] sm:$0xff] %vm461, 0.0
          %465 = vst.msk [vmem:[#allocation3 + $0x18] sm:$0xff] %vm461, 0.0
          %466 = vst.msk [vmem:[#allocation3 + $0x20] sm:$0xff] %vm461, 0.0
          %467 = vst.msk [vmem:[#allocation3 + $0x28] sm:$0xff] %vm461, 0.0
          %468 = vst.msk [vmem:[#allocation3 + $0x30] sm:$0xff] %vm461, 0.0
          %469 = vst.msk [vmem:[#allocation3 + $0x38] sm:$0xff] %vm461, 0.0
          %470 = vst.msk [vmem:[#allocation3 + $0x40] sm:$0xff] %vm461, 0.0
          %471 = vst.msk [vmem:[#allocation3 + $0x48] sm:$0xff] %vm461, 0.0
          %472 = vst.msk [vmem:[#allocation3 + $0x50] sm:$0xff] %vm461, 0.0
          %473 = vst.msk [vmem:[#allocation3 + $0x58] sm:$0xff] %vm461, 0.0
          %474 = vst.msk [vmem:[#allocation3 + $0x60] sm:$0xff] %vm461, 0.0
          %475 = vst.msk [vmem:[#allocation3 + $0x68] sm:$0xff] %vm461, 0.0
          %476 = vst.msk [vmem:[#allocation3 + $0x70] sm:$0xff] %vm461, 0.0
          %477 = vst.msk [vmem:[#allocation3 + $0x78] sm:$0xff] %vm461, 0.0
        $region76: #{multvae_forward.2} parent=51 // pred_fallthru
          _
        %v478 = vld [vmem:[%s367] sm:$0xff]
        %v479 = vld [vmem:[%s367 + $0x8] sm:$0xff]
        %v480 = vld [vmem:[%s367 + $0x10] sm:$0xff]
        %v481 = vld [vmem:[%s367 + $0x18] sm:$0xff]
        %v482 = vld [vmem:[%s367 + $0x20] sm:$0xff]
        %v483 = vld [vmem:[%s367 + $0x28] sm:$0xff]
        %v484 = vld [vmem:[%s367 + $0x30] sm:$0xff]
        %v485 = vld [vmem:[%s367 + $0x38] sm:$0xff]
        %v486 = vld [vmem:[%s367 + $0x40] sm:$0xff]
        %v487 = vld [vmem:[%s367 + $0x48] sm:$0xff]
        %v488 = vld [vmem:[%s367 + $0x50] sm:$0xff]
        %v489 = vld [vmem:[%s367 + $0x58] sm:$0xff]
        %v490 = vld [vmem:[%s367 + $0x60] sm:$0xff]
        %v491 = vld [vmem:[%s367 + $0x68] sm:$0xff]
        %v492 = vld [vmem:[%s367 + $0x70] sm:$0xff]
        %v493 = vld [vmem:[%s367 + $0x78] sm:$0xff]
        %v494 = vld [vmem:[%s367 + $0x80] sm:$0xff]
        %v495 = vld [vmem:[%s367 + $0x88] sm:$0xff]
        %v496 = vld [vmem:[%s367 + $0x90] sm:$0xff]
        %v497 = vld [vmem:[%s367 + $0x98] sm:$0xff]
        %v498 = vld [vmem:[%s367 + $0xa0] sm:$0xff]
        %v499 = vld [vmem:[%s367 + $0xa8] sm:$0xff]
        %v500 = vld [vmem:[%s367 + $0xb0] sm:$0xff]
        %v501 = vld [vmem:[%s367 + $0xb8] sm:$0xff]
        %v502 = vld [vmem:[%s367 + $0xc0] sm:$0xff]
        %v503 = vld [vmem:[%s367 + $0xc8] sm:$0xff]
        %v504 = vld [vmem:[%s367 + $0xd0] sm:$0xff]
        %v505 = vld [vmem:[%s367 + $0xd8] sm:$0xff]
        %v506 = vld [vmem:[%s367 + $0xe0] sm:$0xff]
        %v507 = vld [vmem:[%s367 + $0xe8] sm:$0xff]
        %v508 = vld [vmem:[%s367 + $0xf0] sm:$0xff]
        %v509 = vld [vmem:[%s367 + $0xf8] sm:$0xff]
        %v510 = vld [vmem:[#allocation3] sm:$0xff]
        %v511 = vld [vmem:[#allocation3 + $0x8] sm:$0xff]
        %v512 = vld [vmem:[#allocation3 + $0x10] sm:$0xff]
        %v513 = vld [vmem:[#allocation3 + $0x18] sm:$0xff]
        %v514 = vld [vmem:[#allocation3 + $0x20] sm:$0xff]
        %v515 = vld [vmem:[#allocation3 + $0x28] sm:$0xff]
        %v516 = vld [vmem:[#allocation3 + $0x30] sm:$0xff]
        %v517 = vld [vmem:[#allocation3 + $0x38] sm:$0xff]
        %v518 = vld [vmem:[#allocation3 + $0x40] sm:$0xff]
        %v519 = vld [vmem:[#allocation3 + $0x48] sm:$0xff]
        %v520 = vld [vmem:[#allocation3 + $0x50] sm:$0xff]
        %v521 = vld [vmem:[#allocation3 + $0x58] sm:$0xff]
        %v522 = vld [vmem:[#allocation3 + $0x60] sm:$0xff]
        %v523 = vld [vmem:[#allocation3 + $0x68] sm:$0xff]
        %v524 = vld [vmem:[#allocation3 + $0x70] sm:$0xff]
        %v525 = vld [vmem:[#allocation3 + $0x78] sm:$0xff]
        %v526 = vmul.f32 %v478, %v478
        %v527 = vmul.f32 %v479, %v479
        %v528 = vmul.f32 %v480, %v480
        %v529 = vmul.f32 %v481, %v481
        %v530 = vmul.f32 %v482, %v482
        %v531 = vmul.f32 %v483, %v483
        %v532 = vmul.f32 %v484, %v484
        %v533 = vmul.f32 %v485, %v485
        %v534 = vmul.f32 %v486, %v486
        %v535 = vmul.f32 %v487, %v487
        %v536 = vmul.f32 %v488, %v488
        %v537 = vmul.f32 %v489, %v489
        %v538 = vmul.f32 %v490, %v490
        %v539 = vmul.f32 %v491, %v491
        %v540 = vmul.f32 %v492, %v492
        %v541 = vmul.f32 %v493, %v493
        %v542 = vmul.f32 %v494, %v494
        %v543 = vmul.f32 %v495, %v495
        %v544 = vmul.f32 %v496, %v496
        %v545 = vmul.f32 %v497, %v497
        %v546 = vmul.f32 %v498, %v498
        %v547 = vmul.f32 %v499, %v499
        %v548 = vmul.f32 %v500, %v500
        %v549 = vmul.f32 %v501, %v501
        %v550 = vmul.f32 %v502, %v502
        %v551 = vmul.f32 %v503, %v503
        %v552 = vmul.f32 %v504, %v504
        %v553 = vmul.f32 %v505, %v505
        %v554 = vmul.f32 %v506, %v506
        %v555 = vmul.f32 %v507, %v507
        %v556 = vmul.f32 %v508, %v508
        %v557 = vmul.f32 %v509, %v509
        %v558 = vadd.f32 %v526, %v527
        %559 = vadd.xlane.f32.xlu0 %v558
        %v560 = vpop.xlane.xlu0 %559
        %v561 = vadd.f32 %v528, %v529
        %562 = vadd.xlane.f32.xlu0 %v561
        %v563 = vpop.xlane.xlu0 %562
        %v564 = vadd.f32 %v530, %v531
        %565 = vadd.xlane.f32.xlu0 %v564
        %v566 = vpop.xlane.xlu0 %565
        %v567 = vadd.f32 %v532, %v533
        %568 = vadd.xlane.f32.xlu0 %v567
        %v569 = vpop.xlane.xlu0 %568
        %v570 = vadd.f32 %v534, %v535
        %571 = vadd.xlane.f32.xlu0 %v570
        %v572 = vpop.xlane.xlu0 %571
        %v573 = vadd.f32 %v536, %v537
        %574 = vadd.xlane.f32.xlu0 %v573
        %v575 = vpop.xlane.xlu0 %574
        %v576 = vadd.f32 %v538, %v539
        %577 = vadd.xlane.f32.xlu0 %v576
        %v578 = vpop.xlane.xlu0 %577
        %v579 = vadd.f32 %v540, %v541
        %580 = vadd.xlane.f32.xlu0 %v579
        %v581 = vpop.xlane.xlu0 %580
        %v582 = vadd.f32 %v542, %v543
        %583 = vadd.xlane.f32.xlu0 %v582
        %v584 = vpop.xlane.xlu0 %583
        %v585 = vadd.f32 %v544, %v545
        %586 = vadd.xlane.f32.xlu0 %v585
        %v587 = vpop.xlane.xlu0 %586
        %v588 = vadd.f32 %v546, %v547
        %589 = vadd.xlane.f32.xlu0 %v588
        %v590 = vpop.xlane.xlu0 %589
        %v591 = vadd.f32 %v548, %v549
        %592 = vadd.xlane.f32.xlu0 %v591
        %v593 = vpop.xlane.xlu0 %592
        %v594 = vadd.f32 %v550, %v551
        %595 = vadd.xlane.f32.xlu0 %v594
        %v596 = vpop.xlane.xlu0 %595
        %v597 = vadd.f32 %v552, %v553
        %598 = vadd.xlane.f32.xlu0 %v597
        %v599 = vpop.xlane.xlu0 %598
        %v600 = vadd.f32 %v554, %v555
        %601 = vadd.xlane.f32.xlu0 %v600
        %v602 = vpop.xlane.xlu0 %601
        %v603 = vadd.f32 %v556, %v557
        %604 = vadd.xlane.f32.xlu0 %v603
        %v605 = vpop.xlane.xlu0 %604
        %v606 = vadd.f32 %v510, %v560
        %v607 = vadd.f32 %v511, %v563
        %v608 = vadd.f32 %v512, %v566
        %v609 = vadd.f32 %v513, %v569
        %v610 = vadd.f32 %v514, %v572
        %v611 = vadd.f32 %v515, %v575
        %v612 = vadd.f32 %v516, %v578
        %v613 = vadd.f32 %v517, %v581
        %v614 = vadd.f32 %v518, %v584
        %v615 = vadd.f32 %v519, %v587
        %v616 = vadd.f32 %v520, %v590
        %v617 = vadd.f32 %v521, %v593
        %v618 = vadd.f32 %v522, %v596
        %v619 = vadd.f32 %v523, %v599
        %v620 = vadd.f32 %v524, %v602
        %v621 = vadd.f32 %v525, %v605
        %vm622 = vcmask 7168
        %623 = vst.msk [vmem:[#allocation3] sm:$0xff] %vm622, %v606
        %624 = vst.msk [vmem:[#allocation3 + $0x8] sm:$0xff] %vm622, %v607
        %625 = vst.msk [vmem:[#allocation3 + $0x10] sm:$0xff] %vm622, %v608
        %626 = vst.msk [vmem:[#allocation3 + $0x18] sm:$0xff] %vm622, %v609
        %627 = vst.msk [vmem:[#allocation3 + $0x20] sm:$0xff] %vm622, %v610
        %628 = vst.msk [vmem:[#allocation3 + $0x28] sm:$0xff] %vm622, %v611
        %629 = vst.msk [vmem:[#allocation3 + $0x30] sm:$0xff] %vm622, %v612
        %630 = vst.msk [vmem:[#allocation3 + $0x38] sm:$0xff] %vm622, %v613
        %631 = vst.msk [vmem:[#allocation3 + $0x40] sm:$0xff] %vm622, %v614
        %632 = vst.msk [vmem:[#allocation3 + $0x48] sm:$0xff] %vm622, %v615
        %633 = vst.msk [vmem:[#allocation3 + $0x50] sm:$0xff] %vm622, %v616
        %634 = vst.msk [vmem:[#allocation3 + $0x58] sm:$0xff] %vm622, %v617
        %635 = vst.msk [vmem:[#allocation3 + $0x60] sm:$0xff] %vm622, %v618
        %636 = vst.msk [vmem:[#allocation3 + $0x68] sm:$0xff] %vm622, %v619
        %637 = vst.msk [vmem:[#allocation3 + $0x70] sm:$0xff] %vm622, %v620
        %638 = vst.msk [vmem:[#allocation3 + $0x78] sm:$0xff] %vm622, %v621
        %v639 = vpack.c.bf16 %v480, %v478
        %v640 = vpack.c.bf16 %v481, %v479
        %v641 = vpack.c.bf16 %v484, %v482
        %v642 = vpack.c.bf16 %v485, %v483
        %v643 = vpack.c.bf16 %v488, %v486
        %v644 = vpack.c.bf16 %v489, %v487
        %v645 = vpack.c.bf16 %v492, %v490
        %v646 = vpack.c.bf16 %v493, %v491
        %v647 = vpack.c.bf16 %v496, %v494
        %v648 = vpack.c.bf16 %v497, %v495
        %v649 = vpack.c.bf16 %v500, %v498
        %v650 = vpack.c.bf16 %v501, %v499
        %v651 = vpack.c.bf16 %v504, %v502
        %v652 = vpack.c.bf16 %v505, %v503
        %v653 = vpack.c.bf16 %v508, %v506
        %v654 = vpack.c.bf16 %v509, %v507
        %v655 = vld [vmem:[#allocation2] sm:$0xff]
        %v656 = vld [vmem:[#allocation2 + $0x8] sm:$0xff]
        %v657 = vld [vmem:[#allocation2 + $0x10] sm:$0xff]
        %v658 = vld [vmem:[#allocation2 + $0x18] sm:$0xff]
        %v659 = vld [vmem:[#allocation2 + $0x20] sm:$0xff]
        %v660 = vld [vmem:[#allocation2 + $0x28] sm:$0xff]
        %v661 = vld [vmem:[#allocation2 + $0x30] sm:$0xff]
        %v662 = vld [vmem:[#allocation2 + $0x38] sm:$0xff]
        %v663 = vld [vmem:[#allocation2 + $0x40] sm:$0xff]
        %v664 = vld [vmem:[#allocation2 + $0x48] sm:$0xff]
        %v665 = vld [vmem:[#allocation2 + $0x50] sm:$0xff]
        %v666 = vld [vmem:[#allocation2 + $0x58] sm:$0xff]
        %v667 = vld [vmem:[#allocation2 + $0x60] sm:$0xff]
        %v668 = vld [vmem:[#allocation2 + $0x68] sm:$0xff]
        %v669 = vld [vmem:[#allocation2 + $0x70] sm:$0xff]
        %v670 = vld [vmem:[#allocation2 + $0x78] sm:$0xff]
        %v671 = vld [vmem:[#allocation2 + $0x80] sm:$0xff]
        %v672 = vld [vmem:[#allocation2 + $0x88] sm:$0xff]
        %v673 = vld [vmem:[#allocation2 + $0x90] sm:$0xff]
        %v674 = vld [vmem:[#allocation2 + $0x98] sm:$0xff]
        %v675 = vld [vmem:[#allocation2 + $0xa0] sm:$0xff]
        %v676 = vld [vmem:[#allocation2 + $0xa8] sm:$0xff]
        %v677 = vld [vmem:[#allocation2 + $0xb0] sm:$0xff]
        %v678 = vld [vmem:[#allocation2 + $0xb8] sm:$0xff]
        %v679 = vld [vmem:[#allocation2 + $0xc0] sm:$0xff]
        %v680 = vld [vmem:[#allocation2 + $0xc8] sm:$0xff]
        %v681 = vld [vmem:[#allocation2 + $0xd0] sm:$0xff]
        %v682 = vld [vmem:[#allocation2 + $0xd8] sm:$0xff]
        %v683 = vld [vmem:[#allocation2 + $0xe0] sm:$0xff]
        %v684 = vld [vmem:[#allocation2 + $0xe8] sm:$0xff]
        %v685 = vld [vmem:[#allocation2 + $0xf0] sm:$0xff]
        %v686 = vld [vmem:[#allocation2 + $0xf8] sm:$0xff]
        %v687 = vld [vmem:[%s376] sm:$0xff]
        %v688 = vld [vmem:[%s376 + $0x8] sm:$0xff]
        %v689 = vld [vmem:[%s376 + $0x10] sm:$0xff]
        %v690 = vld [vmem:[%s376 + $0x18] sm:$0xff]
        %v691 = vld [vmem:[%s376 + $0x20] sm:$0xff]
        %v692 = vld [vmem:[%s376 + $0x28] sm:$0xff]
        %v693 = vld [vmem:[%s376 + $0x30] sm:$0xff]
        %v694 = vld [vmem:[%s376 + $0x38] sm:$0xff]
        %v695 = vld [vmem:[%s376 + $0x40] sm:$0xff]
        %v696 = vld [vmem:[%s376 + $0x48] sm:$0xff]
        %v697 = vld [vmem:[%s376 + $0x50] sm:$0xff]
        %v698 = vld [vmem:[%s376 + $0x58] sm:$0xff]
        %v699 = vld [vmem:[%s376 + $0x60] sm:$0xff]
        %v700 = vld [vmem:[%s376 + $0x68] sm:$0xff]
        %v701 = vld [vmem:[%s376 + $0x70] sm:$0xff]
        %v702 = vld [vmem:[%s376 + $0x78] sm:$0xff]
        %v703 = vld [vmem:[%s376 + $0x80] sm:$0xff]
        %v704 = vld [vmem:[%s376 + $0x88] sm:$0xff]
        %v705 = vld [vmem:[%s376 + $0x90] sm:$0xff]
        %v706 = vld [vmem:[%s376 + $0x98] sm:$0xff]
        %v707 = vld [vmem:[%s376 + $0xa0] sm:$0xff]
        %v708 = vld [vmem:[%s376 + $0xa8] sm:$0xff]
        %v709 = vld [vmem:[%s376 + $0xb0] sm:$0xff]
        %v710 = vld [vmem:[%s376 + $0xb8] sm:$0xff]
        %v711 = vld [vmem:[%s376 + $0xc0] sm:$0xff]
        %v712 = vld [vmem:[%s376 + $0xc8] sm:$0xff]
        %v713 = vld [vmem:[%s376 + $0xd0] sm:$0xff]
        %v714 = vld [vmem:[%s376 + $0xd8] sm:$0xff]
        %v715 = vld [vmem:[%s376 + $0xe0] sm:$0xff]
        %v716 = vld [vmem:[%s376 + $0xe8] sm:$0xff]
        %v717 = vld [vmem:[%s376 + $0xf0] sm:$0xff]
        %v718 = vld [vmem:[%s376 + $0xf8] sm:$0xff]
        %v751 = vunpack.c.l.b16 %v687
        %v752 = vunpack.c.h.b16 %v687
        %v753 = vunpack.c.l.b16 %v688
        %v754 = vunpack.c.h.b16 %v688
        %v755 = vunpack.c.l.b16 %v689
        %v756 = vunpack.c.h.b16 %v689
        %v757 = vunpack.c.l.b16 %v690
        %v758 = vunpack.c.h.b16 %v690
        %v759 = vunpack.c.l.b16 %v691
        %v760 = vunpack.c.h.b16 %v691
        %v761 = vunpack.c.l.b16 %v692
        %v762 = vunpack.c.h.b16 %v692
        %v763 = vunpack.c.l.b16 %v693
        %v764 = vunpack.c.h.b16 %v693
        %v765 = vunpack.c.l.b16 %v694
        %v766 = vunpack.c.h.b16 %v694
        %v767 = vunpack.c.l.b16 %v695
        %v768 = vunpack.c.h.b16 %v695
        %v769 = vunpack.c.l.b16 %v696
        %v770 = vunpack.c.h.b16 %v696
        %v771 = vunpack.c.l.b16 %v697
        %v772 = vunpack.c.h.b16 %v697
        %v773 = vunpack.c.l.b16 %v698
        %v774 = vunpack.c.h.b16 %v698
        %v775 = vunpack.c.l.b16 %v699
        %v776 = vunpack.c.h.b16 %v699
        %v777 = vunpack.c.l.b16 %v700
        %v778 = vunpack.c.h.b16 %v700
        %v779 = vunpack.c.l.b16 %v701
        %v780 = vunpack.c.h.b16 %v701
        %v781 = vunpack.c.l.b16 %v702
        %v782 = vunpack.c.h.b16 %v702
        %v783 = vunpack.c.l.b16 %v703
        %v784 = vunpack.c.h.b16 %v703
        %v785 = vunpack.c.l.b16 %v704
        %v786 = vunpack.c.h.b16 %v704
        %v787 = vunpack.c.l.b16 %v705
        %v788 = vunpack.c.h.b16 %v705
        %v789 = vunpack.c.l.b16 %v706
        %v790 = vunpack.c.h.b16 %v706
        %v791 = vunpack.c.l.b16 %v707
        %v792 = vunpack.c.h.b16 %v707
        %v793 = vunpack.c.l.b16 %v708
        %v794 = vunpack.c.h.b16 %v708
        %v795 = vunpack.c.l.b16 %v709
        %v796 = vunpack.c.h.b16 %v709
        %v797 = vunpack.c.l.b16 %v710
        %v798 = vunpack.c.h.b16 %v710
        %v799 = vunpack.c.l.b16 %v711
        %v800 = vunpack.c.h.b16 %v711
        %v801 = vunpack.c.l.b16 %v712
        %v802 = vunpack.c.h.b16 %v712
        %v803 = vunpack.c.l.b16 %v713
        %v804 = vunpack.c.h.b16 %v713
        %v805 = vunpack.c.l.b16 %v714
        %v806 = vunpack.c.h.b16 %v714
        %v807 = vunpack.c.l.b16 %v715
        %v808 = vunpack.c.h.b16 %v715
        %v809 = vunpack.c.l.b16 %v716
        %v810 = vunpack.c.h.b16 %v716
        %v811 = vunpack.c.l.b16 %v717
        %v812 = vunpack.c.h.b16 %v717
        %v813 = vunpack.c.l.b16 %v718
        %v814 = vunpack.c.h.b16 %v718
        %v815 = vpack.c.b16 %v753, %v751
        %v816 = vpack.c.b16 %v754, %v752
        %v817 = vpack.c.b16 %v757, %v755
        %v818 = vpack.c.b16 %v758, %v756
        %v819 = vpack.c.b16 %v761, %v759
        %v820 = vpack.c.b16 %v762, %v760
        %v821 = vpack.c.b16 %v765, %v763
        %v822 = vpack.c.b16 %v766, %v764
        %v823 = vpack.c.b16 %v769, %v767
        %v824 = vpack.c.b16 %v770, %v768
        %v825 = vpack.c.b16 %v773, %v771
        %v826 = vpack.c.b16 %v774, %v772
        %v827 = vpack.c.b16 %v777, %v775
        %v828 = vpack.c.b16 %v778, %v776
        %v829 = vpack.c.b16 %v781, %v779
        %v830 = vpack.c.b16 %v782, %v780
        %v831 = vpack.c.b16 %v785, %v783
        %v832 = vpack.c.b16 %v786, %v784
        %v833 = vpack.c.b16 %v789, %v787
        %v834 = vpack.c.b16 %v790, %v788
        %v835 = vpack.c.b16 %v793, %v791
        %v836 = vpack.c.b16 %v794, %v792
        %v837 = vpack.c.b16 %v797, %v795
        %v838 = vpack.c.b16 %v798, %v796
        %v839 = vpack.c.b16 %v801, %v799
        %v840 = vpack.c.b16 %v802, %v800
        %v841 = vpack.c.b16 %v805, %v803
        %v842 = vpack.c.b16 %v806, %v804
        %v843 = vpack.c.b16 %v809, %v807
        %v844 = vpack.c.b16 %v810, %v808
        %v845 = vpack.c.b16 %v813, %v811
        %v846 = vpack.c.b16 %v814, %v812
        %879 = vmatprep.subr.bf16.mxu0 %v816
        %880 = vmatpush1.bf16.msra.mxu0 %v815
        %881 = vmatprep.subr.bf16.mxu0 %v818
        %882 = vmatpush1.bf16.msra.mxu0 %v817
        %883 = vmatprep.subr.bf16.mxu0 %v820
        %884 = vmatpush1.bf16.msra.mxu0 %v819
        %885 = vmatprep.subr.bf16.mxu0 %v822
        %886 = vmatpush1.bf16.msra.mxu0 %v821
        %887 = vmatprep.subr.bf16.mxu0 %v824
        %888 = vmatpush1.bf16.msra.mxu0 %v823
        %889 = vmatprep.subr.bf16.mxu0 %v826
        %890 = vmatpush1.bf16.msra.mxu0 %v825
        %891 = vmatprep.subr.bf16.mxu0 %v828
        %892 = vmatpush1.bf16.msra.mxu0 %v827
        %893 = vmatprep.subr.bf16.mxu0 %v830
        %894 = vmatpush1.bf16.msra.mxu0 %v829
        %895 = vmatprep.subr.bf16.mxu0 %v832
        %896 = vmatpush1.bf16.msra.mxu0 %v831
        %897 = vmatprep.subr.bf16.mxu0 %v834
        %898 = vmatpush1.bf16.msra.mxu0 %v833
        %899 = vmatprep.subr.bf16.mxu0 %v836
        %900 = vmatpush1.bf16.msra.mxu0 %v835
        %901 = vmatprep.subr.bf16.mxu0 %v838
        %902 = vmatpush1.bf16.msra.mxu0 %v837
        %903 = vmatprep.subr.bf16.mxu0 %v840
        %904 = vmatpush1.bf16.msra.mxu0 %v839
        %905 = vmatprep.subr.bf16.mxu0 %v842
        %906 = vmatpush1.bf16.msra.mxu0 %v841
        %907 = vmatprep.subr.bf16.mxu0 %v844
        %908 = vmatpush1.bf16.msra.mxu0 %v843
        %909 = vmatprep.subr.bf16.mxu0 %v846
        %910 = vmatpush1.bf16.msra.mxu0 %v845
        %911 = vmatprep.mubr.bf16.mxu0 %v640
        %912 = vmatmul.mubr.bf16.gmra.mrb[0].mxu0 %v639
        %v913 = vpop.f32.mrb[0].mxu0
        %v914 = vadd.f32 0.0, %v913
        %v915 = vpop.f32.mrb[0].mxu0
        %v916 = vadd.f32 0.0, %v915
        %v917 = vpop.f32.mrb[0].mxu0
        %v918 = vadd.f32 0.0, %v917
        %v919 = vpop.f32.mrb[0].mxu0
        %v920 = vadd.f32 0.0, %v919
        %921 = vmatprep.mubr.bf16.mxu0 %v642
        %922 = vmatmul.mubr.bf16.gmra.mrb[0].mxu0 %v641
        %v923 = vpop.f32.mrb[0].mxu0
        %v924 = vadd.f32 0.0, %v923
        %v925 = vpop.f32.mrb[0].mxu0
        %v926 = vadd.f32 0.0, %v925
        %v927 = vpop.f32.mrb[0].mxu0
        %v928 = vadd.f32 0.0, %v927
        %v929 = vpop.f32.mrb[0].mxu0
        %v930 = vadd.f32 0.0, %v929
        %931 = vmatprep.mubr.bf16.mxu0 %v644
        %932 = vmatmul.mubr.bf16.gmra.mrb[0].mxu0 %v643
        %v933 = vpop.f32.mrb[0].mxu0
        %v934 = vadd.f32 0.0, %v933
        %v935 = vpop.f32.mrb[0].mxu0
        %v936 = vadd.f32 0.0, %v935
        %v937 = vpop.f32.mrb[0].mxu0
        %v938 = vadd.f32 0.0, %v937
        %v939 = vpop.f32.mrb[0].mxu0
        %v940 = vadd.f32 0.0, %v939
        %941 = vmatprep.mubr.bf16.mxu0 %v646
        %942 = vmatmul.mubr.bf16.gmra.mrb[0].mxu0 %v645
        %v943 = vpop.f32.mrb[0].mxu0
        %v944 = vadd.f32 0.0, %v943
        %v945 = vpop.f32.mrb[0].mxu0
        %v946 = vadd.f32 0.0, %v945
        %v947 = vpop.f32.mrb[0].mxu0
        %v948 = vadd.f32 0.0, %v947
        %v949 = vpop.f32.mrb[0].mxu0
        %v950 = vadd.f32 0.0, %v949
        %951 = vmatprep.mubr.bf16.mxu0 %v648
        %952 = vmatmul.mubr.bf16.gmra.mrb[0].mxu0 %v647
        %v953 = vpop.f32.mrb[0].mxu0
        %v954 = vadd.f32 0.0, %v953
        %v955 = vpop.f32.mrb[0].mxu0
        %v956 = vadd.f32 0.0, %v955
        %v957 = vpop.f32.mrb[0].mxu0
        %v958 = vadd.f32 0.0, %v957
        %v959 = vpop.f32.mrb[0].mxu0
        %v960 = vadd.f32 0.0, %v959
        %961 = vmatprep.mubr.bf16.mxu0 %v650
        %962 = vmatmul.mubr.bf16.gmra.mrb[0].mxu0 %v649
        %v963 = vpop.f32.mrb[0].mxu0
        %v964 = vadd.f32 0.0, %v963
        %v965 = vpop.f32.mrb[0].mxu0
        %v966 = vadd.f32 0.0, %v965
        %v967 = vpop.f32.mrb[0].mxu0
        %v968 = vadd.f32 0.0, %v967
        %v969 = vpop.f32.mrb[0].mxu0
        %v970 = vadd.f32 0.0, %v969
        %971 = vmatprep.mubr.bf16.mxu0 %v652
        %972 = vmatmul.mubr.bf16.gmra.mrb[0].mxu0 %v651
        %v973 = vpop.f32.mrb[0].mxu0
        %v974 = vadd.f32 0.0, %v973
        %v975 = vpop.f32.mrb[0].mxu0
        %v976 = vadd.f32 0.0, %v975
        %v977 = vpop.f32.mrb[0].mxu0
        %v978 = vadd.f32 0.0, %v977
        %v979 = vpop.f32.mrb[0].mxu0
        %v980 = vadd.f32 0.0, %v979
        %981 = vmatprep.mubr.bf16.mxu0 %v654
        %982 = vmatmul.mubr.bf16.gmra.mrb[0].mxu0 %v653
        %v983 = vpop.f32.mrb[0].mxu0
        %v984 = vadd.f32 0.0, %v983
        %v985 = vpop.f32.mrb[0].mxu0
        %v986 = vadd.f32 0.0, %v985
        %v987 = vpop.f32.mrb[0].mxu0
        %v988 = vadd.f32 0.0, %v987
        %v989 = vpop.f32.mrb[0].mxu0
        %v990 = vadd.f32 0.0, %v989
        %991 = vdwg.mxu0
        %v992 = vadd.f32 %v655, %v914
        %v993 = vadd.f32 %v656, %v916
        %v994 = vadd.f32 %v657, %v918
        %v995 = vadd.f32 %v658, %v920
        %v996 = vadd.f32 %v659, %v924
        %v997 = vadd.f32 %v660, %v926
        %v998 = vadd.f32 %v661, %v928
        %v999 = vadd.f32 %v662, %v930
        %v1000 = vadd.f32 %v663, %v934
        %v1001 = vadd.f32 %v664, %v936
        %v1002 = vadd.f32 %v665, %v938
        %v1003 = vadd.f32 %v666, %v940
        %v1004 = vadd.f32 %v667, %v944
        %v1005 = vadd.f32 %v668, %v946
        %v1006 = vadd.f32 %v669, %v948
        %v1007 = vadd.f32 %v670, %v950
        %v1008 = vadd.f32 %v671, %v954
        %v1009 = vadd.f32 %v672, %v956
        %v1010 = vadd.f32 %v673, %v958
        %v1011 = vadd.f32 %v674, %v960
        %v1012 = vadd.f32 %v675, %v964
        %v1013 = vadd.f32 %v676, %v966
        %v1014 = vadd.f32 %v677, %v968
        %v1015 = vadd.f32 %v678, %v970
        %v1016 = vadd.f32 %v679, %v974
        %v1017 = vadd.f32 %v680, %v976
        %v1018 = vadd.f32 %v681, %v978
        %v1019 = vadd.f32 %v682, %v980
        %v1020 = vadd.f32 %v683, %v984
        %v1021 = vadd.f32 %v684, %v986
        %v1022 = vadd.f32 %v685, %v988
        %v1023 = vadd.f32 %v686, %v990
        %1024 = vst [vmem:[#allocation2] sm:$0xff] %v992
        %1025 = vst [vmem:[#allocation2 + $0x8] sm:$0xff] %v993
        %1026 = vst [vmem:[#allocation2 + $0x10] sm:$0xff] %v994
        %1027 = vst [vmem:[#allocation2 + $0x18] sm:$0xff] %v995
        %1028 = vst [vmem:[#allocation2 + $0x20] sm:$0xff] %v996
        %1029 = vst [vmem:[#allocation2 + $0x28] sm:$0xff] %v997
        %1030 = vst [vmem:[#allocation2 + $0x30] sm:$0xff] %v998
        %1031 = vst [vmem:[#allocation2 + $0x38] sm:$0xff] %v999
        %1032 = vst [vmem:[#allocation2 + $0x40] sm:$0xff] %v1000
        %1033 = vst [vmem:[#allocation2 + $0x48] sm:$0xff] %v1001
        %1034 = vst [vmem:[#allocation2 + $0x50] sm:$0xff] %v1002
        %1035 = vst [vmem:[#allocation2 + $0x58] sm:$0xff] %v1003
        %1036 = vst [vmem:[#allocation2 + $0x60] sm:$0xff] %v1004
        %1037 = vst [vmem:[#allocation2 + $0x68] sm:$0xff] %v1005
        %1038 = vst [vmem:[#allocation2 + $0x70] sm:$0xff] %v1006
        %1039 = vst [vmem:[#allocation2 + $0x78] sm:$0xff] %v1007
        %1040 = vst [vmem:[#allocation2 + $0x80] sm:$0xff] %v1008
        %1041 = vst [vmem:[#allocation2 + $0x88] sm:$0xff] %v1009
        %1042 = vst [vmem:[#allocation2 + $0x90] sm:$0xff] %v1010
        %1043 = vst [vmem:[#allocation2 + $0x98] sm:$0xff] %v1011
        %1044 = vst [vmem:[#allocation2 + $0xa0] sm:$0xff] %v1012
        %1045 = vst [vmem:[#allocation2 + $0xa8] sm:$0xff] %v1013
        %1046 = vst [vmem:[#allocation2 + $0xb0] sm:$0xff] %v1014
        %1047 = vst [vmem:[#allocation2 + $0xb8] sm:$0xff] %v1015
        %1048 = vst [vmem:[#allocation2 + $0xc0] sm:$0xff] %v1016
        %1049 = vst [vmem:[#allocation2 + $0xc8] sm:$0xff] %v1017
        %1050 = vst [vmem:[#allocation2 + $0xd0] sm:$0xff] %v1018
        %1051 = vst [vmem:[#allocation2 + $0xd8] sm:$0xff] %v1019
        %1052 = vst [vmem:[#allocation2 + $0xe0] sm:$0xff] %v1020
        %1053 = vst [vmem:[#allocation2 + $0xe8] sm:$0xff] %v1021
        %1054 = vst [vmem:[#allocation2 + $0xf0] sm:$0xff] %v1022
        %1055 = vst [vmem:[#allocation2 + $0xf8] sm:$0xff] %v1023
        %p1056 = scmp.eq.s32.totalorder %s31, 3
        // Predicated region
        $region77: #{multvae_forward.2} parent=51 // pred_check
          %p1057 = pneg %p1056
        $region78: #{multvae_forward.2} parent=51 // pred_check_branch
          %1059 = sbr.rel (%p1057) target = $region80
        $region79: #{multvae_forward.2} parent=51 // pred_region
          %v1060 = vld [vmem:[#allocation3] sm:$0xff]
          %v1061 = vld [vmem:[#allocation3 + $0x8] sm:$0xff]
          %v1062 = vld [vmem:[#allocation3 + $0x10] sm:$0xff]
          %v1063 = vld [vmem:[#allocation3 + $0x18] sm:$0xff]
          %v1064 = vld [vmem:[#allocation3 + $0x20] sm:$0xff]
          %v1065 = vld [vmem:[#allocation3 + $0x28] sm:$0xff]
          %v1066 = vld [vmem:[#allocation3 + $0x30] sm:$0xff]
          %v1067 = vld [vmem:[#allocation3 + $0x38] sm:$0xff]
          %v1068 = vld [vmem:[#allocation3 + $0x40] sm:$0xff]
          %v1069 = vld [vmem:[#allocation3 + $0x48] sm:$0xff]
          %v1070 = vld [vmem:[#allocation3 + $0x50] sm:$0xff]
          %v1071 = vld [vmem:[#allocation3 + $0x58] sm:$0xff]
          %v1072 = vld [vmem:[#allocation3 + $0x60] sm:$0xff]
          %v1073 = vld [vmem:[#allocation3 + $0x68] sm:$0xff]
          %v1074 = vld [vmem:[#allocation3 + $0x70] sm:$0xff]
          %v1075 = vld [vmem:[#allocation3 + $0x78] sm:$0xff]
          %v1076 = vrsqrt.pop %v1060
          %v1077 = vmul.f32 %v1060, %v1076
          %vm1078 = vcmp.eq.f32.partialorder %v1060, inf
          %v1079 = vsel %vm1078, %v1060, %v1077
          %vm1080 = vcmp.eq.f32.partialorder %v1060, 0.0
          %v1081 = vand.u32 %v1060, 2147483648
          %v1082 = vsel %vm1080, %v1081, %v1079
          %v1083 = vrsqrt.pop %v1061
          %v1084 = vmul.f32 %v1061, %v1083
          %vm1085 = vcmp.eq.f32.partialorder %v1061, inf
          %v1086 = vsel %vm1085, %v1061, %v1084
          %vm1087 = vcmp.eq.f32.partialorder %v1061, 0.0
          %v1088 = vand.u32 %v1061, 2147483648
          %v1089 = vsel %vm1087, %v1088, %v1086
          %v1090 = vrsqrt.pop %v1062
          %v1091 = vmul.f32 %v1062, %v1090
          %vm1092 = vcmp.eq.f32.partialorder %v1062, inf
          %v1093 = vsel %vm1092, %v1062, %v1091
          %vm1094 = vcmp.eq.f32.partialorder %v1062, 0.0
          %v1095 = vand.u32 %v1062, 2147483648
          %v1096 = vsel %vm1094, %v1095, %v1093
          %v1097 = vrsqrt.pop %v1063
          %v1098 = vmul.f32 %v1063, %v1097
          %vm1099 = vcmp.eq.f32.partialorder %v1063, inf
          %v1100 = vsel %vm1099, %v1063, %v1098
          %vm1101 = vcmp.eq.f32.partialorder %v1063, 0.0
          %v1102 = vand.u32 %v1063, 2147483648
          %v1103 = vsel %vm1101, %v1102, %v1100
          %v1104 = vrsqrt.pop %v1064
          %v1105 = vmul.f32 %v1064, %v1104
          %vm1106 = vcmp.eq.f32.partialorder %v1064, inf
          %v1107 = vsel %vm1106, %v1064, %v1105
          %vm1108 = vcmp.eq.f32.partialorder %v1064, 0.0
          %v1109 = vand.u32 %v1064, 2147483648
          %v1110 = vsel %vm1108, %v1109, %v1107
          %v1111 = vrsqrt.pop %v1065
          %v1112 = vmul.f32 %v1065, %v1111
          %vm1113 = vcmp.eq.f32.partialorder %v1065, inf
          %v1114 = vsel %vm1113, %v1065, %v1112
          %vm1115 = vcmp.eq.f32.partialorder %v1065, 0.0
          %v1116 = vand.u32 %v1065, 2147483648
          %v1117 = vsel %vm1115, %v1116, %v1114
          %v1118 = vrsqrt.pop %v1066
          %v1119 = vmul.f32 %v1066, %v1118
          %vm1120 = vcmp.eq.f32.partialorder %v1066, inf
          %v1121 = vsel %vm1120, %v1066, %v1119
          %vm1122 = vcmp.eq.f32.partialorder %v1066, 0.0
          %v1123 = vand.u32 %v1066, 2147483648
          %v1124 = vsel %vm1122, %v1123, %v1121
          %v1125 = vrsqrt.pop %v1067
          %v1126 = vmul.f32 %v1067, %v1125
          %vm1127 = vcmp.eq.f32.partialorder %v1067, inf
          %v1128 = vsel %vm1127, %v1067, %v1126
          %vm1129 = vcmp.eq.f32.partialorder %v1067, 0.0
          %v1130 = vand.u32 %v1067, 2147483648
          %v1131 = vsel %vm1129, %v1130, %v1128
          %v1132 = vrsqrt.pop %v1068
          %v1133 = vmul.f32 %v1068, %v1132
          %vm1134 = vcmp.eq.f32.partialorder %v1068, inf
          %v1135 = vsel %vm1134, %v1068, %v1133
          %vm1136 = vcmp.eq.f32.partialorder %v1068, 0.0
          %v1137 = vand.u32 %v1068, 2147483648
          %v1138 = vsel %vm1136, %v1137, %v1135
          %v1139 = vrsqrt.pop %v1069
          %v1140 = vmul.f32 %v1069, %v1139
          %vm1141 = vcmp.eq.f32.partialorder %v1069, inf
          %v1142 = vsel %vm1141, %v1069, %v1140
          %vm1143 = vcmp.eq.f32.partialorder %v1069, 0.0
          %v1144 = vand.u32 %v1069, 2147483648
          %v1145 = vsel %vm1143, %v1144, %v1142
          %v1146 = vrsqrt.pop %v1070
          %v1147 = vmul.f32 %v1070, %v1146
          %vm1148 = vcmp.eq.f32.partialorder %v1070, inf
          %v1149 = vsel %vm1148, %v1070, %v1147
          %vm1150 = vcmp.eq.f32.partialorder %v1070, 0.0
          %v1151 = vand.u32 %v1070, 2147483648
          %v1152 = vsel %vm1150, %v1151, %v1149
          %v1153 = vrsqrt.pop %v1071
          %v1154 = vmul.f32 %v1071, %v1153
          %vm1155 = vcmp.eq.f32.partialorder %v1071, inf
          %v1156 = vsel %vm1155, %v1071, %v1154
          %vm1157 = vcmp.eq.f32.partialorder %v1071, 0.0
          %v1158 = vand.u32 %v1071, 2147483648
          %v1159 = vsel %vm1157, %v1158, %v1156
          %v1160 = vrsqrt.pop %v1072
          %v1161 = vmul.f32 %v1072, %v1160
          %vm1162 = vcmp.eq.f32.partialorder %v1072, inf
          %v1163 = vsel %vm1162, %v1072, %v1161
          %vm1164 = vcmp.eq.f32.partialorder %v1072, 0.0
          %v1165 = vand.u32 %v1072, 2147483648
          %v1166 = vsel %vm1164, %v1165, %v1163
          %v1167 = vrsqrt.pop %v1073
          %v1168 = vmul.f32 %v1073, %v1167
          %vm1169 = vcmp.eq.f32.partialorder %v1073, inf
          %v1170 = vsel %vm1169, %v1073, %v1168
          %vm1171 = vcmp.eq.f32.partialorder %v1073, 0.0
          %v1172 = vand.u32 %v1073, 2147483648
          %v1173 = vsel %vm1171, %v1172, %v1170
          %v1174 = vrsqrt.pop %v1074
          %v1175 = vmul.f32 %v1074, %v1174
          %vm1176 = vcmp.eq.f32.partialorder %v1074, inf
          %v1177 = vsel %vm1176, %v1074, %v1175
          %vm1178 = vcmp.eq.f32.partialorder %v1074, 0.0
          %v1179 = vand.u32 %v1074, 2147483648
          %v1180 = vsel %vm1178, %v1179, %v1177
          %v1181 = vrsqrt.pop %v1075
          %v1182 = vmul.f32 %v1075, %v1181
          %vm1183 = vcmp.eq.f32.partialorder %v1075, inf
          %v1184 = vsel %vm1183, %v1075, %v1182
          %vm1185 = vcmp.eq.f32.partialorder %v1075, 0.0
          %v1186 = vand.u32 %v1075, 2147483648
          %v1187 = vsel %vm1185, %v1186, %v1184
          %v1188 = vmax.f32 %v1082, 1e-12
          %v1189 = vmax.f32 %v1089, 1e-12
          %v1190 = vmax.f32 %v1096, 1e-12
          %v1191 = vmax.f32 %v1103, 1e-12
          %v1192 = vmax.f32 %v1110, 1e-12
          %v1193 = vmax.f32 %v1117, 1e-12
          %v1194 = vmax.f32 %v1124, 1e-12
          %v1195 = vmax.f32 %v1131, 1e-12
          %v1196 = vmax.f32 %v1138, 1e-12
          %v1197 = vmax.f32 %v1145, 1e-12
          %v1198 = vmax.f32 %v1152, 1e-12
          %v1199 = vmax.f32 %v1159, 1e-12
          %v1200 = vmax.f32 %v1166, 1e-12
          %v1201 = vmax.f32 %v1173, 1e-12
          %v1202 = vmax.f32 %v1180, 1e-12
          %v1203 = vmax.f32 %v1187, 1e-12
          %v1204 = vld [vmem:[#allocation2] sm:$0xff]
          %v1205 = vld [vmem:[#allocation2 + $0x8] sm:$0xff]
          %v1206 = vld [vmem:[#allocation2 + $0x10] sm:$0xff]
          %v1207 = vld [vmem:[#allocation2 + $0x18] sm:$0xff]
          %v1208 = vld [vmem:[#allocation2 + $0x20] sm:$0xff]
          %v1209 = vld [vmem:[#allocation2 + $0x28] sm:$0xff]
          %v1210 = vld [vmem:[#allocation2 + $0x30] sm:$0xff]
          %v1211 = vld [vmem:[#allocation2 + $0x38] sm:$0xff]
          %v1212 = vld [vmem:[#allocation2 + $0x40] sm:$0xff]
          %v1213 = vld [vmem:[#allocation2 + $0x48] sm:$0xff]
          %v1214 = vld [vmem:[#allocation2 + $0x50] sm:$0xff]
          %v1215 = vld [vmem:[#allocation2 + $0x58] sm:$0xff]
          %v1216 = vld [vmem:[#allocation2 + $0x60] sm:$0xff]
          %v1217 = vld [vmem:[#allocation2 + $0x68] sm:$0xff]
          %v1218 = vld [vmem:[#allocation2 + $0x70] sm:$0xff]
          %v1219 = vld [vmem:[#allocation2 + $0x78] sm:$0xff]
          %v1220 = vld [vmem:[#allocation2 + $0x80] sm:$0xff]
          %v1221 = vld [vmem:[#allocation2 + $0x88] sm:$0xff]
          %v1222 = vld [vmem:[#allocation2 + $0x90] sm:$0xff]
          %v1223 = vld [vmem:[#allocation2 + $0x98] sm:$0xff]
          %v1224 = vld [vmem:[#allocation2 + $0xa0] sm:$0xff]
          %v1225 = vld [vmem:[#allocation2 + $0xa8] sm:$0xff]
          %v1226 = vld [vmem:[#allocation2 + $0xb0] sm:$0xff]
          %v1227 = vld [vmem:[#allocation2 + $0xb8] sm:$0xff]
          %v1228 = vld [vmem:[#allocation2 + $0xc0] sm:$0xff]
          %v1229 = vld [vmem:[#allocation2 + $0xc8] sm:$0xff]
          %v1230 = vld [vmem:[#allocation2 + $0xd0] sm:$0xff]
          %v1231 = vld [vmem:[#allocation2 + $0xd8] sm:$0xff]
          %v1232 = vld [vmem:[#allocation2 + $0xe0] sm:$0xff]
          %v1233 = vld [vmem:[#allocation2 + $0xe8] sm:$0xff]
          %v1234 = vld [vmem:[#allocation2 + $0xf0] sm:$0xff]
          %v1235 = vld [vmem:[#allocation2 + $0xf8] sm:$0xff]
          %1237 = vset.pattern.permute.xlu0 0
          %1238 = vperm.xlu0 %1237, %v1188
          %v1239 = vpop.permute.xlu0 %1238
          %1242 = vset.pattern.permute.xlu0 0
          %1243 = vperm.xlu0 %1242, %v1189
          %v1244 = vpop.permute.xlu0 %1243
          %1247 = vset.pattern.permute.xlu0 0
          %1248 = vperm.xlu0 %1247, %v1190
          %v1249 = vpop.permute.xlu0 %1248
          %1252 = vset.pattern.permute.xlu0 0
          %1253 = vperm.xlu0 %1252, %v1191
          %v1254 = vpop.permute.xlu0 %1253
          %1257 = vset.pattern.permute.xlu0 0
          %1258 = vperm.xlu0 %1257, %v1192
          %v1259 = vpop.permute.xlu0 %1258
          %1262 = vset.pattern.permute.xlu0 0
          %1263 = vperm.xlu0 %1262, %v1193
          %v1264 = vpop.permute.xlu0 %1263
          %1267 = vset.pattern.permute.xlu0 0
          %1268 = vperm.xlu0 %1267, %v1194
          %v1269 = vpop.permute.xlu0 %1268
          %1272 = vset.pattern.permute.xlu0 0
          %1273 = vperm.xlu0 %1272, %v1195
          %v1274 = vpop.permute.xlu0 %1273
          %1277 = vset.pattern.permute.xlu0 0
          %1278 = vperm.xlu0 %1277, %v1196
          %v1279 = vpop.permute.xlu0 %1278
          %1282 = vset.pattern.permute.xlu0 0
          %1283 = vperm.xlu0 %1282, %v1197
          %v1284 = vpop.permute.xlu0 %1283
          %1287 = vset.pattern.permute.xlu0 0
          %1288 = vperm.xlu0 %1287, %v1198
          %v1289 = vpop.permute.xlu0 %1288
          %1292 = vset.pattern.permute.xlu0 0
          %1293 = vperm.xlu0 %1292, %v1199
          %v1294 = vpop.permute.xlu0 %1293
          %1297 = vset.pattern.permute.xlu0 0
          %1298 = vperm.xlu0 %1297, %v1200
          %v1299 = vpop.permute.xlu0 %1298
          %1302 = vset.pattern.permute.xlu0 0
          %1303 = vperm.xlu0 %1302, %v1201
          %v1304 = vpop.permute.xlu0 %1303
          %1307 = vset.pattern.permute.xlu0 0
          %1308 = vperm.xlu0 %1307, %v1202
          %v1309 = vpop.permute.xlu0 %1308
          %1312 = vset.pattern.permute.xlu0 0
          %1313 = vperm.xlu0 %1312, %v1203
          %v1314 = vpop.permute.xlu0 %1313
          %v1316 = vrcp.pop %v1239
          %v1317 = vmul.f32 %v1204, %v1316
          %v1318 = vmul.f32 %v1205, %v1316
          %v1319 = vrcp.pop %v1244
          %v1320 = vmul.f32 %v1206, %v1319
          %v1321 = vmul.f32 %v1207, %v1319
          %v1322 = vrcp.pop %v1249
          %v1323 = vmul.f32 %v1208, %v1322
          %v1324 = vmul.f32 %v1209, %v1322
          %v1325 = vrcp.pop %v1254
          %v1326 = vmul.f32 %v1210, %v1325
          %v1327 = vmul.f32 %v1211, %v1325
          %v1328 = vrcp.pop %v1259
          %v1329 = vmul.f32 %v1212, %v1328
          %v1330 = vmul.f32 %v1213, %v1328
          %v1331 = vrcp.pop %v1264
          %v1332 = vmul.f32 %v1214, %v1331
          %v1333 = vmul.f32 %v1215, %v1331
          %v1334 = vrcp.pop %v1269
          %v1335 = vmul.f32 %v1216, %v1334
          %v1336 = vmul.f32 %v1217, %v1334
          %v1337 = vrcp.pop %v1274
          %v1338 = vmul.f32 %v1218, %v1337
          %v1339 = vmul.f32 %v1219, %v1337
          %v1340 = vrcp.pop %v1279
          %v1341 = vmul.f32 %v1220, %v1340
          %v1342 = vmul.f32 %v1221, %v1340
          %v1343 = vrcp.pop %v1284
          %v1344 = vmul.f32 %v1222, %v1343
          %v1345 = vmul.f32 %v1223, %v1343
          %v1346 = vrcp.pop %v1289
          %v1347 = vmul.f32 %v1224, %v1346
          %v1348 = vmul.f32 %v1225, %v1346
          %v1349 = vrcp.pop %v1294
          %v1350 = vmul.f32 %v1226, %v1349
          %v1351 = vmul.f32 %v1227, %v1349
          %v1352 = vrcp.pop %v1299
          %v1353 = vmul.f32 %v1228, %v1352
          %v1354 = vmul.f32 %v1229, %v1352
          %v1355 = vrcp.pop %v1304
          %v1356 = vmul.f32 %v1230, %v1355
          %v1357 = vmul.f32 %v1231, %v1355
          %v1358 = vrcp.pop %v1309
          %v1359 = vmul.f32 %v1232, %v1358
          %v1360 = vmul.f32 %v1233, %v1358
          %v1361 = vrcp.pop %v1314
          %v1362 = vmul.f32 %v1234, %v1361
          %v1363 = vmul.f32 %v1235, %v1361
          %v1364 = vld [vmem:[%s3] sm:$0x3]
          %v1366 = vlaneseq
          %v1367 = vshrl.u32 %v1366, 7
          %v1368 = vsub.s32 0, %v1367
          %v1369 = vrot.slane %v1364, %v1368
          %v1370 = vlaneseq
          %v1371 = vshrl.u32 %v1370, 7
          %v1372 = vsub.s32 1, %v1371
          %v1373 = vrot.slane %v1364, %v1372
          %v1376 = vadd.f32 %v1317, %v1369
          %v1377 = vadd.f32 %v1318, %v1373
          %v1378 = vadd.f32 %v1320, %v1369
          %v1379 = vadd.f32 %v1321, %v1373
          %v1380 = vadd.f32 %v1323, %v1369
          %v1381 = vadd.f32 %v1324, %v1373
          %v1382 = vadd.f32 %v1326, %v1369
          %v1383 = vadd.f32 %v1327, %v1373
          %v1384 = vadd.f32 %v1329, %v1369
          %v1385 = vadd.f32 %v1330, %v1373
          %v1386 = vadd.f32 %v1332, %v1369
          %v1387 = vadd.f32 %v1333, %v1373
          %v1388 = vadd.f32 %v1335, %v1369
          %v1389 = vadd.f32 %v1336, %v1373
          %v1390 = vadd.f32 %v1338, %v1369
          %v1391 = vadd.f32 %v1339, %v1373
          %v1392 = vadd.f32 %v1341, %v1369
          %v1393 = vadd.f32 %v1342, %v1373
          %v1394 = vadd.f32 %v1344, %v1369
          %v1395 = vadd.f32 %v1345, %v1373
          %v1396 = vadd.f32 %v1347, %v1369
          %v1397 = vadd.f32 %v1348, %v1373
          %v1398 = vadd.f32 %v1350, %v1369
          %v1399 = vadd.f32 %v1351, %v1373
          %v1400 = vadd.f32 %v1353, %v1369
          %v1401 = vadd.f32 %v1354, %v1373
          %v1402 = vadd.f32 %v1356, %v1369
          %v1403 = vadd.f32 %v1357, %v1373
          %v1404 = vadd.f32 %v1359, %v1369
          %v1405 = vadd.f32 %v1360, %v1373
          %v1406 = vadd.f32 %v1362, %v1369
          %v1407 = vadd.f32 %v1363, %v1373
          %v1408 = vtanh.pop %v1376
          %v1409 = vtanh.pop %v1377
          %v1410 = vtanh.pop %v1378
          %v1411 = vtanh.pop %v1379
          %v1412 = vtanh.pop %v1380
          %v1413 = vtanh.pop %v1381
          %v1414 = vtanh.pop %v1382
          %v1415 = vtanh.pop %v1383
          %v1416 = vtanh.pop %v1384
          %v1417 = vtanh.pop %v1385
          %v1418 = vtanh.pop %v1386
          %v1419 = vtanh.pop %v1387
          %v1420 = vtanh.pop %v1388
          %v1421 = vtanh.pop %v1389
          %v1422 = vtanh.pop %v1390
          %v1423 = vtanh.pop %v1391
          %v1424 = vtanh.pop %v1392
          %v1425 = vtanh.pop %v1393
          %v1426 = vtanh.pop %v1394
          %v1427 = vtanh.pop %v1395
          %v1428 = vtanh.pop %v1396
          %v1429 = vtanh.pop %v1397
          %v1430 = vtanh.pop %v1398
          %v1431 = vtanh.pop %v1399
          %v1432 = vtanh.pop %v1400
          %v1433 = vtanh.pop %v1401
          %v1434 = vtanh.pop %v1402
          %v1435 = vtanh.pop %v1403
          %v1436 = vtanh.pop %v1404
          %v1437 = vtanh.pop %v1405
          %v1438 = vtanh.pop %v1406
          %v1439 = vtanh.pop %v1407
          %v1440 = vld [vmem:[#allocation11] sm:$0xff]
          %v1441 = vld [vmem:[#allocation11 + $0x8] sm:$0xff]
          %v1442 = vld [vmem:[#allocation11 + $0x10] sm:$0xff]
          %v1443 = vld [vmem:[#allocation11 + $0x18] sm:$0xff]
          %v1444 = vld [vmem:[#allocation11 + $0x20] sm:$0xff]
          %v1445 = vld [vmem:[#allocation11 + $0x28] sm:$0xff]
          %v1446 = vld [vmem:[#allocation11 + $0x30] sm:$0xff]
          %v1447 = vld [vmem:[#allocation11 + $0x38] sm:$0xff]
          %v1448 = vld [vmem:[#allocation11 + $0x40] sm:$0xff]
          %v1449 = vld [vmem:[#allocation11 + $0x48] sm:$0xff]
          %v1450 = vld [vmem:[#allocation11 + $0x50] sm:$0xff]
          %v1451 = vld [vmem:[#allocation11 + $0x58] sm:$0xff]
          %v1452 = vld [vmem:[#allocation11 + $0x60] sm:$0xff]
          %v1453 = vld [vmem:[#allocation11 + $0x68] sm:$0xff]
          %v1454 = vld [vmem:[#allocation11 + $0x70] sm:$0xff]
          %v1455 = vld [vmem:[#allocation11 + $0x78] sm:$0xff]
          %v1456 = vld [vmem:[#allocation11 + $0x80] sm:$0xff]
          %v1457 = vld [vmem:[#allocation11 + $0x88] sm:$0xff]
          %v1458 = vld [vmem:[#allocation11 + $0x90] sm:$0xff]
          %v1459 = vld [vmem:[#allocation11 + $0x98] sm:$0xff]
          %v1460 = vld [vmem:[#allocation11 + $0xa0] sm:$0xff]
          %v1461 = vld [vmem:[#allocation11 + $0xa8] sm:$0xff]
          %v1462 = vld [vmem:[#allocation11 + $0xb0] sm:$0xff]
          %v1463 = vld [vmem:[#allocation11 + $0xb8] sm:$0xff]
          %v1464 = vld [vmem:[#allocation11 + $0xc0] sm:$0xff]
          %v1465 = vld [vmem:[#allocation11 + $0xc8] sm:$0xff]
          %v1466 = vld [vmem:[#allocation11 + $0xd0] sm:$0xff]
          %v1467 = vld [vmem:[#allocation11 + $0xd8] sm:$0xff]
          %v1468 = vld [vmem:[#allocation11 + $0xe0] sm:$0xff]
          %v1469 = vld [vmem:[#allocation11 + $0xe8] sm:$0xff]
          %v1470 = vld [vmem:[#allocation11 + $0xf0] sm:$0xff]
          %v1471 = vld [vmem:[#allocation11 + $0xf8] sm:$0xff]
          %v1472 = vld [vmem:[#allocation11 + $0x100] sm:$0xff]
          %v1473 = vld [vmem:[#allocation11 + $0x108] sm:$0xff]
          %v1474 = vld [vmem:[#allocation11 + $0x110] sm:$0xff]
          %v1475 = vld [vmem:[#allocation11 + $0x118] sm:$0xff]
          %v1476 = vld [vmem:[#allocation11 + $0x120] sm:$0xff]
          %v1477 = vld [vmem:[#allocation11 + $0x128] sm:$0xff]
          %v1478 = vld [vmem:[#allocation11 + $0x130] sm:$0xff]
          %v1479 = vld [vmem:[#allocation11 + $0x138] sm:$0xff]
          %v1480 = vld [vmem:[#allocation11 + $0x140] sm:$0xff]
          %v1481 = vld [vmem:[#allocation11 + $0x148] sm:$0xff]
          %v1482 = vld [vmem:[#allocation11 + $0x150] sm:$0xff]
          %v1483 = vld [vmem:[#allocation11 + $0x158] sm:$0xff]
          %v1484 = vld [vmem:[#allocation11 + $0x160] sm:$0xff]
          %v1485 = vld [vmem:[#allocation11 + $0x168] sm:$0xff]
          %v1486 = vld [vmem:[#allocation11 + $0x170] sm:$0xff]
          %v1487 = vld [vmem:[#allocation11 + $0x178] sm:$0xff]
          %v1488 = vld [vmem:[#allocation11 + $0x180] sm:$0xff]
          %v1489 = vld [vmem:[#allocation11 + $0x188] sm:$0xff]
          %v1490 = vld [vmem:[#allocation11 + $0x190] sm:$0xff]
          %v1491 = vld [vmem:[#allocation11 + $0x198] sm:$0xff]
          %v1492 = vld [vmem:[#allocation11 + $0x1a0] sm:$0xff]
          %v1493 = vld [vmem:[#allocation11 + $0x1a8] sm:$0xff]
          %v1494 = vld [vmem:[#allocation11 + $0x1b0] sm:$0xff]
          %v1495 = vld [vmem:[#allocation11 + $0x1b8] sm:$0xff]
          %v1496 = vld [vmem:[#allocation11 + $0x1c0] sm:$0xff]
          %v1497 = vld [vmem:[#allocation11 + $0x1c8] sm:$0xff]
          %v1498 = vld [vmem:[#allocation11 + $0x1d0] sm:$0xff]
          %v1499 = vld [vmem:[#allocation11 + $0x1d8] sm:$0xff]
          %v1500 = vld [vmem:[#allocation11 + $0x1e0] sm:$0xff]
          %v1501 = vld [vmem:[#allocation11 + $0x1e8] sm:$0xff]
          %v1502 = vld [vmem:[#allocation11 + $0x1f0] sm:$0xff]
          %v1503 = vld [vmem:[#allocation11 + $0x1f8] sm:$0xff]
          %v1504 = vld [vmem:[%s5] sm:$0x3]
          %v1506 = vlaneseq
          %v1507 = vshrl.u32 %v1506, 7
          %v1508 = vsub.s32 0, %v1507
          %v1509 = vrot.slane %v1504, %v1508
          %v1510 = vlaneseq
          %v1511 = vshrl.u32 %v1510, 7
          %v1512 = vsub.s32 1, %v1511
          %v1513 = vrot.slane %v1504, %v1512
          %1516 = vmatprep.subr.mxu0 %v1441
          %1517 = vmatpush1.msra.mxu0 %v1440
          %1518 = vmatprep.subr.mxu0 %v1443
          %1519 = vmatpush1.msra.mxu0 %v1442
          %1520 = vmatprep.subr.mxu0 %v1445
          %1521 = vmatpush1.msra.mxu0 %v1444
          %1522 = vmatprep.subr.mxu0 %v1447
          %1523 = vmatpush1.msra.mxu0 %v1446
          %1524 = vmatprep.subr.mxu0 %v1449
          %1525 = vmatpush1.msra.mxu0 %v1448
          %1526 = vmatprep.subr.mxu0 %v1451
          %1527 = vmatpush1.msra.mxu0 %v1450
          %1528 = vmatprep.subr.mxu0 %v1453
          %1529 = vmatpush1.msra.mxu0 %v1452
          %1530 = vmatprep.subr.mxu0 %v1455
          %1531 = vmatpush1.msra.mxu0 %v1454
          %1532 = vmatprep.subr.mxu0 %v1457
          %1533 = vmatpush1.msra.mxu0 %v1456
          %1534 = vmatprep.subr.mxu0 %v1459
          %1535 = vmatpush1.msra.mxu0 %v1458
          %1536 = vmatprep.subr.mxu0 %v1461
          %1537 = vmatpush1.msra.mxu0 %v1460
          %1538 = vmatprep.subr.mxu0 %v1463
          %1539 = vmatpush1.msra.mxu0 %v1462
          %1540 = vmatprep.subr.mxu0 %v1465
          %1541 = vmatpush1.msra.mxu0 %v1464
          %1542 = vmatprep.subr.mxu0 %v1467
          %1543 = vmatpush1.msra.mxu0 %v1466
          %1544 = vmatprep.subr.mxu0 %v1469
          %1545 = vmatpush1.msra.mxu0 %v1468
          %1546 = vmatprep.subr.mxu0 %v1471
          %1547 = vmatpush1.msra.mxu0 %v1470
          %1548 = vmatprep.subr.mxu0 %v1473
          %1549 = vmatpush1.msra.mxu0 %v1472
          %1550 = vmatprep.subr.mxu0 %v1475
          %1551 = vmatpush1.msra.mxu0 %v1474
          %1552 = vmatprep.subr.mxu0 %v1477
          %1553 = vmatpush1.msra.mxu0 %v1476
          %1554 = vmatprep.subr.mxu0 %v1479
          %1555 = vmatpush1.msra.mxu0 %v1478
          %1556 = vmatprep.subr.mxu0 %v1481
          %1557 = vmatpush1.msra.mxu0 %v1480
          %1558 = vmatprep.subr.mxu0 %v1483
          %1559 = vmatpush1.msra.mxu0 %v1482
          %1560 = vmatprep.subr.mxu0 %v1485
          %1561 = vmatpush1.msra.mxu0 %v1484
          %1562 = vmatprep.subr.mxu0 %v1487
          %1563 = vmatpush1.msra.mxu0 %v1486
          %1564 = vmatprep.subr.mxu0 %v1489
          %1565 = vmatpush1.msra.mxu0 %v1488
          %1566 = vmatprep.subr.mxu0 %v1491
          %1567 = vmatpush1.msra.mxu0 %v1490
          %1568 = vmatprep.subr.mxu0 %v1493
          %1569 = vmatpush1.msra.mxu0 %v1492
          %1570 = vmatprep.subr.mxu0 %v1495
          %1571 = vmatpush1.msra.mxu0 %v1494
          %1572 = vmatprep.subr.mxu0 %v1497
          %1573 = vmatpush1.msra.mxu0 %v1496
          %1574 = vmatprep.subr.mxu0 %v1499
          %1575 = vmatpush1.msra.mxu0 %v1498
          %1576 = vmatprep.subr.mxu0 %v1501
          %1577 = vmatpush1.msra.mxu0 %v1500
          %1578 = vmatprep.subr.mxu0 %v1503
          %1579 = vmatpush1.msra.mxu0 %v1502
          %1580 = vmatprep.mubr.f32.mxu0 %v1409
          %1581 = vmatmul.mubr.f32.gmra.mrb[0].mxu0 %v1408
          %v1582 = vpop.f32.mrb[0].mxu0
          %v1583 = vadd.f32 %v1509, %v1582
          %v1584 = vpop.f32.mrb[0].mxu0
          %v1585 = vadd.f32 %v1513, %v1584
          %1586 = vmatprep.mubr.f32.mxu0 %v1411
          %1587 = vmatmul.mubr.f32.gmra.mrb[0].mxu0 %v1410
          %v1588 = vpop.f32.mrb[0].mxu0
          %v1589 = vadd.f32 %v1509, %v1588
          %v1590 = vpop.f32.mrb[0].mxu0
          %v1591 = vadd.f32 %v1513, %v1590
          %1592 = vmatprep.mubr.f32.mxu0 %v1413
          %1593 = vmatmul.mubr.f32.gmra.mrb[0].mxu0 %v1412
          %v1594 = vpop.f32.mrb[0].mxu0
          %v1595 = vadd.f32 %v1509, %v1594
          %v1596 = vpop.f32.mrb[0].mxu0
          %v1597 = vadd.f32 %v1513, %v1596
          %1598 = vmatprep.mubr.f32.mxu0 %v1415
          %1599 = vmatmul.mubr.f32.gmra.mrb[0].mxu0 %v1414
          %v1600 = vpop.f32.mrb[0].mxu0
          %v1601 = vadd.f32 %v1509, %v1600
          %v1602 = vpop.f32.mrb[0].mxu0
          %v1603 = vadd.f32 %v1513, %v1602
          %1604 = vmatprep.mubr.f32.mxu0 %v1417
          %1605 = vmatmul.mubr.f32.gmra.mrb[0].mxu0 %v1416
          %v1606 = vpop.f32.mrb[0].mxu0
          %v1607 = vadd.f32 %v1509, %v1606
          %v1608 = vpop.f32.mrb[0].mxu0
          %v1609 = vadd.f32 %v1513, %v1608
          %1610 = vmatprep.mubr.f32.mxu0 %v1419
          %1611 = vmatmul.mubr.f32.gmra.mrb[0].mxu0 %v1418
          %v1612 = vpop.f32.mrb[0].mxu0
          %v1613 = vadd.f32 %v1509, %v1612
          %v1614 = vpop.f32.mrb[0].mxu0
          %v1615 = vadd.f32 %v1513, %v1614
          %1616 = vmatprep.mubr.f32.mxu0 %v1421
          %1617 = vmatmul.mubr.f32.gmra.mrb[0].mxu0 %v1420
          %v1618 = vpop.f32.mrb[0].mxu0
          %v1619 = vadd.f32 %v1509, %v1618
          %v1620 = vpop.f32.mrb[0].mxu0
          %v1621 = vadd.f32 %v1513, %v1620
          %1622 = vmatprep.mubr.f32.mxu0 %v1423
          %1623 = vmatmul.mubr.f32.gmra.mrb[0].mxu0 %v1422
          %v1624 = vpop.f32.mrb[0].mxu0
          %v1625 = vadd.f32 %v1509, %v1624
          %v1626 = vpop.f32.mrb[0].mxu0
          %v1627 = vadd.f32 %v1513, %v1626
          %1628 = vmatprep.mubr.f32.mxu0 %v1425
          %1629 = vmatmul.mubr.f32.gmra.mrb[0].mxu0 %v1424
          %v1630 = vpop.f32.mrb[0].mxu0
          %v1631 = vadd.f32 %v1509, %v1630
          %v1632 = vpop.f32.mrb[0].mxu0
          %v1633 = vadd.f32 %v1513, %v1632
          %1634 = vmatprep.mubr.f32.mxu0 %v1427
          %1635 = vmatmul.mubr.f32.gmra.mrb[0].mxu0 %v1426
          %v1636 = vpop.f32.mrb[0].mxu0
          %v1637 = vadd.f32 %v1509, %v1636
          %v1638 = vpop.f32.mrb[0].mxu0
          %v1639 = vadd.f32 %v1513, %v1638
          %1640 = vmatprep.mubr.f32.mxu0 %v1429
          %1641 = vmatmul.mubr.f32.gmra.mrb[0].mxu0 %v1428
          %v1642 = vpop.f32.mrb[0].mxu0
          %v1643 = vadd.f32 %v1509, %v1642
          %v1644 = vpop.f32.mrb[0].mxu0
          %v1645 = vadd.f32 %v1513, %v1644
          %1646 = vmatprep.mubr.f32.mxu0 %v1431
          %1647 = vmatmul.mubr.f32.gmra.mrb[0].mxu0 %v1430
          %v1648 = vpop.f32.mrb[0].mxu0
          %v1649 = vadd.f32 %v1509, %v1648
          %v1650 = vpop.f32.mrb[0].mxu0
          %v1651 = vadd.f32 %v1513, %v1650
          %1652 = vmatprep.mubr.f32.mxu0 %v1433
          %1653 = vmatmul.mubr.f32.gmra.mrb[0].mxu0 %v1432
          %v1654 = vpop.f32.mrb[0].mxu0
          %v1655 = vadd.f32 %v1509, %v1654
          %v1656 = vpop.f32.mrb[0].mxu0
          %v1657 = vadd.f32 %v1513, %v1656
          %1658 = vmatprep.mubr.f32.mxu0 %v1435
          %1659 = vmatmul.mubr.f32.gmra.mrb[0].mxu0 %v1434
          %v1660 = vpop.f32.mrb[0].mxu0
          %v1661 = vadd.f32 %v1509, %v1660
          %v1662 = vpop.f32.mrb[0].mxu0
          %v1663 = vadd.f32 %v1513, %v1662
          %1664 = vmatprep.mubr.f32.mxu0 %v1437
          %1665 = vmatmul.mubr.f32.gmra.mrb[0].mxu0 %v1436
          %v1666 = vpop.f32.mrb[0].mxu0
          %v1667 = vadd.f32 %v1509, %v1666
          %v1668 = vpop.f32.mrb[0].mxu0
          %v1669 = vadd.f32 %v1513, %v1668
          %1670 = vmatprep.mubr.f32.mxu0 %v1439
          %1671 = vmatmul.mubr.f32.gmra.mrb[0].mxu0 %v1438
          %v1672 = vpop.f32.mrb[0].mxu0
          %v1673 = vadd.f32 %v1509, %v1672
          %v1674 = vpop.f32.mrb[0].mxu0
          %v1675 = vadd.f32 %v1513, %v1674
          %1676 = vdwg.mxu0
          %v1677 = vsub.f32 0.0, %v1585
          %v1678 = vsub.f32 0.0, %v1591
          %v1679 = vsub.f32 0.0, %v1597
          %v1680 = vsub.f32 0.0, %v1603
          %v1681 = vsub.f32 0.0, %v1609
          %v1682 = vsub.f32 0.0, %v1615
          %v1683 = vsub.f32 0.0, %v1621
          %v1684 = vsub.f32 0.0, %v1627
          %v1685 = vsub.f32 0.0, %v1633
          %v1686 = vsub.f32 0.0, %v1639
          %v1687 = vsub.f32 0.0, %v1645
          %v1688 = vsub.f32 0.0, %v1651
          %v1689 = vsub.f32 0.0, %v1657
          %v1690 = vsub.f32 0.0, %v1663
          %v1691 = vsub.f32 0.0, %v1669
          %v1692 = vsub.f32 0.0, %v1675
          %v1693 = vmul.f32 %v1585, 1.442695
          %v1694 = vpow.pop %v1693
          %v1695 = vmul.f32 %v1591, 1.442695
          %v1696 = vpow.pop %v1695
          %v1697 = vmul.f32 %v1597, 1.442695
          %v1698 = vpow.pop %v1697
          %v1699 = vmul.f32 %v1603, 1.442695
          %v1700 = vpow.pop %v1699
          %v1701 = vmul.f32 %v1609, 1.442695
          %v1702 = vpow.pop %v1701
          %v1703 = vmul.f32 %v1615, 1.442695
          %v1704 = vpow.pop %v1703
          %v1705 = vmul.f32 %v1621, 1.442695
          %v1706 = vpow.pop %v1705
          %v1707 = vmul.f32 %v1627, 1.442695
          %v1708 = vpow.pop %v1707
          %v1709 = vmul.f32 %v1633, 1.442695
          %v1710 = vpow.pop %v1709
          %v1711 = vmul.f32 %v1639, 1.442695
          %v1712 = vpow.pop %v1711
          %v1713 = vmul.f32 %v1645, 1.442695
          %v1714 = vpow.pop %v1713
          %v1715 = vmul.f32 %v1651, 1.442695
          %v1716 = vpow.pop %v1715
          %v1717 = vmul.f32 %v1657, 1.442695
          %v1718 = vpow.pop %v1717
          %v1719 = vmul.f32 %v1663, 1.442695
          %v1720 = vpow.pop %v1719
          %v1721 = vmul.f32 %v1669, 1.442695
          %v1722 = vpow.pop %v1721
          %v1723 = vmul.f32 %v1675, 1.442695
          %v1724 = vpow.pop %v1723
          %v1725 = vadd.f32 %v1677, %v1694
          %v1726 = vadd.f32 %v1678, %v1696
          %v1727 = vadd.f32 %v1679, %v1698
          %v1728 = vadd.f32 %v1680, %v1700
          %v1729 = vadd.f32 %v1681, %v1702
          %v1730 = vadd.f32 %v1682, %v1704
          %v1731 = vadd.f32 %v1683, %v1706
          %v1732 = vadd.f32 %v1684, %v1708
          %v1733 = vadd.f32 %v1685, %v1710
          %v1734 = vadd.f32 %v1686, %v1712
          %v1735 = vadd.f32 %v1687, %v1714
          %v1736 = vadd.f32 %v1688, %v1716
          %v1737 = vadd.f32 %v1689, %v1718
          %v1738 = vadd.f32 %v1690, %v1720
          %v1739 = vadd.f32 %v1691, %v1722
          %v1740 = vadd.f32 %v1692, %v1724
          %v1741 = vmul.f32 %v1583, %v1583
          %v1742 = vmul.f32 %v1589, %v1589
          %v1743 = vmul.f32 %v1595, %v1595
          %v1744 = vmul.f32 %v1601, %v1601
          %v1745 = vmul.f32 %v1607, %v1607
          %v1746 = vmul.f32 %v1613, %v1613
          %v1747 = vmul.f32 %v1619, %v1619
          %v1748 = vmul.f32 %v1625, %v1625
          %v1749 = vmul.f32 %v1631, %v1631
          %v1750 = vmul.f32 %v1637, %v1637
          %v1751 = vmul.f32 %v1643, %v1643
          %v1752 = vmul.f32 %v1649, %v1649
          %v1753 = vmul.f32 %v1655, %v1655
          %v1754 = vmul.f32 %v1661, %v1661
          %v1755 = vmul.f32 %v1667, %v1667
          %v1756 = vmul.f32 %v1673, %v1673
          %v1757 = vadd.f32 %v1725, %v1741
          %v1758 = vadd.f32 %v1726, %v1742
          %v1759 = vadd.f32 %v1727, %v1743
          %v1760 = vadd.f32 %v1728, %v1744
          %v1761 = vadd.f32 %v1729, %v1745
          %v1762 = vadd.f32 %v1730, %v1746
          %v1763 = vadd.f32 %v1731, %v1747
          %v1764 = vadd.f32 %v1732, %v1748
          %v1765 = vadd.f32 %v1733, %v1749
          %v1766 = vadd.f32 %v1734, %v1750
          %v1767 = vadd.f32 %v1735, %v1751
          %v1768 = vadd.f32 %v1736, %v1752
          %v1769 = vadd.f32 %v1737, %v1753
          %v1770 = vadd.f32 %v1738, %v1754
          %v1771 = vadd.f32 %v1739, %v1755
          %v1772 = vadd.f32 %v1740, %v1756
          %v1773 = vsub.f32 %v1757, 1.0
          %v1774 = vsub.f32 %v1758, 1.0
          %v1775 = vsub.f32 %v1759, 1.0
          %v1776 = vsub.f32 %v1760, 1.0
          %v1777 = vsub.f32 %v1761, 1.0
          %v1778 = vsub.f32 %v1762, 1.0
          %v1779 = vsub.f32 %v1763, 1.0
          %v1780 = vsub.f32 %v1764, 1.0
          %v1781 = vsub.f32 %v1765, 1.0
          %v1782 = vsub.f32 %v1766, 1.0
          %v1783 = vsub.f32 %v1767, 1.0
          %v1784 = vsub.f32 %v1768, 1.0
          %v1785 = vsub.f32 %v1769, 1.0
          %v1786 = vsub.f32 %v1770, 1.0
          %v1787 = vsub.f32 %v1771, 1.0
          %v1788 = vsub.f32 %v1772, 1.0
          %v1789 = vmul.f32 %v1773, 0.5
          %v1790 = vmul.f32 %v1774, 0.5
          %v1791 = vmul.f32 %v1775, 0.5
          %v1792 = vmul.f32 %v1776, 0.5
          %v1793 = vmul.f32 %v1777, 0.5
          %v1794 = vmul.f32 %v1778, 0.5
          %v1795 = vmul.f32 %v1779, 0.5
          %v1796 = vmul.f32 %v1780, 0.5
          %v1797 = vmul.f32 %v1781, 0.5
          %v1798 = vmul.f32 %v1782, 0.5
          %v1799 = vmul.f32 %v1783, 0.5
          %v1800 = vmul.f32 %v1784, 0.5
          %v1801 = vmul.f32 %v1785, 0.5
          %v1802 = vmul.f32 %v1786, 0.5
          %v1803 = vmul.f32 %v1787, 0.5
          %v1804 = vmul.f32 %v1788, 0.5
          %v1805 = vadd.f32 %v1789, %v1790
          %v1806 = vadd.f32 %v1805, %v1791
          %v1807 = vadd.f32 %v1806, %v1792
          %v1808 = vadd.f32 %v1807, %v1793
          %v1809 = vadd.f32 %v1808, %v1794
          %v1810 = vadd.f32 %v1809, %v1795
          %v1811 = vadd.f32 %v1810, %v1796
          %v1812 = vadd.f32 %v1811, %v1797
          %v1813 = vadd.f32 %v1812, %v1798
          %v1814 = vadd.f32 %v1813, %v1799
          %v1815 = vadd.f32 %v1814, %v1800
          %v1816 = vadd.f32 %v1815, %v1801
          %v1817 = vadd.f32 %v1816, %v1802
          %v1818 = vadd.f32 %v1817, %v1803
          %v1819 = vadd.f32 %v1818, %v1804
          %1820 = vadd.xlane.f32.xlu0 %v1819
          %v1821 = vpop.xlane.xlu0 %1820
          %v1822 = vrot.slane %v1821, 4
          %v1823 = vadd.f32 %v1821, %v1822
          %v1824 = vrot.slane %v1823, 2
          %v1825 = vadd.f32 %v1823, %v1824
          %v1826 = vrot.slane %v1825, 1
          %v1827 = vadd.f32 %v1825, %v1826
          %s1828 = vtos %v1827
          %v1829 = vstv %s1828
          %v1830 = vrcp.pop 128.0
          %v1831 = vmul.f32 %v1829, %v1830
          %vm1832 = vcmask 0
          %1833 = vst.msk [vmem:[#allocation15] sm:$0x1] %vm1832, %v1831
          %v1834 = vld [vmem:[#allocation14] sm:$0xff]
          %v1835 = vld [vmem:[#allocation14 + $0x8] sm:$0xff]
          %v1836 = vld [vmem:[#allocation14 + $0x10] sm:$0xff]
          %v1837 = vld [vmem:[#allocation14 + $0x18] sm:$0xff]
          %v1838 = vld [vmem:[#allocation14 + $0x20] sm:$0xff]
          %v1839 = vld [vmem:[#allocation14 + $0x28] sm:$0xff]
          %v1840 = vld [vmem:[#allocation14 + $0x30] sm:$0xff]
          %v1841 = vld [vmem:[#allocation14 + $0x38] sm:$0xff]
          %v1842 = vld [vmem:[#allocation14 + $0x40] sm:$0xff]
          %v1843 = vld [vmem:[#allocation14 + $0x48] sm:$0xff]
          %v1844 = vld [vmem:[#allocation14 + $0x50] sm:$0xff]
          %v1845 = vld [vmem:[#allocation14 + $0x58] sm:$0xff]
          %v1846 = vld [vmem:[#allocation14 + $0x60] sm:$0xff]
          %v1847 = vld [vmem:[#allocation14 + $0x68] sm:$0xff]
          %v1848 = vld [vmem:[#allocation14 + $0x70] sm:$0xff]
          %v1849 = vld [vmem:[#allocation14 + $0x78] sm:$0xff]
          %v1850 = vld [vmem:[#allocation14 + $0x80] sm:$0xff]
          %v1851 = vld [vmem:[#allocation14 + $0x88] sm:$0xff]
          %v1852 = vld [vmem:[#allocation14 + $0x90] sm:$0xff]
          %v1853 = vld [vmem:[#allocation14 + $0x98] sm:$0xff]
          %v1854 = vld [vmem:[#allocation14 + $0xa0] sm:$0xff]
          %v1855 = vld [vmem:[#allocation14 + $0xa8] sm:$0xff]
          %v1856 = vld [vmem:[#allocation14 + $0xb0] sm:$0xff]
          %v1857 = vld [vmem:[#allocation14 + $0xb8] sm:$0xff]
          %v1858 = vld [vmem:[#allocation14 + $0xc0] sm:$0xff]
          %v1859 = vld [vmem:[#allocation14 + $0xc8] sm:$0xff]
          %v1860 = vld [vmem:[#allocation14 + $0xd0] sm:$0xff]
          %v1861 = vld [vmem:[#allocation14 + $0xd8] sm:$0xff]
          %v1862 = vld [vmem:[#allocation14 + $0xe0] sm:$0xff]
          %v1863 = vld [vmem:[#allocation14 + $0xe8] sm:$0xff]
          %v1864 = vld [vmem:[#allocation14 + $0xf0] sm:$0xff]
          %v1865 = vld [vmem:[#allocation14 + $0xf8] sm:$0xff]
          %v1866 = vld [vmem:[%s8] sm:$0x3]
          %v1868 = vlaneseq
          %v1869 = vshrl.u32 %v1868, 7
          %v1870 = vsub.s32 0, %v1869
          %v1871 = vrot.slane %v1866, %v1870
          %v1872 = vlaneseq
          %v1873 = vshrl.u32 %v1872, 7
          %v1874 = vsub.s32 1, %v1873
          %v1875 = vrot.slane %v1866, %v1874
          %1878 = vmatprep.subr.mxu0 %v1835
          %1879 = vmatpush1.msra.mxu0 %v1834
          %1880 = vmatprep.subr.mxu0 %v1837
          %1881 = vmatpush1.msra.mxu0 %v1836
          %1882 = vmatprep.subr.mxu0 %v1839
          %1883 = vmatpush1.msra.mxu0 %v1838
          %1884 = vmatprep.subr.mxu0 %v1841
          %1885 = vmatpush1.msra.mxu0 %v1840
          %1886 = vmatprep.subr.mxu0 %v1843
          %1887 = vmatpush1.msra.mxu0 %v1842
          %1888 = vmatprep.subr.mxu0 %v1845
          %1889 = vmatpush1.msra.mxu0 %v1844
          %1890 = vmatprep.subr.mxu0 %v1847
          %1891 = vmatpush1.msra.mxu0 %v1846
          %1892 = vmatprep.subr.mxu0 %v1849
          %1893 = vmatpush1.msra.mxu0 %v1848
          %1894 = vmatprep.subr.mxu0 %v1851
          %1895 = vmatpush1.msra.mxu0 %v1850
          %1896 = vmatprep.subr.mxu0 %v1853
          %1897 = vmatpush1.msra.mxu0 %v1852
          %1898 = vmatprep.subr.mxu0 %v1855
          %1899 = vmatpush1.msra.mxu0 %v1854
          %1900 = vmatprep.subr.mxu0 %v1857
          %1901 = vmatpush1.msra.mxu0 %v1856
          %1902 = vmatprep.subr.mxu0 %v1859
          %1903 = vmatpush1.msra.mxu0 %v1858
          %1904 = vmatprep.subr.mxu0 %v1861
          %1905 = vmatpush1.msra.mxu0 %v1860
          %1906 = vmatprep.subr.mxu0 %v1863
          %1907 = vmatpush1.msra.mxu0 %v1862
          %1908 = vmatprep.subr.mxu0 %v1865
          %1909 = vmatpush1.msra.mxu0 %v1864
          %1910 = vmatprep.subr.mxu0 0.0
          %1911 = vmatpush1.msra.mxu0 0.0
          %1912 = vmatprep.subr.mxu0 0.0
          %1913 = vmatpush1.msra.mxu0 0.0
          %1914 = vmatprep.subr.mxu0 0.0
          %1915 = vmatpush1.msra.mxu0 0.0
          %1916 = vmatprep.subr.mxu0 0.0
          %1917 = vmatpush1.msra.mxu0 0.0
          %1918 = vmatprep.subr.mxu0 0.0
          %1919 = vmatpush1.msra.mxu0 0.0
          %1920 = vmatprep.subr.mxu0 0.0
          %1921 = vmatpush1.msra.mxu0 0.0
          %1922 = vmatprep.subr.mxu0 0.0
          %1923 = vmatpush1.msra.mxu0 0.0
          %1924 = vmatprep.subr.mxu0 0.0
          %1925 = vmatpush1.msra.mxu0 0.0
          %1926 = vmatprep.subr.mxu0 0.0
          %1927 = vmatpush1.msra.mxu0 0.0
          %1928 = vmatprep.subr.mxu0 0.0
          %1929 = vmatpush1.msra.mxu0 0.0
          %1930 = vmatprep.subr.mxu0 0.0
          %1931 = vmatpush1.msra.mxu0 0.0
          %1932 = vmatprep.subr.mxu0 0.0
          %1933 = vmatpush1.msra.mxu0 0.0
          %1934 = vmatprep.subr.mxu0 0.0
          %1935 = vmatpush1.msra.mxu0 0.0
          %1936 = vmatprep.subr.mxu0 0.0
          %1937 = vmatpush1.msra.mxu0 0.0
          %1938 = vmatprep.subr.mxu0 0.0
          %1939 = vmatpush1.msra.mxu0 0.0
          %1940 = vmatprep.subr.mxu0 0.0
          %1941 = vmatpush1.msra.mxu0 0.0
          %1942 = vmatprep.mubr.f32.mxu0 0.0
          %1943 = vmatmul.mubr.f32.gmra.mrb[0].mxu0 %v1583
          %v1944 = vpop.f32.mrb[0].mxu0
          %v1945 = vadd.f32 %v1871, %v1944
          %v1946 = vpop.f32.mrb[0].mxu0
          %v1947 = vadd.f32 %v1875, %v1946
          %1948 = vmatprep.mubr.f32.mxu0 0.0
          %1949 = vmatmul.mubr.f32.gmra.mrb[0].mxu0 %v1589
          %v1950 = vpop.f32.mrb[0].mxu0
          %v1951 = vadd.f32 %v1871, %v1950
          %v1952 = vpop.f32.mrb[0].mxu0
          %v1953 = vadd.f32 %v1875, %v1952
          %1954 = vmatprep.mubr.f32.mxu0 0.0
          %1955 = vmatmul.mubr.f32.gmra.mrb[0].mxu0 %v1595
          %v1956 = vpop.f32.mrb[0].mxu0
          %v1957 = vadd.f32 %v1871, %v1956
          %v1958 = vpop.f32.mrb[0].mxu0
          %v1959 = vadd.f32 %v1875, %v1958
          %1960 = vmatprep.mubr.f32.mxu0 0.0
          %1961 = vmatmul.mubr.f32.gmra.mrb[0].mxu0 %v1601
          %v1962 = vpop.f32.mrb[0].mxu0
          %v1963 = vadd.f32 %v1871, %v1962
          %v1964 = vpop.f32.mrb[0].mxu0
          %v1965 = vadd.f32 %v1875, %v1964
          %1966 = vmatprep.mubr.f32.mxu0 0.0
          %1967 = vmatmul.mubr.f32.gmra.mrb[0].mxu0 %v1607
          %v1968 = vpop.f32.mrb[0].mxu0
          %v1969 = vadd.f32 %v1871, %v1968
          %v1970 = vpop.f32.mrb[0].mxu0
          %v1971 = vadd.f32 %v1875, %v1970
          %1972 = vmatprep.mubr.f32.mxu0 0.0
          %1973 = vmatmul.mubr.f32.gmra.mrb[0].mxu0 %v1613
          %v1974 = vpop.f32.mrb[0].mxu0
          %v1975 = vadd.f32 %v1871, %v1974
          %v1976 = vpop.f32.mrb[0].mxu0
          %v1977 = vadd.f32 %v1875, %v1976
          %1978 = vmatprep.mubr.f32.mxu0 0.0
          %1979 = vmatmul.mubr.f32.gmra.mrb[0].mxu0 %v1619
          %v1980 = vpop.f32.mrb[0].mxu0
          %v1981 = vadd.f32 %v1871, %v1980
          %v1982 = vpop.f32.mrb[0].mxu0
          %v1983 = vadd.f32 %v1875, %v1982
          %1984 = vmatprep.mubr.f32.mxu0 0.0
          %1985 = vmatmul.mubr.f32.gmra.mrb[0].mxu0 %v1625
          %v1986 = vpop.f32.mrb[0].mxu0
          %v1987 = vadd.f32 %v1871, %v1986
          %v1988 = vpop.f32.mrb[0].mxu0
          %v1989 = vadd.f32 %v1875, %v1988
          %1990 = vmatprep.mubr.f32.mxu0 0.0
          %1991 = vmatmul.mubr.f32.gmra.mrb[0].mxu0 %v1631
          %v1992 = vpop.f32.mrb[0].mxu0
          %v1993 = vadd.f32 %v1871, %v1992
          %v1994 = vpop.f32.mrb[0].mxu0
          %v1995 = vadd.f32 %v1875, %v1994
          %1996 = vmatprep.mubr.f32.mxu0 0.0
          %1997 = vmatmul.mubr.f32.gmra.mrb[0].mxu0 %v1637
          %v1998 = vpop.f32.mrb[0].mxu0
          %v1999 = vadd.f32 %v1871, %v1998
          %v2000 = vpop.f32.mrb[0].mxu0
          %v2001 = vadd.f32 %v1875, %v2000
          %2002 = vmatprep.mubr.f32.mxu0 0.0
          %2003 = vmatmul.mubr.f32.gmra.mrb[0].mxu0 %v1643
          %v2004 = vpop.f32.mrb[0].mxu0
          %v2005 = vadd.f32 %v1871, %v2004
          %v2006 = vpop.f32.mrb[0].mxu0
          %v2007 = vadd.f32 %v1875, %v2006
          %2008 = vmatprep.mubr.f32.mxu0 0.0
          %2009 = vmatmul.mubr.f32.gmra.mrb[0].mxu0 %v1649
          %v2010 = vpop.f32.mrb[0].mxu0
          %v2011 = vadd.f32 %v1871, %v2010
          %v2012 = vpop.f32.mrb[0].mxu0
          %v2013 = vadd.f32 %v1875, %v2012
          %2014 = vmatprep.mubr.f32.mxu0 0.0
          %2015 = vmatmul.mubr.f32.gmra.mrb[0].mxu0 %v1655
          %v2016 = vpop.f32.mrb[0].mxu0
          %v2017 = vadd.f32 %v1871, %v2016
          %v2018 = vpop.f32.mrb[0].mxu0
          %v2019 = vadd.f32 %v1875, %v2018
          %2020 = vmatprep.mubr.f32.mxu0 0.0
          %2021 = vmatmul.mubr.f32.gmra.mrb[0].mxu0 %v1661
          %v2022 = vpop.f32.mrb[0].mxu0
          %v2023 = vadd.f32 %v1871, %v2022
          %v2024 = vpop.f32.mrb[0].mxu0
          %v2025 = vadd.f32 %v1875, %v2024
          %2026 = vmatprep.mubr.f32.mxu0 0.0
          %2027 = vmatmul.mubr.f32.gmra.mrb[0].mxu0 %v1667
          %v2028 = vpop.f32.mrb[0].mxu0
          %v2029 = vadd.f32 %v1871, %v2028
          %v2030 = vpop.f32.mrb[0].mxu0
          %v2031 = vadd.f32 %v1875, %v2030
          %2032 = vmatprep.mubr.f32.mxu0 0.0
          %2033 = vmatmul.mubr.f32.gmra.mrb[0].mxu0 %v1673
          %v2034 = vpop.f32.mrb[0].mxu0
          %v2035 = vadd.f32 %v1871, %v2034
          %v2036 = vpop.f32.mrb[0].mxu0
          %v2037 = vadd.f32 %v1875, %v2036
          %2038 = vdwg.mxu0
          %v2039 = vtanh.pop %v1945
          %v2040 = vtanh.pop %v1947
          %v2041 = vtanh.pop %v1951
          %v2042 = vtanh.pop %v1953
          %v2043 = vtanh.pop %v1957
          %v2044 = vtanh.pop %v1959
          %v2045 = vtanh.pop %v1963
          %v2046 = vtanh.pop %v1965
          %v2047 = vtanh.pop %v1969
          %v2048 = vtanh.pop %v1971
          %v2049 = vtanh.pop %v1975
          %v2050 = vtanh.pop %v1977
          %v2051 = vtanh.pop %v1981
          %v2052 = vtanh.pop %v1983
          %v2053 = vtanh.pop %v1987
          %v2054 = vtanh.pop %v1989
          %v2055 = vtanh.pop %v1993
          %v2056 = vtanh.pop %v1995
          %v2057 = vtanh.pop %v1999
          %v2058 = vtanh.pop %v2001
          %v2059 = vtanh.pop %v2005
          %v2060 = vtanh.pop %v2007
          %v2061 = vtanh.pop %v2011
          %v2062 = vtanh.pop %v2013
          %v2063 = vtanh.pop %v2017
          %v2064 = vtanh.pop %v2019
          %v2065 = vtanh.pop %v2023
          %v2066 = vtanh.pop %v2025
          %v2067 = vtanh.pop %v2029
          %v2068 = vtanh.pop %v2031
          %v2069 = vtanh.pop %v2035
          %v2070 = vtanh.pop %v2037
          %v2071 = vpack.c.bf16 %v2041, %v2039
          %v2072 = vpack.c.bf16 %v2042, %v2040
          %v2073 = vpack.c.bf16 %v2045, %v2043
          %v2074 = vpack.c.bf16 %v2046, %v2044
          %v2075 = vpack.c.bf16 %v2049, %v2047
          %v2076 = vpack.c.bf16 %v2050, %v2048
          %v2077 = vpack.c.bf16 %v2053, %v2051
          %v2078 = vpack.c.bf16 %v2054, %v2052
          %v2079 = vpack.c.bf16 %v2057, %v2055
          %v2080 = vpack.c.bf16 %v2058, %v2056
          %v2081 = vpack.c.bf16 %v2061, %v2059
          %v2082 = vpack.c.bf16 %v2062, %v2060
          %v2083 = vpack.c.bf16 %v2065, %v2063
          %v2084 = vpack.c.bf16 %v2066, %v2064
          %v2085 = vpack.c.bf16 %v2069, %v2067
          %v2086 = vpack.c.bf16 %v2070, %v2068
          %v2103 = vunpack.c.l.b16 %v2071
          %v2104 = vunpack.c.l.b16 %v2072
          %v2105 = vunpack.c.h.b16 %v2071
          %v2106 = vunpack.c.h.b16 %v2072
          %v2107 = vunpack.c.l.b16 %v2073
          %v2108 = vunpack.c.l.b16 %v2074
          %v2109 = vunpack.c.h.b16 %v2073
          %v2110 = vunpack.c.h.b16 %v2074
          %v2111 = vunpack.c.l.b16 %v2075
          %v2112 = vunpack.c.l.b16 %v2076
          %v2113 = vunpack.c.h.b16 %v2075
          %v2114 = vunpack.c.h.b16 %v2076
          %v2115 = vunpack.c.l.b16 %v2077
          %v2116 = vunpack.c.l.b16 %v2078
          %v2117 = vunpack.c.h.b16 %v2077
          %v2118 = vunpack.c.h.b16 %v2078
          %v2119 = vunpack.c.l.b16 %v2079
          %v2120 = vunpack.c.l.b16 %v2080
          %v2121 = vunpack.c.h.b16 %v2079
          %v2122 = vunpack.c.h.b16 %v2080
          %v2123 = vunpack.c.l.b16 %v2081
          %v2124 = vunpack.c.l.b16 %v2082
          %v2125 = vunpack.c.h.b16 %v2081
          %v2126 = vunpack.c.h.b16 %v2082
          %v2127 = vunpack.c.l.b16 %v2083
          %v2128 = vunpack.c.l.b16 %v2084
          %v2129 = vunpack.c.h.b16 %v2083
          %v2130 = vunpack.c.h.b16 %v2084
          %v2131 = vunpack.c.l.b16 %v2085
          %v2132 = vunpack.c.l.b16 %v2086
          %v2133 = vunpack.c.h.b16 %v2085
          %v2134 = vunpack.c.h.b16 %v2086
          %v2135 = vpack.c.b16 %v2104, %v2103
          %v2136 = vpack.c.b16 %v2106, %v2105
          %v2137 = vpack.c.b16 %v2108, %v2107
          %v2138 = vpack.c.b16 %v2110, %v2109
          %v2139 = vpack.c.b16 %v2112, %v2111
          %v2140 = vpack.c.b16 %v2114, %v2113
          %v2141 = vpack.c.b16 %v2116, %v2115
          %v2142 = vpack.c.b16 %v2118, %v2117
          %v2143 = vpack.c.b16 %v2120, %v2119
          %v2144 = vpack.c.b16 %v2122, %v2121
          %v2145 = vpack.c.b16 %v2124, %v2123
          %v2146 = vpack.c.b16 %v2126, %v2125
          %v2147 = vpack.c.b16 %v2128, %v2127
          %v2148 = vpack.c.b16 %v2130, %v2129
          %v2149 = vpack.c.b16 %v2132, %v2131
          %v2150 = vpack.c.b16 %v2134, %v2133
          %2167 = vst [vmem:[%s9] sm:$0xff] %v2135
          %2168 = vst [vmem:[%s9 + $0x8] sm:$0xff] %v2136
          %2169 = vst [vmem:[%s9 + $0x10] sm:$0xff] %v2137
          %2170 = vst [vmem:[%s9 + $0x18] sm:$0xff] %v2138
          %2171 = vst [vmem:[%s9 + $0x20] sm:$0xff] %v2139
          %2172 = vst [vmem:[%s9 + $0x28] sm:$0xff] %v2140
          %2173 = vst [vmem:[%s9 + $0x30] sm:$0xff] %v2141
          %2174 = vst [vmem:[%s9 + $0x38] sm:$0xff] %v2142
          %2175 = vst [vmem:[%s9 + $0x40] sm:$0xff] %v2143
          %2176 = vst [vmem:[%s9 + $0x48] sm:$0xff] %v2144
          %2177 = vst [vmem:[%s9 + $0x50] sm:$0xff] %v2145
          %2178 = vst [vmem:[%s9 + $0x58] sm:$0xff] %v2146
          %2179 = vst [vmem:[%s9 + $0x60] sm:$0xff] %v2147
          %2180 = vst [vmem:[%s9 + $0x68] sm:$0xff] %v2148
          %2181 = vst [vmem:[%s9 + $0x70] sm:$0xff] %v2149
          %2182 = vst [vmem:[%s9 + $0x78] sm:$0xff] %v2150
        $region80: #{multvae_forward.2} parent=51 // pred_fallthru
          _
        // Predicated region
        $region81: #{multvae_forward.2} parent=51 // pred_check
          %p2183 = pneg %p222
        $region82: #{multvae_forward.2} parent=51 // pred_check_branch
          %2185 = sbr.rel (%p2183) target = $region84
        $region83: #{multvae_forward.2} parent=51 // pred_region
          _
        $region84: #{multvae_forward.2} parent=51 // pred_fallthru
          _
        // Predicated region
        $region85: #{multvae_forward.2} parent=51 // pred_check
          %p2186 = pneg %p243
        $region86: #{multvae_forward.2} parent=51 // pred_check_branch
          %2188 = sbr.rel (%p2186) target = $region88
        $region87: #{multvae_forward.2} parent=51 // pred_region
          %s2190 = ssub.s32 16, 16
          %2191 = vsyncadd [#allocation8], %s2190
          %s2193 = sshll.u32 [#allocation15], 4
          %s2194 = int_to_ptr.vmem [resolvable:$true] %s2193
          %2196 = dma.vmem_to_hbm [thread:$0]  %s2194, 16, %s10, [#allocation8]
        $region88: #{multvae_forward.2} parent=51 // pred_fallthru
          _
        // Predicated region
        $region89: #{multvae_forward.2} parent=51 // pred_check
          %p2197 = pneg %p222
        $region90: #{multvae_forward.2} parent=51 // pred_check_branch
          %2199 = sbr.rel (%p2197) target = $region92
        $region91: #{multvae_forward.2} parent=51 // pred_region
          _
        $region92: #{multvae_forward.2} parent=51 // pred_fallthru
          _
        // Predicated region
        $region93: #{multvae_forward.2} parent=51 // pred_check
          %p2200 = pneg %p243
        $region94: #{multvae_forward.2} parent=51 // pred_check_branch
          %2202 = sbr.rel (%p2200) target = $region96
        $region95: #{multvae_forward.2} parent=51 // pred_region
          %2203 = dma.done [#allocation8], 16
        $region96: #{multvae_forward.2} parent=51 // pred_fallthru
          _
      $region52: #{multvae_forward.2} parent=5 // pred_fallthru
        _
      %p2204 = scmp.le.s32.totalorder 2, %s26
      // Predicated region
      $region97: #{multvae_forward.2} parent=5 // pred_check
        %p2205 = pneg %p2204
      $region98: #{multvae_forward.2} parent=5 // pred_check_branch
        %2207 = sbr.rel (%p2205) target = $region100
      $region99: #{multvae_forward.2} parent=5 // pred_region
        %s2208 = ssub.s32 %s26, 2
      $region100: #{multvae_forward.2} parent=5 // pred_fallthru
        _
    $region6: #{multvae_forward.2} parent=1 // loop_footer
      %s30 = sadd.s32 1, %s26
    $region7: #{multvae_forward.2} parent=1 // loop_footer_branch
      %25 = sbr.rel target = $region3
    $region8: #{multvae_forward.2} parent=1 // loop_exit
      _
    %2209 = vsyncpa [#allocation7], 1
    %s2210 = scalar_lea.sflag [#allocation7], 1
    %2211 = vsyncpa %s2210, 1
    %2212 = vsyncpa [#allocation10], 1
    %s2213 = scalar_lea.sflag [#allocation10], 1
    %2214 = vsyncpa %s2213, 1
    %2215 = vsyncpa [#allocation13], 1
    %2216 = vsyncpa [#allocation8], 1
    %s2217 = scalar_lea.sflag [#allocation8], 1
    %2218 = vsyncpa %s2217, 1

</llo_original>
